<compile_context>
chip_gen: v7x
topology: tpu7x:2x2x1
jax: 0.10.0
libtpu: 0.0.40
codegen_flags: <defaults>
</compile_context>

<pallas_src>
import functools

import jax
import jax.numpy as jnp
from jax.experimental import pallas as pl
from jax.experimental.pallas import tpu as pltpu

LN_EPS = 1e-5  # nn.LayerNorm default


def _round_up(n, m):
    return ((n + m - 1) // m) * m


def _pad2(a, shape):
    pads = [(0, t - s) for s, t in zip(a.shape, shape)]
    if all(p == (0, 0) for p in pads):
        return a
    return jnp.pad(a, pads)


def _layernorm(h, gamma, beta, n_valid):
    """LayerNorm over the last axis, counting only the first n_valid features.

    When the feature dim is unpadded (n_valid == h.shape[-1]) this is plain LN.
    Padded columns carry zero weights/bias/gamma/beta, so they end up zero.
    """
    n_total = h.shape[-1]
    if n_valid == n_total:
        mu = jnp.mean(h, axis=-1, keepdims=True)
        d = h - mu
        var = jnp.mean(d * d, axis=-1, keepdims=True)
    else:
        mask = (jax.lax.broadcasted_iota(jnp.int32, (1, n_total), 1)
                < n_valid).astype(h.dtype)
        inv_n = 1.0 / float(n_valid)
        mu = jnp.sum(h * mask, axis=-1, keepdims=True) * inv_n
        d = (h - mu) * mask
        var = jnp.sum(d * d, axis=-1, keepdims=True) * inv_n
    return (h - mu) * jax.lax.rsqrt(var + LN_EPS) * gamma + beta


def smiles_embed_kernel(
    x_ref,        # (TB, D_pad)   bf16
    w1_ref,       # (D_pad, H_pad) bf16
    b1_ref,       # (1, H_pad)    f32
    g1_ref,       # (1, H_pad)    f32
    beta1_ref,    # (1, H_pad)    f32
    w2_ref,       # (H_pad, E_pad) bf16
    b2_ref,       # (1, E_pad)    f32
    g2_ref,       # (1, E_pad)    f32
    beta2_ref,    # (1, E_pad)    f32
    o_ref,        # (TB, E_pad)   f32
    *,
    hidden_valid,
    embed_valid,
):
    # Linear 1 on the MXU: bf16 operands, f32 accumulation.
    h = jnp.dot(x_ref[...], w1_ref[...],
                preferred_element_type=jnp.float32) + b1_ref[...]

    # LayerNorm(hidden) in f32.
    h = _layernorm(h, g1_ref[...], beta1_ref[...], hidden_valid)

    # SiLU in f32.
    h = h * jax.nn.sigmoid(h)

    # TODO(synk): Dropout is identity (inference mode).

    # Linear 2 on the MXU: bf16 operands, f32 accumulation.
    e = jnp.dot(h.astype(w2_ref.dtype), w2_ref[...],
                preferred_element_type=jnp.float32) + b2_ref[...]

    # LayerNorm(embedding) in f32.
    e = _layernorm(e, g2_ref[...], beta2_ref[...], embed_valid)

    o_ref[...] = e.astype(o_ref.dtype)


@functools.partial(jax.jit, static_argnames=("tile_b",))
def smiles_embed(x, params, tile_b=256):
    """x: (B, input_dim) float32.  params: dict of weights (see init_params)."""
    B, D_in = x.shape
    H = params["w1"].shape[1]
    E = params["w2"].shape[1]

    # Lane-dense feature widths; batch padded to the tile size (no divisibility
    # requirement on the caller's batch).
    D_pad = _round_up(D_in, 128)
    H_pad = _round_up(H, 128)
    E_pad = _round_up(E, 128)
    grid_b = pl.cdiv(B, tile_b)
    B_pad = grid_b * tile_b

    # bf16 matmul operands, padded with zeros (exact: zero rows/cols contribute
    # nothing to the f32 accumulation).
    x_p = _pad2(x.astype(jnp.bfloat16), (B_pad, D_pad))
    w1_p = _pad2(params["w1"].astype(jnp.bfloat16), (D_pad, H_pad))
    w2_p = _pad2(params["w2"].astype(jnp.bfloat16), (H_pad, E_pad))
    b1_p = _pad2(params["b1"], (1, H_pad))
    g1_p = _pad2(params["ln1_g"], (1, H_pad))
    be1_p = _pad2(params["ln1_b"], (1, H_pad))
    b2_p = _pad2(params["b2"], (1, E_pad))
    g2_p = _pad2(params["ln2_g"], (1, E_pad))
    be2_p = _pad2(params["ln2_b"], (1, E_pad))

    kernel = functools.partial(
        smiles_embed_kernel, hidden_valid=H, embed_valid=E)

    def full(shape):
        return pl.BlockSpec(shape, lambda i: (0, 0))

    x_spec = pl.BlockSpec((tile_b, D_pad), lambda i: (i, 0))
    o_spec = pl.BlockSpec((tile_b, E_pad), lambda i: (i, 0))

    # Advisory cost hint for XLA's scheduler.
    flops = 2 * B_pad * (D_pad * H_pad + H_pad * E_pad)
    transcendentals = B_pad * H_pad  # sigmoid in SiLU
    bytes_accessed = (
        x_p.size * 2 + w1_p.size * 2 + w2_p.size * 2          # bf16 operands
        + (b1_p.size + g1_p.size + be1_p.size
           + b2_p.size + g2_p.size + be2_p.size) * 4           # f32 params
        + B_pad * E_pad * 4                                    # f32 output
    )

    out = pl.pallas_call(
        kernel,
        out_shape=jax.ShapeDtypeStruct((B_pad, E_pad), jnp.float32),
        grid_spec=pltpu.PrefetchScalarGridSpec(
            num_scalar_prefetch=0,
            grid=(grid_b,),
            in_specs=[
                x_spec,
                full((D_pad, H_pad)), full((1, H_pad)), full((1, H_pad)),
                full((1, H_pad)),
                full((H_pad, E_pad)), full((1, E_pad)), full((1, E_pad)),
                full((1, E_pad)),
            ],
            out_specs=o_spec,
        ),
        compiler_params=pltpu.CompilerParams(
            dimension_semantics=("parallel",),
        ),
        cost_estimate=pl.CostEstimate(
            flops=flops,
            transcendentals=transcendentals,
            bytes_accessed=bytes_accessed,
        ),
    )(
        x_p,
        w1_p, b1_p, g1_p, be1_p,
        w2_p, b2_p, g2_p, be2_p,
    )

    # Slice away batch / feature padding.
    return out[:B, :E]


def init_params(key, input_dim, hidden_dim, embedding_dim):
    """Deterministic synthetic parameter init (shapes match nn.Module)."""
    k1, k2, k3, k4 = jax.random.split(key, 4)
    s1 = 1.0 / jnp.sqrt(input_dim)
    s2 = 1.0 / jnp.sqrt(hidden_dim)
    return {
        # stored as (in, out) == PyTorch weight.T
        "w1": jax.random.uniform(k1, (input_dim, hidden_dim), jnp.float32, -s1, s1),
        "b1": jax.random.uniform(k2, (1, hidden_dim), jnp.float32, -s1, s1),
        "ln1_g": jnp.ones((1, hidden_dim), jnp.float32),
        "ln1_b": jnp.zeros((1, hidden_dim), jnp.float32),
        "w2": jax.random.uniform(k3, (hidden_dim, embedding_dim), jnp.float32, -s2, s2),
        "b2": jax.random.uniform(k4, (1, embedding_dim), jnp.float32, -s2, s2),
        "ln2_g": jnp.ones((1, embedding_dim), jnp.float32),
        "ln2_b": jnp.zeros((1, embedding_dim), jnp.float32),
    }


def _ln_ref(h, gamma, beta):
    mu = jnp.mean(h, axis=-1, keepdims=True)
    var = jnp.mean((h - mu) * (h - mu), axis=-1, keepdims=True)
    return (h - mu) * jax.lax.rsqrt(var + LN_EPS) * gamma + beta


def reference_f32(x, p):
    """Pure-f32 JAX reference of the PyTorch forward (eval mode)."""
    h = x @ p["w1"] + p["b1"]
    h = _ln_ref(h, p["ln1_g"], p["ln1_b"])
    h = h * jax.nn.sigmoid(h)
    e = h @ p["w2"] + p["b2"]
    return _ln_ref(e, p["ln2_g"], p["ln2_b"])


def reference_bf16(x, p):
    """Reference mirroring the kernel's numerics (bf16 operands, f32 accum)."""
    h = jnp.dot(x.astype(jnp.bfloat16), p["w1"].astype(jnp.bfloat16),
                preferred_element_type=jnp.float32) + p["b1"]
    h = _ln_ref(h, p["ln1_g"], p["ln1_b"])
    h = h * jax.nn.sigmoid(h)
    e = jnp.dot(h.astype(jnp.bfloat16), p["w2"].astype(jnp.bfloat16),
                preferred_element_type=jnp.float32) + p["b2"]
    return _ln_ref(e, p["ln2_g"], p["ln2_b"])


if __name__ == "__main__":
    # Module defaults for hidden/embedding; batch is NOT a multiple of the tile
    # (exercises the remainder handling) and grid length is 2 (both v7x TCs).
    B, INPUT_DIM, HIDDEN_DIM, EMBED_DIM = 300, 200, 512, 256

    key = jax.random.PRNGKey(0)
    kx, kp = jax.random.split(key)
    x = jax.random.normal(kx, (B, INPUT_DIM), jnp.float32)
    params = init_params(kp, INPUT_DIM, HIDDEN_DIM, EMBED_DIM)

    out = smiles_embed(x, params, tile_b=256)
    out = jax.block_until_ready(out)
    assert out.shape == (B, EMBED_DIM)

    # Tight check against a reference with the same numeric contract
    # (bf16 matmul operands, f32 accumulation / LN / SiLU).
    ref_bf16 = reference_bf16(x, params)
    assert jnp.allclose(out, ref_bf16, atol=2e-3, rtol=2e-3), \
        "mismatch vs bf16-operand reference"

    # Loose check against the pure-f32 PyTorch-equivalent reference
    # (bf16 operand rounding bounds the deviation).
    ref_f32 = reference_f32(x, params)
    assert jnp.allclose(out, ref_f32, atol=5e-2, rtol=5e-2), \
        "mismatch vs f32 reference"

    print("KERNEL_OK")
</pallas_src>

<mosaic_0001>
module attributes {stable_mosaic.version = 11 : i64} {
  func.func @smiles_embed_kernel(%arg0: i32, %arg1: memref<256x256xbf16, #tpu.memory_space<vmem>>, %arg2: memref<256x512xbf16, #tpu.memory_space<vmem>>, %arg3: memref<1x512xf32, #tpu.memory_space<vmem>>, %arg4: memref<1x512xf32, #tpu.memory_space<vmem>>, %arg5: memref<1x512xf32, #tpu.memory_space<vmem>>, %arg6: memref<512x256xbf16, #tpu.memory_space<vmem>>, %arg7: memref<1x256xf32, #tpu.memory_space<vmem>>, %arg8: memref<1x256xf32, #tpu.memory_space<vmem>>, %arg9: memref<1x256xf32, #tpu.memory_space<vmem>>, %arg10: memref<256x256xf32, #tpu.memory_space<vmem>>) attributes {dimension_semantics = [#tpu.dimension_semantics<parallel>], iteration_bounds = array<i64: 2>, scalar_prefetch = 0 : i64, scratch_operands = 0 : i64, tpu.core_type = #tpu.core_type<tc>, window_params = [{transform_indices = @transform_0, window_bounds = array<i64: 256, 256>}, {pipeline_mode = #tpu.pipeline_mode<synchronous>, transform_indices = @transform_1, window_bounds = array<i64: 256, 512>}, {pipeline_mode = #tpu.pipeline_mode<synchronous>, transform_indices = @transform_2, window_bounds = array<i64: 1, 512>}, {pipeline_mode = #tpu.pipeline_mode<synchronous>, transform_indices = @transform_3, window_bounds = array<i64: 1, 512>}, {pipeline_mode = #tpu.pipeline_mode<synchronous>, transform_indices = @transform_4, window_bounds = array<i64: 1, 512>}, {pipeline_mode = #tpu.pipeline_mode<synchronous>, transform_indices = @transform_5, window_bounds = array<i64: 512, 256>}, {pipeline_mode = #tpu.pipeline_mode<synchronous>, transform_indices = @transform_6, window_bounds = array<i64: 1, 256>}, {pipeline_mode = #tpu.pipeline_mode<synchronous>, transform_indices = @transform_7, window_bounds = array<i64: 1, 256>}, {pipeline_mode = #tpu.pipeline_mode<synchronous>, transform_indices = @transform_8, window_bounds = array<i64: 1, 256>}, {transform_indices = @transform_9, window_bounds = array<i64: 256, 256>}]} {
    %c0 = arith.constant 0 : index
    %c0_0 = arith.constant 0 : index
    %0 = vector.load %arg1[%c0, %c0_0] : memref<256x256xbf16, #tpu.memory_space<vmem>>, vector<256x256xbf16>
    %c0_1 = arith.constant 0 : index
    %c0_2 = arith.constant 0 : index
    %1 = vector.load %arg2[%c0_1, %c0_2] : memref<256x512xbf16, #tpu.memory_space<vmem>>, vector<256x512xbf16>
    %cst = arith.constant dense<0.000000e+00> : vector<256x512xf32>
    %2 = tpu.matmul %0, %1, %cst {dimension_numbers = #tpu.dot_dimension_numbers<[1], [0], [0], [1], [0, 0, 1, 1], [], []>} : vector<256x256xbf16>, vector<256x512xbf16>, vector<256x512xf32> -> vector<256x512xf32>
    %c0_3 = arith.constant 0 : index
    %c0_4 = arith.constant 0 : index
    %3 = vector.load %arg3[%c0_3, %c0_4] : memref<1x512xf32, #tpu.memory_space<vmem>>, vector<1x512xf32>
    %4 = vector.broadcast %3 : vector<1x512xf32> to vector<256x512xf32>
    %5 = arith.addf %2, %4 : vector<256x512xf32>
    %c0_5 = arith.constant 0 : index
    %c0_6 = arith.constant 0 : index
    %6 = vector.load %arg4[%c0_5, %c0_6] : memref<1x512xf32, #tpu.memory_space<vmem>>, vector<1x512xf32>
    %c0_7 = arith.constant 0 : index
    %c0_8 = arith.constant 0 : index
    %7 = vector.load %arg5[%c0_7, %c0_8] : memref<1x512xf32, #tpu.memory_space<vmem>>, vector<1x512xf32>
    %cst_9 = arith.constant dense<0.000000e+00> : vector<256xf32>
    %8 = vector.multi_reduction <add>, %5, %cst_9 [1] : vector<256x512xf32> to vector<256xf32>
    %9 = vector.shape_cast %8 : vector<256xf32> to vector<256x1xf32>
    %cst_10 = arith.constant 5.120000e+02 : f32
    %10 = vector.broadcast %cst_10 : f32 to vector<256x1xf32>
    %11 = arith.divf %9, %10 : vector<256x1xf32>
    %12 = vector.broadcast %11 : vector<256x1xf32> to vector<256x512xf32>
    %13 = arith.subf %5, %12 : vector<256x512xf32>
    %14 = arith.mulf %13, %13 : vector<256x512xf32>
    %cst_11 = arith.constant dense<0.000000e+00> : vector<256xf32>
    %15 = vector.multi_reduction <add>, %14, %cst_11 [1] : vector<256x512xf32> to vector<256xf32>
    %16 = vector.shape_cast %15 : vector<256xf32> to vector<256x1xf32>
    %cst_12 = arith.constant 5.120000e+02 : f32
    %17 = vector.broadcast %cst_12 : f32 to vector<256x1xf32>
    %18 = arith.divf %16, %17 : vector<256x1xf32>
    %19 = vector.broadcast %11 : vector<256x1xf32> to vector<256x512xf32>
    %20 = arith.subf %5, %19 : vector<256x512xf32>
    %cst_13 = arith.constant 9.99999974E-6 : f32
    %21 = vector.broadcast %cst_13 : f32 to vector<256x1xf32>
    %22 = arith.addf %18, %21 : vector<256x1xf32>
    %23 = math.rsqrt %22 : vector<256x1xf32>
    %24 = vector.broadcast %23 : vector<256x1xf32> to vector<256x512xf32>
    %25 = arith.mulf %20, %24 : vector<256x512xf32>
    %26 = vector.broadcast %6 : vector<1x512xf32> to vector<256x512xf32>
    %27 = arith.mulf %25, %26 : vector<256x512xf32>
    %28 = vector.broadcast %7 : vector<1x512xf32> to vector<256x512xf32>
    %29 = arith.addf %27, %28 : vector<256x512xf32>
    %30 = arith.negf %29 : vector<256x512xf32>
    %31 = math.exp %30 : vector<256x512xf32>
    %cst_14 = arith.constant 1.000000e+00 : f32
    %32 = vector.broadcast %cst_14 : f32 to vector<256x512xf32>
    %33 = arith.addf %32, %31 : vector<256x512xf32>
    %34 = arith.divf %32, %33 : vector<256x512xf32>
    %35 = arith.mulf %29, %34 : vector<256x512xf32>
    %36 = arith.truncf %35 : vector<256x512xf32> to vector<256x512xbf16>
    %c0_15 = arith.constant 0 : index
    %c0_16 = arith.constant 0 : index
    %37 = vector.load %arg6[%c0_15, %c0_16] : memref<512x256xbf16, #tpu.memory_space<vmem>>, vector<512x256xbf16>
    %cst_17 = arith.constant dense<0.000000e+00> : vector<256x256xf32>
    %38 = tpu.matmul %36, %37, %cst_17 {dimension_numbers = #tpu.dot_dimension_numbers<[1], [0], [0], [1], [0, 0, 1, 1], [], []>} : vector<256x512xbf16>, vector<512x256xbf16>, vector<256x256xf32> -> vector<256x256xf32>
    %c0_18 = arith.constant 0 : index
    %c0_19 = arith.constant 0 : index
    %39 = vector.load %arg7[%c0_18, %c0_19] : memref<1x256xf32, #tpu.memory_space<vmem>>, vector<1x256xf32>
    %40 = vector.broadcast %39 : vector<1x256xf32> to vector<256x256xf32>
    %41 = arith.addf %38, %40 : vector<256x256xf32>
    %c0_20 = arith.constant 0 : index
    %c0_21 = arith.constant 0 : index
    %42 = vector.load %arg8[%c0_20, %c0_21] : memref<1x256xf32, #tpu.memory_space<vmem>>, vector<1x256xf32>
    %c0_22 = arith.constant 0 : index
    %c0_23 = arith.constant 0 : index
    %43 = vector.load %arg9[%c0_22, %c0_23] : memref<1x256xf32, #tpu.memory_space<vmem>>, vector<1x256xf32>
    %cst_24 = arith.constant dense<0.000000e+00> : vector<256xf32>
    %44 = vector.multi_reduction <add>, %41, %cst_24 [1] : vector<256x256xf32> to vector<256xf32>
    %45 = vector.shape_cast %44 : vector<256xf32> to vector<256x1xf32>
    %cst_25 = arith.constant 2.560000e+02 : f32
    %46 = vector.broadcast %cst_25 : f32 to vector<256x1xf32>
    %47 = arith.divf %45, %46 : vector<256x1xf32>
    %48 = vector.broadcast %47 : vector<256x1xf32> to vector<256x256xf32>
    %49 = arith.subf %41, %48 : vector<256x256xf32>
    %50 = arith.mulf %49, %49 : vector<256x256xf32>
    %cst_26 = arith.constant dense<0.000000e+00> : vector<256xf32>
    %51 = vector.multi_reduction <add>, %50, %cst_26 [1] : vector<256x256xf32> to vector<256xf32>
    %52 = vector.shape_cast %51 : vector<256xf32> to vector<256x1xf32>
    %cst_27 = arith.constant 2.560000e+02 : f32
    %53 = vector.broadcast %cst_27 : f32 to vector<256x1xf32>
    %54 = arith.divf %52, %53 : vector<256x1xf32>
    %55 = vector.broadcast %47 : vector<256x1xf32> to vector<256x256xf32>
    %56 = arith.subf %41, %55 : vector<256x256xf32>
    %cst_28 = arith.constant 9.99999974E-6 : f32
    %57 = vector.broadcast %cst_28 : f32 to vector<256x1xf32>
    %58 = arith.addf %54, %57 : vector<256x1xf32>
    %59 = math.rsqrt %58 : vector<256x1xf32>
    %60 = vector.broadcast %59 : vector<256x1xf32> to vector<256x256xf32>
    %61 = arith.mulf %56, %60 : vector<256x256xf32>
    %62 = vector.broadcast %42 : vector<1x256xf32> to vector<256x256xf32>
    %63 = arith.mulf %61, %62 : vector<256x256xf32>
    %64 = vector.broadcast %43 : vector<1x256xf32> to vector<256x256xf32>
    %65 = arith.addf %63, %64 : vector<256x256xf32>
    %c0_29 = arith.constant 0 : index
    %c0_30 = arith.constant 0 : index
    %66 = vector.load %arg10[%c0_29, %c0_30] : memref<256x256xf32, #tpu.memory_space<vmem>>, vector<256x256xf32>
    tpu.vector_store %arg10[%c0_29, %c0_30], %65 {strides = array<i32>} : memref<256x256xf32, #tpu.memory_space<vmem>>, vector<256x256xf32>,
    return
  }
  func.func @transform_0(%arg0: i32) -> (i32, i32) {
    %c0_i32 = arith.constant 0 : i32
    %c0_i32_0 = arith.constant 0 : i32
    return %arg0, %c0_i32 : i32, i32
  }
  func.func @transform_1(%arg0: i32) -> (i32, i32) {
    %c0_i32 = arith.constant 0 : i32
    %c0_i32_0 = arith.constant 0 : i32
    %c0_i32_1 = arith.constant 0 : i32
    return %c0_i32, %c0_i32_0 : i32, i32
  }
  func.func @transform_2(%arg0: i32) -> (i32, i32) {
    %c0_i32 = arith.constant 0 : i32
    %c0_i32_0 = arith.constant 0 : i32
    %c0_i32_1 = arith.constant 0 : i32
    return %c0_i32, %c0_i32_0 : i32, i32
  }
  func.func @transform_3(%arg0: i32) -> (i32, i32) {
    %c0_i32 = arith.constant 0 : i32
    %c0_i32_0 = arith.constant 0 : i32
    %c0_i32_1 = arith.constant 0 : i32
    return %c0_i32, %c0_i32_0 : i32, i32
  }
  func.func @transform_4(%arg0: i32) -> (i32, i32) {
    %c0_i32 = arith.constant 0 : i32
    %c0_i32_0 = arith.constant 0 : i32
    %c0_i32_1 = arith.constant 0 : i32
    return %c0_i32, %c0_i32_0 : i32, i32
  }
  func.func @transform_5(%arg0: i32) -> (i32, i32) {
    %c0_i32 = arith.constant 0 : i32
    %c0_i32_0 = arith.constant 0 : i32
    %c0_i32_1 = arith.constant 0 : i32
    return %c0_i32, %c0_i32_0 : i32, i32
  }
  func.func @transform_6(%arg0: i32) -> (i32, i32) {
    %c0_i32 = arith.constant 0 : i32
    %c0_i32_0 = arith.constant 0 : i32
    %c0_i32_1 = arith.constant 0 : i32
    return %c0_i32, %c0_i32_0 : i32, i32
  }
  func.func @transform_7(%arg0: i32) -> (i32, i32) {
    %c0_i32 = arith.constant 0 : i32
    %c0_i32_0 = arith.constant 0 : i32
    %c0_i32_1 = arith.constant 0 : i32
    return %c0_i32, %c0_i32_0 : i32, i32
  }
  func.func @transform_8(%arg0: i32) -> (i32, i32) {
    %c0_i32 = arith.constant 0 : i32
    %c0_i32_0 = arith.constant 0 : i32
    %c0_i32_1 = arith.constant 0 : i32
    return %c0_i32, %c0_i32_0 : i32, i32
  }
  func.func @transform_9(%arg0: i32) -> (i32, i32) {
    %c0_i32 = arith.constant 0 : i32
    %c0_i32_0 = arith.constant 0 : i32
    return %arg0, %c0_i32 : i32, i32
  }
}

</mosaic_0001>

<llo_original>
// kernel: smiles_embed.1
$region0: #{smiles_embed.1}
  #allocation0 [shape = 'u32[]', space=smem, size = 0x4, offset = 0x4, fixed_abs, tag = 'smem constant byte address 0x4 - core index']
  #allocation1 [shape = 'u32[144,128]{1,0:T(1,128)}', space=vmem, size = 0x12000, scoped, tag = 'internal scratch']
  %s0 = inlined_call_operand.vmem [shape: bf16[512,256], index: 0, kind: input, shape index: {}]
  %s1 = inlined_call_operand.vmem [shape: bf16[256,512], index: 1, kind: input, shape index: {}]
  %s2 = inlined_call_operand.vmem [shape: f32[1,512], index: 2, kind: input, shape index: {}]
  %s3 = inlined_call_operand.vmem [shape: f32[1,512], index: 3, kind: input, shape index: {}]
  %s4 = inlined_call_operand.vmem [shape: f32[1,512], index: 4, kind: input, shape index: {}]
  %s5 = inlined_call_operand.vmem [shape: bf16[512,256], index: 5, kind: input, shape index: {}]
  %s6 = inlined_call_operand.vmem [shape: f32[1,256], index: 6, kind: input, shape index: {}]
  %s7 = inlined_call_operand.vmem [shape: f32[1,256], index: 7, kind: input, shape index: {}]
  %s8 = inlined_call_operand.vmem [shape: f32[1,256], index: 8, kind: input, shape index: {}]
  %s9 = inlined_call_operand.vmem [shape: f32[512,256], index: 9, kind: output, shape index: {}]
  %s10 = sld [smem:[#allocation0]]
  $region69: #{smiles_embed.1} parent=0
    _
  %s12 = ssub.s32 1, %s10
  %s13 = scalar_select 0, %s12, %s10
  loop: start=0, step=1, limit=4
  $region2: #{smiles_embed.1} parent=0 // loop_pre_header
    _
  $region3: #{smiles_embed.1} parent=0 // loop_header
    %s15 = sphi 0, %s19
    %p16 = scmp.ge.s32.totalorder %s15, 4
    %s25 = sphi 0, %s27
    %s28 = sphi 0, %s25
    %s29 = sphi 0, %s28
    %s45 = sphi 0, %s29
    %s49 = sphi 0, %s49
    %s51 = sphi 0, %s49
    %s52 = sphi 0, %s51
    %s66 = sphi 0, %s52
    %s70 = sphi 0, %s70
    %s72 = sphi 0, %s70
    %s73 = sphi 0, %s72
    %s87 = sphi 0, %s73
    %s91 = sphi 0, %s91
    %s93 = sphi 0, %s91
    %s94 = sphi 0, %s93
    %s108 = sphi 0, %s94
    %s112 = sphi 0, %s112
    %s114 = sphi 0, %s112
    %s115 = sphi 0, %s114
    %s129 = sphi 0, %s115
    %s133 = sphi 0, %s133
    %s135 = sphi 0, %s133
    %s136 = sphi 0, %s135
    %s150 = sphi 0, %s136
    %s154 = sphi 0, %s154
    %s156 = sphi 0, %s154
    %s157 = sphi 0, %s156
    %s171 = sphi 0, %s157
    %s175 = sphi 0, %s175
    %s177 = sphi 0, %s175
    %s178 = sphi 0, %s177
    %s192 = sphi 0, %s178
    %s196 = sphi 0, %s196
    %s198 = sphi 0, %s196
    %s199 = sphi 0, %s198
    %s213 = sphi 0, %s199
    %s219 = sphi 0, %s221
    %s222 = sphi 0, %s219
    %s223 = sphi 0, %s222
    %s239 = sphi 0, %s223
  $region4: #{smiles_embed.1} parent=0 // loop_header_branch
    %18 = sbr.rel (%p16) target = $region8
  $region5: #{smiles_embed.1} parent=0 // loop_body
    %s20 = ssub.s32 %s15, 1
    %s21 = ssub.s32 %s15, 2
    %s22 = sadd.s32 %s15, 1
    %s23 = ssub.s32 %s15, %s22
    %p24 = scmp.eq.s32.totalorder %s23, 0
    %s26 = sadd.s32 %s25, 1
    %s27 = scalar_select %p24, %s25, %s26
    %p30 = pneg %p24
    %p31 = scmp.eq.s32.totalorder %s15, 1
    %p32 = por %p30, %p31
    %p33 = scmp.ne.s32.totalorder %s25, %s28
    %p34 = scmp.eq.s32.totalorder %s15, 0
    %p35 = por %p33, %p34
    %p36 = scmp.ne.s32.totalorder %s25, %s28
    %p37 = scmp.eq.s32.totalorder %s20, 1
    %p38 = por %p36, %p37
    %p39 = scmp.ne.s32.totalorder %s28, %s29
    %p40 = scmp.eq.s32.totalorder %s20, 0
    %p41 = por %p39, %p40
    %p42 = scmp.ne.s32.totalorder %s28, %s29
    %p43 = scmp.eq.s32.totalorder %s21, 1
    %p44 = por %p42, %p43
    %p46 = scmp.ne.s32.totalorder %s29, %s45
    %p47 = scmp.eq.s32.totalorder %s21, 0
    %p48 = por %p46, %p47
    %s50 = sadd.s32 %s49, 1
    %p53 = scmp.eq.s32.totalorder %s15, 1
    %p54 = scmp.ne.s32.totalorder %s49, %s51
    %p55 = scmp.eq.s32.totalorder %s15, 0
    %p56 = por %p54, %p55
    %p57 = scmp.ne.s32.totalorder %s49, %s51
    %p58 = scmp.eq.s32.totalorder %s20, 1
    %p59 = por %p57, %p58
    %p60 = scmp.ne.s32.totalorder %s51, %s52
    %p61 = scmp.eq.s32.totalorder %s20, 0
    %p62 = por %p60, %p61
    %p63 = scmp.ne.s32.totalorder %s51, %s52
    %p64 = scmp.eq.s32.totalorder %s21, 1
    %p65 = por %p63, %p64
    %p67 = scmp.ne.s32.totalorder %s52, %s66
    %p68 = scmp.eq.s32.totalorder %s21, 0
    %p69 = por %p67, %p68
    %s71 = sadd.s32 %s70, 1
    %p74 = scmp.eq.s32.totalorder %s15, 1
    %p75 = scmp.ne.s32.totalorder %s70, %s72
    %p76 = scmp.eq.s32.totalorder %s15, 0
    %p77 = por %p75, %p76
    %p78 = scmp.ne.s32.totalorder %s70, %s72
    %p79 = scmp.eq.s32.totalorder %s20, 1
    %p80 = por %p78, %p79
    %p81 = scmp.ne.s32.totalorder %s72, %s73
    %p82 = scmp.eq.s32.totalorder %s20, 0
    %p83 = por %p81, %p82
    %p84 = scmp.ne.s32.totalorder %s72, %s73
    %p85 = scmp.eq.s32.totalorder %s21, 1
    %p86 = por %p84, %p85
    %p88 = scmp.ne.s32.totalorder %s73, %s87
    %p89 = scmp.eq.s32.totalorder %s21, 0
    %p90 = por %p88, %p89
    %s92 = sadd.s32 %s91, 1
    %p95 = scmp.eq.s32.totalorder %s15, 1
    %p96 = scmp.ne.s32.totalorder %s91, %s93
    %p97 = scmp.eq.s32.totalorder %s15, 0
    %p98 = por %p96, %p97
    %p99 = scmp.ne.s32.totalorder %s91, %s93
    %p100 = scmp.eq.s32.totalorder %s20, 1
    %p101 = por %p99, %p100
    %p102 = scmp.ne.s32.totalorder %s93, %s94
    %p103 = scmp.eq.s32.totalorder %s20, 0
    %p104 = por %p102, %p103
    %p105 = scmp.ne.s32.totalorder %s93, %s94
    %p106 = scmp.eq.s32.totalorder %s21, 1
    %p107 = por %p105, %p106
    %p109 = scmp.ne.s32.totalorder %s94, %s108
    %p110 = scmp.eq.s32.totalorder %s21, 0
    %p111 = por %p109, %p110
    %s113 = sadd.s32 %s112, 1
    %p116 = scmp.eq.s32.totalorder %s15, 1
    %p117 = scmp.ne.s32.totalorder %s112, %s114
    %p118 = scmp.eq.s32.totalorder %s15, 0
    %p119 = por %p117, %p118
    %p120 = scmp.ne.s32.totalorder %s112, %s114
    %p121 = scmp.eq.s32.totalorder %s20, 1
    %p122 = por %p120, %p121
    %p123 = scmp.ne.s32.totalorder %s114, %s115
    %p124 = scmp.eq.s32.totalorder %s20, 0
    %p125 = por %p123, %p124
    %p126 = scmp.ne.s32.totalorder %s114, %s115
    %p127 = scmp.eq.s32.totalorder %s21, 1
    %p128 = por %p126, %p127
    %p130 = scmp.ne.s32.totalorder %s115, %s129
    %p131 = scmp.eq.s32.totalorder %s21, 0
    %p132 = por %p130, %p131
    %s134 = sadd.s32 %s133, 1
    %p137 = scmp.eq.s32.totalorder %s15, 1
    %p138 = scmp.ne.s32.totalorder %s133, %s135
    %p139 = scmp.eq.s32.totalorder %s15, 0
    %p140 = por %p138, %p139
    %p141 = scmp.ne.s32.totalorder %s133, %s135
    %p142 = scmp.eq.s32.totalorder %s20, 1
    %p143 = por %p141, %p142
    %p144 = scmp.ne.s32.totalorder %s135, %s136
    %p145 = scmp.eq.s32.totalorder %s20, 0
    %p146 = por %p144, %p145
    %p147 = scmp.ne.s32.totalorder %s135, %s136
    %p148 = scmp.eq.s32.totalorder %s21, 1
    %p149 = por %p147, %p148
    %p151 = scmp.ne.s32.totalorder %s136, %s150
    %p152 = scmp.eq.s32.totalorder %s21, 0
    %p153 = por %p151, %p152
    %s155 = sadd.s32 %s154, 1
    %p158 = scmp.eq.s32.totalorder %s15, 1
    %p159 = scmp.ne.s32.totalorder %s154, %s156
    %p160 = scmp.eq.s32.totalorder %s15, 0
    %p161 = por %p159, %p160
    %p162 = scmp.ne.s32.totalorder %s154, %s156
    %p163 = scmp.eq.s32.totalorder %s20, 1
    %p164 = por %p162, %p163
    %p165 = scmp.ne.s32.totalorder %s156, %s157
    %p166 = scmp.eq.s32.totalorder %s20, 0
    %p167 = por %p165, %p166
    %p168 = scmp.ne.s32.totalorder %s156, %s157
    %p169 = scmp.eq.s32.totalorder %s21, 1
    %p170 = por %p168, %p169
    %p172 = scmp.ne.s32.totalorder %s157, %s171
    %p173 = scmp.eq.s32.totalorder %s21, 0
    %p174 = por %p172, %p173
    %s176 = sadd.s32 %s175, 1
    %p179 = scmp.eq.s32.totalorder %s15, 1
    %p180 = scmp.ne.s32.totalorder %s175, %s177
    %p181 = scmp.eq.s32.totalorder %s15, 0
    %p182 = por %p180, %p181
    %p183 = scmp.ne.s32.totalorder %s175, %s177
    %p184 = scmp.eq.s32.totalorder %s20, 1
    %p185 = por %p183, %p184
    %p186 = scmp.ne.s32.totalorder %s177, %s178
    %p187 = scmp.eq.s32.totalorder %s20, 0
    %p188 = por %p186, %p187
    %p189 = scmp.ne.s32.totalorder %s177, %s178
    %p190 = scmp.eq.s32.totalorder %s21, 1
    %p191 = por %p189, %p190
    %p193 = scmp.ne.s32.totalorder %s178, %s192
    %p194 = scmp.eq.s32.totalorder %s21, 0
    %p195 = por %p193, %p194
    %s197 = sadd.s32 %s196, 1
    %p200 = scmp.eq.s32.totalorder %s15, 1
    %p201 = scmp.ne.s32.totalorder %s196, %s198
    %p202 = scmp.eq.s32.totalorder %s15, 0
    %p203 = por %p201, %p202
    %p204 = scmp.ne.s32.totalorder %s196, %s198
    %p205 = scmp.eq.s32.totalorder %s20, 1
    %p206 = por %p204, %p205
    %p207 = scmp.ne.s32.totalorder %s198, %s199
    %p208 = scmp.eq.s32.totalorder %s20, 0
    %p209 = por %p207, %p208
    %p210 = scmp.ne.s32.totalorder %s198, %s199
    %p211 = scmp.eq.s32.totalorder %s21, 1
    %p212 = por %p210, %p211
    %p214 = scmp.ne.s32.totalorder %s199, %s213
    %p215 = scmp.eq.s32.totalorder %s21, 0
    %p216 = por %p214, %p215
    %s217 = ssub.s32 %s15, %s22
    %p218 = scmp.eq.s32.totalorder %s217, 0
    %s220 = sadd.s32 %s219, 1
    %s221 = scalar_select %p218, %s219, %s220
    %p224 = pneg %p218
    %p225 = scmp.eq.s32.totalorder %s15, 1
    %p226 = por %p224, %p225
    %p227 = scmp.ne.s32.totalorder %s219, %s222
    %p228 = scmp.eq.s32.totalorder %s15, 0
    %p229 = por %p227, %p228
    %p230 = scmp.ne.s32.totalorder %s219, %s222
    %p231 = scmp.eq.s32.totalorder %s20, 1
    %p232 = por %p230, %p231
    %p233 = scmp.ne.s32.totalorder %s222, %s223
    %p234 = scmp.eq.s32.totalorder %s20, 0
    %p235 = por %p233, %p234
    %p236 = scmp.ne.s32.totalorder %s222, %s223
    %p237 = scmp.eq.s32.totalorder %s21, 1
    %p238 = por %p236, %p237
    %p240 = scmp.ne.s32.totalorder %s223, %s239
    %p241 = scmp.eq.s32.totalorder %s21, 0
    %p242 = por %p240, %p241
    %p243 = scmp.le.s32.totalorder 1, %s15
    %p244 = scmp.lt.s32.totalorder %s15, 3
    %p245 = pnand %p243, %p244
    %p246 = pneg %p245
    // Predicated region
    $region9: #{smiles_embed.1} parent=5 // pred_check
      _
    $region10: #{smiles_embed.1} parent=5 // pred_check_branch
      %248 = sbr.rel (%p245) target = $region12
    $region11: #{smiles_embed.1} parent=5 // pred_region
      %s249 = ssub.s32 %s15, 1
      // Predicated region
      $region13: #{smiles_embed.1} parent=11 // pred_check
        %p250 = pneg %p62
      $region14: #{smiles_embed.1} parent=11 // pred_check_branch
        %252 = sbr.rel (%p250) target = $region16
      $region15: #{smiles_embed.1} parent=11 // pred_region
        _
      $region16: #{smiles_embed.1} parent=11 // pred_fallthru
        _
      // Predicated region
      $region17: #{smiles_embed.1} parent=11 // pred_check
        %p253 = pneg %p83
      $region18: #{smiles_embed.1} parent=11 // pred_check_branch
        %255 = sbr.rel (%p253) target = $region20
      $region19: #{smiles_embed.1} parent=11 // pred_region
        _
      $region20: #{smiles_embed.1} parent=11 // pred_fallthru
        _
      // Predicated region
      $region21: #{smiles_embed.1} parent=11 // pred_check
        %p256 = pneg %p104
      $region22: #{smiles_embed.1} parent=11 // pred_check_branch
        %258 = sbr.rel (%p256) target = $region24
      $region23: #{smiles_embed.1} parent=11 // pred_region
        _
      $region24: #{smiles_embed.1} parent=11 // pred_fallthru
        _
      // Predicated region
      $region25: #{smiles_embed.1} parent=11 // pred_check
        %p259 = pneg %p125
      $region26: #{smiles_embed.1} parent=11 // pred_check_branch
        %261 = sbr.rel (%p259) target = $region28
      $region27: #{smiles_embed.1} parent=11 // pred_region
        _
      $region28: #{smiles_embed.1} parent=11 // pred_fallthru
        _
      // Predicated region
      $region29: #{smiles_embed.1} parent=11 // pred_check
        %p262 = pneg %p146
      $region30: #{smiles_embed.1} parent=11 // pred_check_branch
        %264 = sbr.rel (%p262) target = $region32
      $region31: #{smiles_embed.1} parent=11 // pred_region
        _
      $region32: #{smiles_embed.1} parent=11 // pred_fallthru
        _
      // Predicated region
      $region33: #{smiles_embed.1} parent=11 // pred_check
        %p265 = pneg %p167
      $region34: #{smiles_embed.1} parent=11 // pred_check_branch
        %267 = sbr.rel (%p265) target = $region36
      $region35: #{smiles_embed.1} parent=11 // pred_region
        _
      $region36: #{smiles_embed.1} parent=11 // pred_fallthru
        _
      // Predicated region
      $region37: #{smiles_embed.1} parent=11 // pred_check
        %p268 = pneg %p188
      $region38: #{smiles_embed.1} parent=11 // pred_check_branch
        %270 = sbr.rel (%p268) target = $region40
      $region39: #{smiles_embed.1} parent=11 // pred_region
        _
      $region40: #{smiles_embed.1} parent=11 // pred_fallthru
        _
      // Predicated region
      $region41: #{smiles_embed.1} parent=11 // pred_check
        %p271 = pneg %p209
      $region42: #{smiles_embed.1} parent=11 // pred_check_branch
        %273 = sbr.rel (%p271) target = $region44
      $region43: #{smiles_embed.1} parent=11 // pred_region
        _
      $region44: #{smiles_embed.1} parent=11 // pred_fallthru
        _
    $region12: #{smiles_embed.1} parent=5 // pred_fallthru
      _
    %p274 = scmp.lt.s32.totalorder %s15, 2
    // Predicated region
    $region45: #{smiles_embed.1} parent=5 // pred_check
      %p275 = pneg %p274
    $region46: #{smiles_embed.1} parent=5 // pred_check_branch
      %277 = sbr.rel (%p275) target = $region48
    $region47: #{smiles_embed.1} parent=5 // pred_region
      // Predicated region
      $region49: #{smiles_embed.1} parent=47 // pred_check
        %p278 = pneg %p35
      $region50: #{smiles_embed.1} parent=47 // pred_check_branch
        %280 = sbr.rel (%p278) target = $region52
      $region51: #{smiles_embed.1} parent=47 // pred_region
        %s281 = smul.u32 32, %s15
        %p282 = scmp.lt.s32.totalorder %s281, 63
        %s283 = scalar_select %p282, %s281, 63
        %s284 = smul.addr %s283, 2
        %s285 = smul.addr %s284, 4
        %s286 = scalar_lea.vmem %s0, %s285
        %s287 = smul.u32 32, %s15
      $region52: #{smiles_embed.1} parent=47 // pred_fallthru
        _
    $region48: #{smiles_embed.1} parent=5 // pred_fallthru
      _
    %p288 = scmp.le.s32.totalorder 1, %s15
    %p289 = scmp.lt.s32.totalorder %s15, 3
    %p290 = pnand %p288, %p289
    %p291 = pneg %p290
    // Predicated region
    $region53: #{smiles_embed.1} parent=5 // pred_check
      _
    $region54: #{smiles_embed.1} parent=5 // pred_check_branch
      %293 = sbr.rel (%p290) target = $region56
    $region55: #{smiles_embed.1} parent=5 // pred_region
      %s294 = ssub.s32 %s15, 1
      %s295 = smul.u32 32, %s20
      %p296 = scmp.lt.s32.totalorder %s295, 63
      %s297 = scalar_select %p296, %s295, 63
      %s298 = smul.addr %s297, 2
      %s299 = smul.addr %s298, 4
      %s300 = scalar_lea.vmem %s0, %s299
      %p301 = pneg %p41
      %p302 = pneg %p38
      %p303 = pneg %p62
      %p304 = pneg %p59
      %p305 = pneg %p83
      %p306 = pneg %p80
      %p307 = pneg %p104
      %p308 = pneg %p101
      %p309 = pneg %p125
      %p310 = pneg %p122
      %p311 = pneg %p146
      %p312 = pneg %p143
      %p313 = pneg %p167
      %p314 = pneg %p164
      %p315 = pneg %p188
      %p316 = pneg %p185
      %p317 = pneg %p209
      %p318 = pneg %p206
      %p319 = pneg %p235
      %p320 = pneg %p232
      %s321 = smul.u32 32, %s20
      %p322 = scmp.lt.s32.totalorder %s321, 63
      %s323 = scalar_select %p322, %s321, 63
      %s324 = smul.addr %s323, 2
      %s325 = smul.addr %s324, 8
      %s326 = scalar_lea.vmem %s9, %s325
      %s327 = smul.u32 32, %s20
      %p328 = scmp.lt.s32.totalorder %s327, 63
      %s329 = scalar_select %p328, %s327, 63
      %s330 = smul.addr %s329, 2
      %s331 = smul.addr %s330, 4
      %s332 = scalar_lea.vmem %s0, %s331
      %s333 = smul.u32 32, %s20
      %s334 = smul.u32 32, %s20
      %p335 = scmp.lt.s32.totalorder %s334, 63
      %s336 = scalar_select %p335, %s334, 63
      %s337 = smul.addr %s336, 2
      %s338 = smul.addr %s337, 8
      %s339 = scalar_lea.vmem %s9, %s338
      %s340 = smul.u32 32, %s20
      %v341 = vld [vmem:[%s332] sm:$0xff]
      %v342 = vld [vmem:[%s332 + $0x8] sm:$0xff]
      %v343 = vld [vmem:[%s332 + $0x10] sm:$0xff]
      %v344 = vld [vmem:[%s332 + $0x18] sm:$0xff]
      %v345 = vld [vmem:[%s332 + $0x20] sm:$0xff]
      %v346 = vld [vmem:[%s332 + $0x28] sm:$0xff]
      %v347 = vld [vmem:[%s332 + $0x30] sm:$0xff]
      %v348 = vld [vmem:[%s332 + $0x38] sm:$0xff]
      %v349 = vld [vmem:[%s332 + $0x40] sm:$0xff]
      %v350 = vld [vmem:[%s332 + $0x48] sm:$0xff]
      %v351 = vld [vmem:[%s332 + $0x50] sm:$0xff]
      %v352 = vld [vmem:[%s332 + $0x58] sm:$0xff]
      %v353 = vld [vmem:[%s332 + $0x60] sm:$0xff]
      %v354 = vld [vmem:[%s332 + $0x68] sm:$0xff]
      %v355 = vld [vmem:[%s332 + $0x70] sm:$0xff]
      %v356 = vld [vmem:[%s332 + $0x78] sm:$0xff]
      %v357 = vld [vmem:[%s332 + $0x80] sm:$0xff]
      %v358 = vld [vmem:[%s332 + $0x88] sm:$0xff]
      %v359 = vld [vmem:[%s332 + $0x90] sm:$0xff]
      %v360 = vld [vmem:[%s332 + $0x98] sm:$0xff]
      %v361 = vld [vmem:[%s332 + $0xa0] sm:$0xff]
      %v362 = vld [vmem:[%s332 + $0xa8] sm:$0xff]
      %v363 = vld [vmem:[%s332 + $0xb0] sm:$0xff]
      %v364 = vld [vmem:[%s332 + $0xb8] sm:$0xff]
      %v365 = vld [vmem:[%s332 + $0xc0] sm:$0xff]
      %v366 = vld [vmem:[%s332 + $0xc8] sm:$0xff]
      %v367 = vld [vmem:[%s332 + $0xd0] sm:$0xff]
      %v368 = vld [vmem:[%s332 + $0xd8] sm:$0xff]
      %v369 = vld [vmem:[%s332 + $0xe0] sm:$0xff]
      %v370 = vld [vmem:[%s332 + $0xe8] sm:$0xff]
      %v371 = vld [vmem:[%s332 + $0xf0] sm:$0xff]
      %v372 = vld [vmem:[%s332 + $0xf8] sm:$0xff]
      %v373 = vld [vmem:[%s1] sm:$0xff]
      %v374 = vld [vmem:[%s1 + $0x8] sm:$0xff]
      %v375 = vld [vmem:[%s1 + $0x10] sm:$0xff]
      %v376 = vld [vmem:[%s1 + $0x18] sm:$0xff]
      %v377 = vld [vmem:[%s1 + $0x20] sm:$0xff]
      %v378 = vld [vmem:[%s1 + $0x28] sm:$0xff]
      %v379 = vld [vmem:[%s1 + $0x30] sm:$0xff]
      %v380 = vld [vmem:[%s1 + $0x38] sm:$0xff]
      %v381 = vld [vmem:[%s1 + $0x40] sm:$0xff]
      %v382 = vld [vmem:[%s1 + $0x48] sm:$0xff]
      %v383 = vld [vmem:[%s1 + $0x50] sm:$0xff]
      %v384 = vld [vmem:[%s1 + $0x58] sm:$0xff]
      %v385 = vld [vmem:[%s1 + $0x60] sm:$0xff]
      %v386 = vld [vmem:[%s1 + $0x68] sm:$0xff]
      %v387 = vld [vmem:[%s1 + $0x70] sm:$0xff]
      %v388 = vld [vmem:[%s1 + $0x78] sm:$0xff]
      %v389 = vld [vmem:[%s1 + $0x80] sm:$0xff]
      %v390 = vld [vmem:[%s1 + $0x88] sm:$0xff]
      %v391 = vld [vmem:[%s1 + $0x90] sm:$0xff]
      %v392 = vld [vmem:[%s1 + $0x98] sm:$0xff]
      %v393 = vld [vmem:[%s1 + $0xa0] sm:$0xff]
      %v394 = vld [vmem:[%s1 + $0xa8] sm:$0xff]
      %v395 = vld [vmem:[%s1 + $0xb0] sm:$0xff]
      %v396 = vld [vmem:[%s1 + $0xb8] sm:$0xff]
      %v397 = vld [vmem:[%s1 + $0xc0] sm:$0xff]
      %v398 = vld [vmem:[%s1 + $0xc8] sm:$0xff]
      %v399 = vld [vmem:[%s1 + $0xd0] sm:$0xff]
      %v400 = vld [vmem:[%s1 + $0xd8] sm:$0xff]
      %v401 = vld [vmem:[%s1 + $0xe0] sm:$0xff]
      %v402 = vld [vmem:[%s1 + $0xe8] sm:$0xff]
      %v403 = vld [vmem:[%s1 + $0xf0] sm:$0xff]
      %v404 = vld [vmem:[%s1 + $0xf8] sm:$0xff]
      %v405 = vld [vmem:[%s1 + $0x100] sm:$0xff]
      %v406 = vld [vmem:[%s1 + $0x108] sm:$0xff]
      %v407 = vld [vmem:[%s1 + $0x110] sm:$0xff]
      %v408 = vld [vmem:[%s1 + $0x118] sm:$0xff]
      %v409 = vld [vmem:[%s1 + $0x120] sm:$0xff]
      %v410 = vld [vmem:[%s1 + $0x128] sm:$0xff]
      %v411 = vld [vmem:[%s1 + $0x130] sm:$0xff]
      %v412 = vld [vmem:[%s1 + $0x138] sm:$0xff]
      %v413 = vld [vmem:[%s1 + $0x140] sm:$0xff]
      %v414 = vld [vmem:[%s1 + $0x148] sm:$0xff]
      %v415 = vld [vmem:[%s1 + $0x150] sm:$0xff]
      %v416 = vld [vmem:[%s1 + $0x158] sm:$0xff]
      %v417 = vld [vmem:[%s1 + $0x160] sm:$0xff]
      %v418 = vld [vmem:[%s1 + $0x168] sm:$0xff]
      %v419 = vld [vmem:[%s1 + $0x170] sm:$0xff]
      %v420 = vld [vmem:[%s1 + $0x178] sm:$0xff]
      %v421 = vld [vmem:[%s1 + $0x180] sm:$0xff]
      %v422 = vld [vmem:[%s1 + $0x188] sm:$0xff]
      %v423 = vld [vmem:[%s1 + $0x190] sm:$0xff]
      %v424 = vld [vmem:[%s1 + $0x198] sm:$0xff]
      %v425 = vld [vmem:[%s1 + $0x1a0] sm:$0xff]
      %v426 = vld [vmem:[%s1 + $0x1a8] sm:$0xff]
      %v427 = vld [vmem:[%s1 + $0x1b0] sm:$0xff]
      %v428 = vld [vmem:[%s1 + $0x1b8] sm:$0xff]
      %v429 = vld [vmem:[%s1 + $0x1c0] sm:$0xff]
      %v430 = vld [vmem:[%s1 + $0x1c8] sm:$0xff]
      %v431 = vld [vmem:[%s1 + $0x1d0] sm:$0xff]
      %v432 = vld [vmem:[%s1 + $0x1d8] sm:$0xff]
      %v433 = vld [vmem:[%s1 + $0x1e0] sm:$0xff]
      %v434 = vld [vmem:[%s1 + $0x1e8] sm:$0xff]
      %v435 = vld [vmem:[%s1 + $0x1f0] sm:$0xff]
      %v436 = vld [vmem:[%s1 + $0x1f8] sm:$0xff]
      %v437 = vld [vmem:[%s2] sm:$0xf]
      %v439 = vlaneseq
      %v440 = vshrl.u32 %v439, 7
      %v441 = vsub.s32 0, %v440
      %v442 = vrot.slane %v437, %v441
      %v443 = vlaneseq
      %v444 = vshrl.u32 %v443, 7
      %v445 = vsub.s32 1, %v444
      %v446 = vrot.slane %v437, %v445
      %v447 = vlaneseq
      %v448 = vshrl.u32 %v447, 7
      %v449 = vsub.s32 2, %v448
      %v450 = vrot.slane %v437, %v449
      %v451 = vlaneseq
      %v452 = vshrl.u32 %v451, 7
      %v453 = vsub.s32 3, %v452
      %v454 = vrot.slane %v437, %v453
      %v491 = vunpack.c.l.b16 %v341
      %v492 = vunpack.c.h.b16 %v341
      %v493 = vunpack.c.l.b16 %v342
      %v494 = vunpack.c.h.b16 %v342
      %v495 = vunpack.c.l.b16 %v343
      %v496 = vunpack.c.h.b16 %v343
      %v497 = vunpack.c.l.b16 %v344
      %v498 = vunpack.c.h.b16 %v344
      %v499 = vunpack.c.l.b16 %v345
      %v500 = vunpack.c.h.b16 %v345
      %v501 = vunpack.c.l.b16 %v346
      %v502 = vunpack.c.h.b16 %v346
      %v503 = vunpack.c.l.b16 %v347
      %v504 = vunpack.c.h.b16 %v347
      %v505 = vunpack.c.l.b16 %v348
      %v506 = vunpack.c.h.b16 %v348
      %v507 = vunpack.c.l.b16 %v349
      %v508 = vunpack.c.h.b16 %v349
      %v509 = vunpack.c.l.b16 %v350
      %v510 = vunpack.c.h.b16 %v350
      %v511 = vunpack.c.l.b16 %v351
      %v512 = vunpack.c.h.b16 %v351
      %v513 = vunpack.c.l.b16 %v352
      %v514 = vunpack.c.h.b16 %v352
      %v515 = vunpack.c.l.b16 %v353
      %v516 = vunpack.c.h.b16 %v353
      %v517 = vunpack.c.l.b16 %v354
      %v518 = vunpack.c.h.b16 %v354
      %v519 = vunpack.c.l.b16 %v355
      %v520 = vunpack.c.h.b16 %v355
      %v521 = vunpack.c.l.b16 %v356
      %v522 = vunpack.c.h.b16 %v356
      %v523 = vunpack.c.l.b16 %v357
      %v524 = vunpack.c.h.b16 %v357
      %v525 = vunpack.c.l.b16 %v358
      %v526 = vunpack.c.h.b16 %v358
      %v527 = vunpack.c.l.b16 %v359
      %v528 = vunpack.c.h.b16 %v359
      %v529 = vunpack.c.l.b16 %v360
      %v530 = vunpack.c.h.b16 %v360
      %v531 = vunpack.c.l.b16 %v361
      %v532 = vunpack.c.h.b16 %v361
      %v533 = vunpack.c.l.b16 %v362
      %v534 = vunpack.c.h.b16 %v362
      %v535 = vunpack.c.l.b16 %v363
      %v536 = vunpack.c.h.b16 %v363
      %v537 = vunpack.c.l.b16 %v364
      %v538 = vunpack.c.h.b16 %v364
      %v539 = vunpack.c.l.b16 %v365
      %v540 = vunpack.c.h.b16 %v365
      %v541 = vunpack.c.l.b16 %v366
      %v542 = vunpack.c.h.b16 %v366
      %v543 = vunpack.c.l.b16 %v367
      %v544 = vunpack.c.h.b16 %v367
      %v545 = vunpack.c.l.b16 %v368
      %v546 = vunpack.c.h.b16 %v368
      %v547 = vunpack.c.l.b16 %v369
      %v548 = vunpack.c.h.b16 %v369
      %v549 = vunpack.c.l.b16 %v370
      %v550 = vunpack.c.h.b16 %v370
      %v551 = vunpack.c.l.b16 %v371
      %v552 = vunpack.c.h.b16 %v371
      %v553 = vunpack.c.l.b16 %v372
      %v554 = vunpack.c.h.b16 %v372
      %v555 = vpack.c.b16 %v493, %v491
      %v556 = vpack.c.b16 %v494, %v492
      %v557 = vpack.c.b16 %v497, %v495
      %v558 = vpack.c.b16 %v498, %v496
      %v559 = vpack.c.b16 %v501, %v499
      %v560 = vpack.c.b16 %v502, %v500
      %v561 = vpack.c.b16 %v505, %v503
      %v562 = vpack.c.b16 %v506, %v504
      %v563 = vpack.c.b16 %v509, %v507
      %v564 = vpack.c.b16 %v510, %v508
      %v565 = vpack.c.b16 %v513, %v511
      %v566 = vpack.c.b16 %v514, %v512
      %v567 = vpack.c.b16 %v517, %v515
      %v568 = vpack.c.b16 %v518, %v516
      %v569 = vpack.c.b16 %v521, %v519
      %v570 = vpack.c.b16 %v522, %v520
      %v571 = vpack.c.b16 %v525, %v523
      %v572 = vpack.c.b16 %v526, %v524
      %v573 = vpack.c.b16 %v529, %v527
      %v574 = vpack.c.b16 %v530, %v528
      %v575 = vpack.c.b16 %v533, %v531
      %v576 = vpack.c.b16 %v534, %v532
      %v577 = vpack.c.b16 %v537, %v535
      %v578 = vpack.c.b16 %v538, %v536
      %v579 = vpack.c.b16 %v541, %v539
      %v580 = vpack.c.b16 %v542, %v540
      %v581 = vpack.c.b16 %v545, %v543
      %v582 = vpack.c.b16 %v546, %v544
      %v583 = vpack.c.b16 %v549, %v547
      %v584 = vpack.c.b16 %v550, %v548
      %v585 = vpack.c.b16 %v553, %v551
      %v586 = vpack.c.b16 %v554, %v552
      %v683 = vunpack.c.l.b16 %v373
      %v684 = vunpack.c.h.b16 %v373
      %v685 = vunpack.c.l.b16 %v374
      %v686 = vunpack.c.h.b16 %v374
      %v687 = vunpack.c.l.b16 %v375
      %v688 = vunpack.c.h.b16 %v375
      %v689 = vunpack.c.l.b16 %v376
      %v690 = vunpack.c.h.b16 %v376
      %v691 = vunpack.c.l.b16 %v377
      %v692 = vunpack.c.h.b16 %v377
      %v693 = vunpack.c.l.b16 %v378
      %v694 = vunpack.c.h.b16 %v378
      %v695 = vunpack.c.l.b16 %v379
      %v696 = vunpack.c.h.b16 %v379
      %v697 = vunpack.c.l.b16 %v380
      %v698 = vunpack.c.h.b16 %v380
      %v699 = vunpack.c.l.b16 %v381
      %v700 = vunpack.c.h.b16 %v381
      %v701 = vunpack.c.l.b16 %v382
      %v702 = vunpack.c.h.b16 %v382
      %v703 = vunpack.c.l.b16 %v383
      %v704 = vunpack.c.h.b16 %v383
      %v705 = vunpack.c.l.b16 %v384
      %v706 = vunpack.c.h.b16 %v384
      %v707 = vunpack.c.l.b16 %v385
      %v708 = vunpack.c.h.b16 %v385
      %v709 = vunpack.c.l.b16 %v386
      %v710 = vunpack.c.h.b16 %v386
      %v711 = vunpack.c.l.b16 %v387
      %v712 = vunpack.c.h.b16 %v387
      %v713 = vunpack.c.l.b16 %v388
      %v714 = vunpack.c.h.b16 %v388
      %v715 = vunpack.c.l.b16 %v389
      %v716 = vunpack.c.h.b16 %v389
      %v717 = vunpack.c.l.b16 %v390
      %v718 = vunpack.c.h.b16 %v390
      %v719 = vunpack.c.l.b16 %v391
      %v720 = vunpack.c.h.b16 %v391
      %v721 = vunpack.c.l.b16 %v392
      %v722 = vunpack.c.h.b16 %v392
      %v723 = vunpack.c.l.b16 %v393
      %v724 = vunpack.c.h.b16 %v393
      %v725 = vunpack.c.l.b16 %v394
      %v726 = vunpack.c.h.b16 %v394
      %v727 = vunpack.c.l.b16 %v395
      %v728 = vunpack.c.h.b16 %v395
      %v729 = vunpack.c.l.b16 %v396
      %v730 = vunpack.c.h.b16 %v396
      %v731 = vunpack.c.l.b16 %v397
      %v732 = vunpack.c.h.b16 %v397
      %v733 = vunpack.c.l.b16 %v398
      %v734 = vunpack.c.h.b16 %v398
      %v735 = vunpack.c.l.b16 %v399
      %v736 = vunpack.c.h.b16 %v399
      %v737 = vunpack.c.l.b16 %v400
      %v738 = vunpack.c.h.b16 %v400
      %v739 = vunpack.c.l.b16 %v401
      %v740 = vunpack.c.h.b16 %v401
      %v741 = vunpack.c.l.b16 %v402
      %v742 = vunpack.c.h.b16 %v402
      %v743 = vunpack.c.l.b16 %v403
      %v744 = vunpack.c.h.b16 %v403
      %v745 = vunpack.c.l.b16 %v404
      %v746 = vunpack.c.h.b16 %v404
      %v747 = vunpack.c.l.b16 %v405
      %v748 = vunpack.c.h.b16 %v405
      %v749 = vunpack.c.l.b16 %v406
      %v750 = vunpack.c.h.b16 %v406
      %v751 = vunpack.c.l.b16 %v407
      %v752 = vunpack.c.h.b16 %v407
      %v753 = vunpack.c.l.b16 %v408
      %v754 = vunpack.c.h.b16 %v408
      %v755 = vunpack.c.l.b16 %v409
      %v756 = vunpack.c.h.b16 %v409
      %v757 = vunpack.c.l.b16 %v410
      %v758 = vunpack.c.h.b16 %v410
      %v759 = vunpack.c.l.b16 %v411
      %v760 = vunpack.c.h.b16 %v411
      %v761 = vunpack.c.l.b16 %v412
      %v762 = vunpack.c.h.b16 %v412
      %v763 = vunpack.c.l.b16 %v413
      %v764 = vunpack.c.h.b16 %v413
      %v765 = vunpack.c.l.b16 %v414
      %v766 = vunpack.c.h.b16 %v414
      %v767 = vunpack.c.l.b16 %v415
      %v768 = vunpack.c.h.b16 %v415
      %v769 = vunpack.c.l.b16 %v416
      %v770 = vunpack.c.h.b16 %v416
      %v771 = vunpack.c.l.b16 %v417
      %v772 = vunpack.c.h.b16 %v417
      %v773 = vunpack.c.l.b16 %v418
      %v774 = vunpack.c.h.b16 %v418
      %v775 = vunpack.c.l.b16 %v419
      %v776 = vunpack.c.h.b16 %v419
      %v777 = vunpack.c.l.b16 %v420
      %v778 = vunpack.c.h.b16 %v420
      %v779 = vunpack.c.l.b16 %v421
      %v780 = vunpack.c.h.b16 %v421
      %v781 = vunpack.c.l.b16 %v422
      %v782 = vunpack.c.h.b16 %v422
      %v783 = vunpack.c.l.b16 %v423
      %v784 = vunpack.c.h.b16 %v423
      %v785 = vunpack.c.l.b16 %v424
      %v786 = vunpack.c.h.b16 %v424
      %v787 = vunpack.c.l.b16 %v425
      %v788 = vunpack.c.h.b16 %v425
      %v789 = vunpack.c.l.b16 %v426
      %v790 = vunpack.c.h.b16 %v426
      %v791 = vunpack.c.l.b16 %v427
      %v792 = vunpack.c.h.b16 %v427
      %v793 = vunpack.c.l.b16 %v428
      %v794 = vunpack.c.h.b16 %v428
      %v795 = vunpack.c.l.b16 %v429
      %v796 = vunpack.c.h.b16 %v429
      %v797 = vunpack.c.l.b16 %v430
      %v798 = vunpack.c.h.b16 %v430
      %v799 = vunpack.c.l.b16 %v431
      %v800 = vunpack.c.h.b16 %v431
      %v801 = vunpack.c.l.b16 %v432
      %v802 = vunpack.c.h.b16 %v432
      %v803 = vunpack.c.l.b16 %v433
      %v804 = vunpack.c.h.b16 %v433
      %v805 = vunpack.c.l.b16 %v434
      %v806 = vunpack.c.h.b16 %v434
      %v807 = vunpack.c.l.b16 %v435
      %v808 = vunpack.c.h.b16 %v435
      %v809 = vunpack.c.l.b16 %v436
      %v810 = vunpack.c.h.b16 %v436
      %v811 = vpack.c.b16 %v687, %v683
      %v812 = vpack.c.b16 %v688, %v684
      %v813 = vpack.c.b16 %v689, %v685
      %v814 = vpack.c.b16 %v690, %v686
      %v815 = vpack.c.b16 %v695, %v691
      %v816 = vpack.c.b16 %v696, %v692
      %v817 = vpack.c.b16 %v697, %v693
      %v818 = vpack.c.b16 %v698, %v694
      %v819 = vpack.c.b16 %v703, %v699
      %v820 = vpack.c.b16 %v704, %v700
      %v821 = vpack.c.b16 %v705, %v701
      %v822 = vpack.c.b16 %v706, %v702
      %v823 = vpack.c.b16 %v711, %v707
      %v824 = vpack.c.b16 %v712, %v708
      %v825 = vpack.c.b16 %v713, %v709
      %v826 = vpack.c.b16 %v714, %v710
      %v827 = vpack.c.b16 %v719, %v715
      %v828 = vpack.c.b16 %v720, %v716
      %v829 = vpack.c.b16 %v721, %v717
      %v830 = vpack.c.b16 %v722, %v718
      %v831 = vpack.c.b16 %v727, %v723
      %v832 = vpack.c.b16 %v728, %v724
      %v833 = vpack.c.b16 %v729, %v725
      %v834 = vpack.c.b16 %v730, %v726
      %v835 = vpack.c.b16 %v735, %v731
      %v836 = vpack.c.b16 %v736, %v732
      %v837 = vpack.c.b16 %v737, %v733
      %v838 = vpack.c.b16 %v738, %v734
      %v839 = vpack.c.b16 %v743, %v739
      %v840 = vpack.c.b16 %v744, %v740
      %v841 = vpack.c.b16 %v745, %v741
      %v842 = vpack.c.b16 %v746, %v742
      %v843 = vpack.c.b16 %v751, %v747
      %v844 = vpack.c.b16 %v752, %v748
      %v845 = vpack.c.b16 %v753, %v749
      %v846 = vpack.c.b16 %v754, %v750
      %v847 = vpack.c.b16 %v759, %v755
      %v848 = vpack.c.b16 %v760, %v756
      %v849 = vpack.c.b16 %v761, %v757
      %v850 = vpack.c.b16 %v762, %v758
      %v851 = vpack.c.b16 %v767, %v763
      %v852 = vpack.c.b16 %v768, %v764
      %v853 = vpack.c.b16 %v769, %v765
      %v854 = vpack.c.b16 %v770, %v766
      %v855 = vpack.c.b16 %v775, %v771
      %v856 = vpack.c.b16 %v776, %v772
      %v857 = vpack.c.b16 %v777, %v773
      %v858 = vpack.c.b16 %v778, %v774
      %v859 = vpack.c.b16 %v783, %v779
      %v860 = vpack.c.b16 %v784, %v780
      %v861 = vpack.c.b16 %v785, %v781
      %v862 = vpack.c.b16 %v786, %v782
      %v863 = vpack.c.b16 %v791, %v787
      %v864 = vpack.c.b16 %v792, %v788
      %v865 = vpack.c.b16 %v793, %v789
      %v866 = vpack.c.b16 %v794, %v790
      %v867 = vpack.c.b16 %v799, %v795
      %v868 = vpack.c.b16 %v800, %v796
      %v869 = vpack.c.b16 %v801, %v797
      %v870 = vpack.c.b16 %v802, %v798
      %v871 = vpack.c.b16 %v807, %v803
      %v872 = vpack.c.b16 %v808, %v804
      %v873 = vpack.c.b16 %v809, %v805
      %v874 = vpack.c.b16 %v810, %v806
      %939 = vmatprep.subr.bf16.mxu0 %v812
      %940 = vmatpush1.bf16.msra.mxu0 %v811
      %941 = vmatprep.subr.bf16.mxu0 %v816
      %942 = vmatpush1.bf16.msra.mxu0 %v815
      %943 = vmatprep.subr.bf16.mxu0 %v820
      %944 = vmatpush1.bf16.msra.mxu0 %v819
      %945 = vmatprep.subr.bf16.mxu0 %v824
      %946 = vmatpush1.bf16.msra.mxu0 %v823
      %947 = vmatprep.subr.bf16.mxu0 %v828
      %948 = vmatpush1.bf16.msra.mxu0 %v827
      %949 = vmatprep.subr.bf16.mxu0 %v832
      %950 = vmatpush1.bf16.msra.mxu0 %v831
      %951 = vmatprep.subr.bf16.mxu0 %v836
      %952 = vmatpush1.bf16.msra.mxu0 %v835
      %953 = vmatprep.subr.bf16.mxu0 %v840
      %954 = vmatpush1.bf16.msra.mxu0 %v839
      %955 = vmatprep.subr.bf16.mxu0 %v844
      %956 = vmatpush1.bf16.msra.mxu0 %v843
      %957 = vmatprep.subr.bf16.mxu0 %v848
      %958 = vmatpush1.bf16.msra.mxu0 %v847
      %959 = vmatprep.subr.bf16.mxu0 %v852
      %960 = vmatpush1.bf16.msra.mxu0 %v851
      %961 = vmatprep.subr.bf16.mxu0 %v856
      %962 = vmatpush1.bf16.msra.mxu0 %v855
      %963 = vmatprep.subr.bf16.mxu0 %v860
      %964 = vmatpush1.bf16.msra.mxu0 %v859
      %965 = vmatprep.subr.bf16.mxu0 %v864
      %966 = vmatpush1.bf16.msra.mxu0 %v863
      %967 = vmatprep.subr.bf16.mxu0 %v868
      %968 = vmatpush1.bf16.msra.mxu0 %v867
      %969 = vmatprep.subr.bf16.mxu0 %v872
      %970 = vmatpush1.bf16.msra.mxu0 %v871
      %971 = vmatprep.mubr.bf16.mxu0 %v556
      %972 = vmatmul.mubr.bf16.gmra.mrb[0].mxu0 %v555
      %v973 = vpop.f32.mrb[0].mxu0
      %v974 = vadd.f32 %v442, %v973
      %v975 = vpop.f32.mrb[0].mxu0
      %v976 = vadd.f32 %v446, %v975
      %v977 = vpop.f32.mrb[0].mxu0
      %v978 = vadd.f32 %v442, %v977
      %v979 = vpop.f32.mrb[0].mxu0
      %v980 = vadd.f32 %v446, %v979
      %981 = vmatprep.mubr.bf16.mxu0 %v558
      %982 = vmatmul.mubr.bf16.gmra.mrb[0].mxu0 %v557
      %v983 = vpop.f32.mrb[0].mxu0
      %v984 = vadd.f32 %v442, %v983
      %v985 = vpop.f32.mrb[0].mxu0
      %v986 = vadd.f32 %v446, %v985
      %v987 = vpop.f32.mrb[0].mxu0
      %v988 = vadd.f32 %v442, %v987
      %v989 = vpop.f32.mrb[0].mxu0
      %v990 = vadd.f32 %v446, %v989
      %991 = vmatprep.mubr.bf16.mxu0 %v560
      %992 = vmatmul.mubr.bf16.gmra.mrb[0].mxu0 %v559
      %v993 = vpop.f32.mrb[0].mxu0
      %v994 = vadd.f32 %v442, %v993
      %v995 = vpop.f32.mrb[0].mxu0
      %v996 = vadd.f32 %v446, %v995
      %v997 = vpop.f32.mrb[0].mxu0
      %v998 = vadd.f32 %v442, %v997
      %v999 = vpop.f32.mrb[0].mxu0
      %v1000 = vadd.f32 %v446, %v999
      %1001 = vmatprep.mubr.bf16.mxu0 %v562
      %1002 = vmatmul.mubr.bf16.gmra.mrb[0].mxu0 %v561
      %v1003 = vpop.f32.mrb[0].mxu0
      %v1004 = vadd.f32 %v442, %v1003
      %v1005 = vpop.f32.mrb[0].mxu0
      %v1006 = vadd.f32 %v446, %v1005
      %v1007 = vpop.f32.mrb[0].mxu0
      %v1008 = vadd.f32 %v442, %v1007
      %v1009 = vpop.f32.mrb[0].mxu0
      %v1010 = vadd.f32 %v446, %v1009
      %1011 = vmatprep.mubr.bf16.mxu0 %v564
      %1012 = vmatmul.mubr.bf16.gmra.mrb[0].mxu0 %v563
      %v1013 = vpop.f32.mrb[0].mxu0
      %v1014 = vadd.f32 %v442, %v1013
      %v1015 = vpop.f32.mrb[0].mxu0
      %v1016 = vadd.f32 %v446, %v1015
      %v1017 = vpop.f32.mrb[0].mxu0
      %v1018 = vadd.f32 %v442, %v1017
      %v1019 = vpop.f32.mrb[0].mxu0
      %v1020 = vadd.f32 %v446, %v1019
      %1021 = vmatprep.mubr.bf16.mxu0 %v566
      %1022 = vmatmul.mubr.bf16.gmra.mrb[0].mxu0 %v565
      %v1023 = vpop.f32.mrb[0].mxu0
      %v1024 = vadd.f32 %v442, %v1023
      %v1025 = vpop.f32.mrb[0].mxu0
      %v1026 = vadd.f32 %v446, %v1025
      %v1027 = vpop.f32.mrb[0].mxu0
      %v1028 = vadd.f32 %v442, %v1027
      %v1029 = vpop.f32.mrb[0].mxu0
      %v1030 = vadd.f32 %v446, %v1029
      %1031 = vmatprep.mubr.bf16.mxu0 %v568
      %1032 = vmatmul.mubr.bf16.gmra.mrb[0].mxu0 %v567
      %v1033 = vpop.f32.mrb[0].mxu0
      %v1034 = vadd.f32 %v442, %v1033
      %v1035 = vpop.f32.mrb[0].mxu0
      %v1036 = vadd.f32 %v446, %v1035
      %v1037 = vpop.f32.mrb[0].mxu0
      %v1038 = vadd.f32 %v442, %v1037
      %v1039 = vpop.f32.mrb[0].mxu0
      %v1040 = vadd.f32 %v446, %v1039
      %1041 = vmatprep.mubr.bf16.mxu0 %v570
      %1042 = vmatmul.mubr.bf16.gmra.mrb[0].mxu0 %v569
      %v1043 = vpop.f32.mrb[0].mxu0
      %v1044 = vadd.f32 %v442, %v1043
      %v1045 = vpop.f32.mrb[0].mxu0
      %v1046 = vadd.f32 %v446, %v1045
      %v1047 = vpop.f32.mrb[0].mxu0
      %v1048 = vadd.f32 %v442, %v1047
      %v1049 = vpop.f32.mrb[0].mxu0
      %v1050 = vadd.f32 %v446, %v1049
      %1051 = vmatprep.mubr.bf16.mxu0 %v572
      %1052 = vmatmul.mubr.bf16.gmra.mrb[0].mxu0 %v571
      %v1053 = vpop.f32.mrb[0].mxu0
      %v1054 = vadd.f32 %v442, %v1053
      %v1055 = vpop.f32.mrb[0].mxu0
      %v1056 = vadd.f32 %v446, %v1055
      %v1057 = vpop.f32.mrb[0].mxu0
      %v1058 = vadd.f32 %v442, %v1057
      %v1059 = vpop.f32.mrb[0].mxu0
      %v1060 = vadd.f32 %v446, %v1059
      %1061 = vmatprep.mubr.bf16.mxu0 %v574
      %1062 = vmatmul.mubr.bf16.gmra.mrb[0].mxu0 %v573
      %v1063 = vpop.f32.mrb[0].mxu0
      %v1064 = vadd.f32 %v442, %v1063
      %v1065 = vpop.f32.mrb[0].mxu0
      %v1066 = vadd.f32 %v446, %v1065
      %v1067 = vpop.f32.mrb[0].mxu0
      %v1068 = vadd.f32 %v442, %v1067
      %v1069 = vpop.f32.mrb[0].mxu0
      %v1070 = vadd.f32 %v446, %v1069
      %1071 = vmatprep.mubr.bf16.mxu0 %v576
      %1072 = vmatmul.mubr.bf16.gmra.mrb[0].mxu0 %v575
      %v1073 = vpop.f32.mrb[0].mxu0
      %v1074 = vadd.f32 %v442, %v1073
      %v1075 = vpop.f32.mrb[0].mxu0
      %v1076 = vadd.f32 %v446, %v1075
      %v1077 = vpop.f32.mrb[0].mxu0
      %v1078 = vadd.f32 %v442, %v1077
      %v1079 = vpop.f32.mrb[0].mxu0
      %v1080 = vadd.f32 %v446, %v1079
      %1081 = vmatprep.mubr.bf16.mxu0 %v578
      %1082 = vmatmul.mubr.bf16.gmra.mrb[0].mxu0 %v577
      %v1083 = vpop.f32.mrb[0].mxu0
      %v1084 = vadd.f32 %v442, %v1083
      %v1085 = vpop.f32.mrb[0].mxu0
      %v1086 = vadd.f32 %v446, %v1085
      %v1087 = vpop.f32.mrb[0].mxu0
      %v1088 = vadd.f32 %v442, %v1087
      %v1089 = vpop.f32.mrb[0].mxu0
      %v1090 = vadd.f32 %v446, %v1089
      %1091 = vmatprep.mubr.bf16.mxu0 %v580
      %1092 = vmatmul.mubr.bf16.gmra.mrb[0].mxu0 %v579
      %v1093 = vpop.f32.mrb[0].mxu0
      %v1094 = vadd.f32 %v442, %v1093
      %v1095 = vpop.f32.mrb[0].mxu0
      %v1096 = vadd.f32 %v446, %v1095
      %v1097 = vpop.f32.mrb[0].mxu0
      %v1098 = vadd.f32 %v442, %v1097
      %v1099 = vpop.f32.mrb[0].mxu0
      %v1100 = vadd.f32 %v446, %v1099
      %1101 = vmatprep.mubr.bf16.mxu0 %v582
      %1102 = vmatmul.mubr.bf16.gmra.mrb[0].mxu0 %v581
      %v1103 = vpop.f32.mrb[0].mxu0
      %v1104 = vadd.f32 %v442, %v1103
      %v1105 = vpop.f32.mrb[0].mxu0
      %v1106 = vadd.f32 %v446, %v1105
      %v1107 = vpop.f32.mrb[0].mxu0
      %v1108 = vadd.f32 %v442, %v1107
      %v1109 = vpop.f32.mrb[0].mxu0
      %v1110 = vadd.f32 %v446, %v1109
      %1111 = vmatprep.mubr.bf16.mxu0 %v584
      %1112 = vmatmul.mubr.bf16.gmra.mrb[0].mxu0 %v583
      %v1113 = vpop.f32.mrb[0].mxu0
      %v1114 = vadd.f32 %v442, %v1113
      %v1115 = vpop.f32.mrb[0].mxu0
      %v1116 = vadd.f32 %v446, %v1115
      %v1117 = vpop.f32.mrb[0].mxu0
      %v1118 = vadd.f32 %v442, %v1117
      %v1119 = vpop.f32.mrb[0].mxu0
      %v1120 = vadd.f32 %v446, %v1119
      %1121 = vmatprep.mubr.bf16.mxu0 %v586
      %1122 = vmatmul.mubr.bf16.gmra.mrb[0].mxu0 %v585
      %v1123 = vpop.f32.mrb[0].mxu0
      %v1124 = vadd.f32 %v442, %v1123
      %v1125 = vpop.f32.mrb[0].mxu0
      %v1126 = vadd.f32 %v446, %v1125
      %v1127 = vpop.f32.mrb[0].mxu0
      %v1128 = vadd.f32 %v442, %v1127
      %v1129 = vpop.f32.mrb[0].mxu0
      %v1130 = vadd.f32 %v446, %v1129
      %1131 = vdwg.mxu0
      %1132 = vmatprep.subr.bf16.mxu0 %v814
      %1133 = vmatpush1.bf16.msra.mxu0 %v813
      %1134 = vmatprep.subr.bf16.mxu0 %v818
      %1135 = vmatpush1.bf16.msra.mxu0 %v817
      %1136 = vmatprep.subr.bf16.mxu0 %v822
      %1137 = vmatpush1.bf16.msra.mxu0 %v821
      %1138 = vmatprep.subr.bf16.mxu0 %v826
      %1139 = vmatpush1.bf16.msra.mxu0 %v825
      %1140 = vmatprep.subr.bf16.mxu0 %v830
      %1141 = vmatpush1.bf16.msra.mxu0 %v829
      %1142 = vmatprep.subr.bf16.mxu0 %v834
      %1143 = vmatpush1.bf16.msra.mxu0 %v833
      %1144 = vmatprep.subr.bf16.mxu0 %v838
      %1145 = vmatpush1.bf16.msra.mxu0 %v837
      %1146 = vmatprep.subr.bf16.mxu0 %v842
      %1147 = vmatpush1.bf16.msra.mxu0 %v841
      %1148 = vmatprep.subr.bf16.mxu0 %v846
      %1149 = vmatpush1.bf16.msra.mxu0 %v845
      %1150 = vmatprep.subr.bf16.mxu0 %v850
      %1151 = vmatpush1.bf16.msra.mxu0 %v849
      %1152 = vmatprep.subr.bf16.mxu0 %v854
      %1153 = vmatpush1.bf16.msra.mxu0 %v853
      %1154 = vmatprep.subr.bf16.mxu0 %v858
      %1155 = vmatpush1.bf16.msra.mxu0 %v857
      %1156 = vmatprep.subr.bf16.mxu0 %v862
      %1157 = vmatpush1.bf16.msra.mxu0 %v861
      %1158 = vmatprep.subr.bf16.mxu0 %v866
      %1159 = vmatpush1.bf16.msra.mxu0 %v865
      %1160 = vmatprep.subr.bf16.mxu0 %v870
      %1161 = vmatpush1.bf16.msra.mxu0 %v869
      %1162 = vmatprep.subr.bf16.mxu0 %v874
      %1163 = vmatpush1.bf16.msra.mxu0 %v873
      %1164 = vmatprep.mubr.bf16.mxu0 %v556
      %1165 = vmatmul.mubr.bf16.gmra.mrb[0].mxu0 %v555
      %v1166 = vpop.f32.mrb[0].mxu0
      %v1167 = vadd.f32 %v450, %v1166
      %v1168 = vpop.f32.mrb[0].mxu0
      %v1169 = vadd.f32 %v454, %v1168
      %v1170 = vpop.f32.mrb[0].mxu0
      %v1171 = vadd.f32 %v450, %v1170
      %v1172 = vpop.f32.mrb[0].mxu0
      %v1173 = vadd.f32 %v454, %v1172
      %1174 = vmatprep.mubr.bf16.mxu0 %v558
      %1175 = vmatmul.mubr.bf16.gmra.mrb[0].mxu0 %v557
      %v1176 = vpop.f32.mrb[0].mxu0
      %v1177 = vadd.f32 %v450, %v1176
      %v1178 = vpop.f32.mrb[0].mxu0
      %v1179 = vadd.f32 %v454, %v1178
      %v1180 = vpop.f32.mrb[0].mxu0
      %v1181 = vadd.f32 %v450, %v1180
      %v1182 = vpop.f32.mrb[0].mxu0
      %v1183 = vadd.f32 %v454, %v1182
      %1184 = vmatprep.mubr.bf16.mxu0 %v560
      %1185 = vmatmul.mubr.bf16.gmra.mrb[0].mxu0 %v559
      %v1186 = vpop.f32.mrb[0].mxu0
      %v1187 = vadd.f32 %v450, %v1186
      %v1188 = vpop.f32.mrb[0].mxu0
      %v1189 = vadd.f32 %v454, %v1188
      %v1190 = vpop.f32.mrb[0].mxu0
      %v1191 = vadd.f32 %v450, %v1190
      %v1192 = vpop.f32.mrb[0].mxu0
      %v1193 = vadd.f32 %v454, %v1192
      %1194 = vmatprep.mubr.bf16.mxu0 %v562
      %1195 = vmatmul.mubr.bf16.gmra.mrb[0].mxu0 %v561
      %v1196 = vpop.f32.mrb[0].mxu0
      %v1197 = vadd.f32 %v450, %v1196
      %v1198 = vpop.f32.mrb[0].mxu0
      %v1199 = vadd.f32 %v454, %v1198
      %v1200 = vpop.f32.mrb[0].mxu0
      %v1201 = vadd.f32 %v450, %v1200
      %v1202 = vpop.f32.mrb[0].mxu0
      %v1203 = vadd.f32 %v454, %v1202
      %1204 = vmatprep.mubr.bf16.mxu0 %v564
      %1205 = vmatmul.mubr.bf16.gmra.mrb[0].mxu0 %v563
      %v1206 = vpop.f32.mrb[0].mxu0
      %v1207 = vadd.f32 %v450, %v1206
      %v1208 = vpop.f32.mrb[0].mxu0
      %v1209 = vadd.f32 %v454, %v1208
      %v1210 = vpop.f32.mrb[0].mxu0
      %v1211 = vadd.f32 %v450, %v1210
      %v1212 = vpop.f32.mrb[0].mxu0
      %v1213 = vadd.f32 %v454, %v1212
      %1214 = vmatprep.mubr.bf16.mxu0 %v566
      %1215 = vmatmul.mubr.bf16.gmra.mrb[0].mxu0 %v565
      %v1216 = vpop.f32.mrb[0].mxu0
      %v1217 = vadd.f32 %v450, %v1216
      %v1218 = vpop.f32.mrb[0].mxu0
      %v1219 = vadd.f32 %v454, %v1218
      %v1220 = vpop.f32.mrb[0].mxu0
      %v1221 = vadd.f32 %v450, %v1220
      %v1222 = vpop.f32.mrb[0].mxu0
      %v1223 = vadd.f32 %v454, %v1222
      %1224 = vmatprep.mubr.bf16.mxu0 %v568
      %1225 = vmatmul.mubr.bf16.gmra.mrb[0].mxu0 %v567
      %v1226 = vpop.f32.mrb[0].mxu0
      %v1227 = vadd.f32 %v450, %v1226
      %v1228 = vpop.f32.mrb[0].mxu0
      %v1229 = vadd.f32 %v454, %v1228
      %v1230 = vpop.f32.mrb[0].mxu0
      %v1231 = vadd.f32 %v450, %v1230
      %v1232 = vpop.f32.mrb[0].mxu0
      %v1233 = vadd.f32 %v454, %v1232
      %1234 = vmatprep.mubr.bf16.mxu0 %v570
      %1235 = vmatmul.mubr.bf16.gmra.mrb[0].mxu0 %v569
      %v1236 = vpop.f32.mrb[0].mxu0
      %v1237 = vadd.f32 %v450, %v1236
      %v1238 = vpop.f32.mrb[0].mxu0
      %v1239 = vadd.f32 %v454, %v1238
      %v1240 = vpop.f32.mrb[0].mxu0
      %v1241 = vadd.f32 %v450, %v1240
      %v1242 = vpop.f32.mrb[0].mxu0
      %v1243 = vadd.f32 %v454, %v1242
      %1244 = vmatprep.mubr.bf16.mxu0 %v572
      %1245 = vmatmul.mubr.bf16.gmra.mrb[0].mxu0 %v571
      %v1246 = vpop.f32.mrb[0].mxu0
      %v1247 = vadd.f32 %v450, %v1246
      %v1248 = vpop.f32.mrb[0].mxu0
      %v1249 = vadd.f32 %v454, %v1248
      %v1250 = vpop.f32.mrb[0].mxu0
      %v1251 = vadd.f32 %v450, %v1250
      %v1252 = vpop.f32.mrb[0].mxu0
      %v1253 = vadd.f32 %v454, %v1252
      %1254 = vmatprep.mubr.bf16.mxu0 %v574
      %1255 = vmatmul.mubr.bf16.gmra.mrb[0].mxu0 %v573
      %v1256 = vpop.f32.mrb[0].mxu0
      %v1257 = vadd.f32 %v450, %v1256
      %v1258 = vpop.f32.mrb[0].mxu0
      %v1259 = vadd.f32 %v454, %v1258
      %v1260 = vpop.f32.mrb[0].mxu0
      %v1261 = vadd.f32 %v450, %v1260
      %v1262 = vpop.f32.mrb[0].mxu0
      %v1263 = vadd.f32 %v454, %v1262
      %1264 = vmatprep.mubr.bf16.mxu0 %v576
      %1265 = vmatmul.mubr.bf16.gmra.mrb[0].mxu0 %v575
      %v1266 = vpop.f32.mrb[0].mxu0
      %v1267 = vadd.f32 %v450, %v1266
      %v1268 = vpop.f32.mrb[0].mxu0
      %v1269 = vadd.f32 %v454, %v1268
      %v1270 = vpop.f32.mrb[0].mxu0
      %v1271 = vadd.f32 %v450, %v1270
      %v1272 = vpop.f32.mrb[0].mxu0
      %v1273 = vadd.f32 %v454, %v1272
      %1274 = vmatprep.mubr.bf16.mxu0 %v578
      %1275 = vmatmul.mubr.bf16.gmra.mrb[0].mxu0 %v577
      %v1276 = vpop.f32.mrb[0].mxu0
      %v1277 = vadd.f32 %v450, %v1276
      %v1278 = vpop.f32.mrb[0].mxu0
      %v1279 = vadd.f32 %v454, %v1278
      %v1280 = vpop.f32.mrb[0].mxu0
      %v1281 = vadd.f32 %v450, %v1280
      %v1282 = vpop.f32.mrb[0].mxu0
      %v1283 = vadd.f32 %v454, %v1282
      %1284 = vmatprep.mubr.bf16.mxu0 %v580
      %1285 = vmatmul.mubr.bf16.gmra.mrb[0].mxu0 %v579
      %v1286 = vpop.f32.mrb[0].mxu0
      %v1287 = vadd.f32 %v450, %v1286
      %v1288 = vpop.f32.mrb[0].mxu0
      %v1289 = vadd.f32 %v454, %v1288
      %v1290 = vpop.f32.mrb[0].mxu0
      %v1291 = vadd.f32 %v450, %v1290
      %v1292 = vpop.f32.mrb[0].mxu0
      %v1293 = vadd.f32 %v454, %v1292
      %1294 = vmatprep.mubr.bf16.mxu0 %v582
      %1295 = vmatmul.mubr.bf16.gmra.mrb[0].mxu0 %v581
      %v1296 = vpop.f32.mrb[0].mxu0
      %v1297 = vadd.f32 %v450, %v1296
      %v1298 = vpop.f32.mrb[0].mxu0
      %v1299 = vadd.f32 %v454, %v1298
      %v1300 = vpop.f32.mrb[0].mxu0
      %v1301 = vadd.f32 %v450, %v1300
      %v1302 = vpop.f32.mrb[0].mxu0
      %v1303 = vadd.f32 %v454, %v1302
      %1304 = vmatprep.mubr.bf16.mxu0 %v584
      %1305 = vmatmul.mubr.bf16.gmra.mrb[0].mxu0 %v583
      %v1306 = vpop.f32.mrb[0].mxu0
      %v1307 = vadd.f32 %v450, %v1306
      %v1308 = vpop.f32.mrb[0].mxu0
      %v1309 = vadd.f32 %v454, %v1308
      %v1310 = vpop.f32.mrb[0].mxu0
      %v1311 = vadd.f32 %v450, %v1310
      %v1312 = vpop.f32.mrb[0].mxu0
      %v1313 = vadd.f32 %v454, %v1312
      %1314 = vmatprep.mubr.bf16.mxu0 %v586
      %1315 = vmatmul.mubr.bf16.gmra.mrb[0].mxu0 %v585
      %v1316 = vpop.f32.mrb[0].mxu0
      %v1317 = vadd.f32 %v450, %v1316
      %v1318 = vpop.f32.mrb[0].mxu0
      %v1319 = vadd.f32 %v454, %v1318
      %v1320 = vpop.f32.mrb[0].mxu0
      %v1321 = vadd.f32 %v450, %v1320
      %v1322 = vpop.f32.mrb[0].mxu0
      %v1323 = vadd.f32 %v454, %v1322
      %1324 = vdwg.mxu0
      %v1325 = vld [vmem:[%s3] sm:$0xf]
      %v1326 = vld [vmem:[%s4] sm:$0xf]
      %v1327 = vadd.f32 %v974, %v976
      %v1328 = vadd.f32 %v1327, %v1167
      %v1329 = vadd.f32 %v1328, %v1169
      %1330 = vadd.xlane.f32.xlu0 %v1329
      %v1331 = vpop.xlane.xlu0 %1330
      %v1332 = vadd.f32 %v978, %v980
      %v1333 = vadd.f32 %v1332, %v1171
      %v1334 = vadd.f32 %v1333, %v1173
      %1335 = vadd.xlane.f32.xlu0 %v1334
      %v1336 = vpop.xlane.xlu0 %1335
      %v1337 = vadd.f32 %v984, %v986
      %v1338 = vadd.f32 %v1337, %v1177
      %v1339 = vadd.f32 %v1338, %v1179
      %1340 = vadd.xlane.f32.xlu0 %v1339
      %v1341 = vpop.xlane.xlu0 %1340
      %v1342 = vadd.f32 %v988, %v990
      %v1343 = vadd.f32 %v1342, %v1181
      %v1344 = vadd.f32 %v1343, %v1183
      %1345 = vadd.xlane.f32.xlu0 %v1344
      %v1346 = vpop.xlane.xlu0 %1345
      %v1347 = vadd.f32 %v994, %v996
      %v1348 = vadd.f32 %v1347, %v1187
      %v1349 = vadd.f32 %v1348, %v1189
      %1350 = vadd.xlane.f32.xlu0 %v1349
      %v1351 = vpop.xlane.xlu0 %1350
      %v1352 = vadd.f32 %v998, %v1000
      %v1353 = vadd.f32 %v1352, %v1191
      %v1354 = vadd.f32 %v1353, %v1193
      %1355 = vadd.xlane.f32.xlu0 %v1354
      %v1356 = vpop.xlane.xlu0 %1355
      %v1357 = vadd.f32 %v1004, %v1006
      %v1358 = vadd.f32 %v1357, %v1197
      %v1359 = vadd.f32 %v1358, %v1199
      %1360 = vadd.xlane.f32.xlu0 %v1359
      %v1361 = vpop.xlane.xlu0 %1360
      %v1362 = vadd.f32 %v1008, %v1010
      %v1363 = vadd.f32 %v1362, %v1201
      %v1364 = vadd.f32 %v1363, %v1203
      %1365 = vadd.xlane.f32.xlu0 %v1364
      %v1366 = vpop.xlane.xlu0 %1365
      %v1367 = vadd.f32 %v1014, %v1016
      %v1368 = vadd.f32 %v1367, %v1207
      %v1369 = vadd.f32 %v1368, %v1209
      %1370 = vadd.xlane.f32.xlu0 %v1369
      %v1371 = vpop.xlane.xlu0 %1370
      %v1372 = vadd.f32 %v1018, %v1020
      %v1373 = vadd.f32 %v1372, %v1211
      %v1374 = vadd.f32 %v1373, %v1213
      %1375 = vadd.xlane.f32.xlu0 %v1374
      %v1376 = vpop.xlane.xlu0 %1375
      %v1377 = vadd.f32 %v1024, %v1026
      %v1378 = vadd.f32 %v1377, %v1217
      %v1379 = vadd.f32 %v1378, %v1219
      %1380 = vadd.xlane.f32.xlu0 %v1379
      %v1381 = vpop.xlane.xlu0 %1380
      %v1382 = vadd.f32 %v1028, %v1030
      %v1383 = vadd.f32 %v1382, %v1221
      %v1384 = vadd.f32 %v1383, %v1223
      %1385 = vadd.xlane.f32.xlu0 %v1384
      %v1386 = vpop.xlane.xlu0 %1385
      %v1387 = vadd.f32 %v1034, %v1036
      %v1388 = vadd.f32 %v1387, %v1227
      %v1389 = vadd.f32 %v1388, %v1229
      %1390 = vadd.xlane.f32.xlu0 %v1389
      %v1391 = vpop.xlane.xlu0 %1390
      %v1392 = vadd.f32 %v1038, %v1040
      %v1393 = vadd.f32 %v1392, %v1231
      %v1394 = vadd.f32 %v1393, %v1233
      %1395 = vadd.xlane.f32.xlu0 %v1394
      %v1396 = vpop.xlane.xlu0 %1395
      %v1397 = vadd.f32 %v1044, %v1046
      %v1398 = vadd.f32 %v1397, %v1237
      %v1399 = vadd.f32 %v1398, %v1239
      %1400 = vadd.xlane.f32.xlu0 %v1399
      %v1401 = vpop.xlane.xlu0 %1400
      %v1402 = vadd.f32 %v1048, %v1050
      %v1403 = vadd.f32 %v1402, %v1241
      %v1404 = vadd.f32 %v1403, %v1243
      %1405 = vadd.xlane.f32.xlu0 %v1404
      %v1406 = vpop.xlane.xlu0 %1405
      %v1407 = vadd.f32 %v1054, %v1056
      %v1408 = vadd.f32 %v1407, %v1247
      %v1409 = vadd.f32 %v1408, %v1249
      %1410 = vadd.xlane.f32.xlu0 %v1409
      %v1411 = vpop.xlane.xlu0 %1410
      %v1412 = vadd.f32 %v1058, %v1060
      %v1413 = vadd.f32 %v1412, %v1251
      %v1414 = vadd.f32 %v1413, %v1253
      %1415 = vadd.xlane.f32.xlu0 %v1414
      %v1416 = vpop.xlane.xlu0 %1415
      %v1417 = vadd.f32 %v1064, %v1066
      %v1418 = vadd.f32 %v1417, %v1257
      %v1419 = vadd.f32 %v1418, %v1259
      %1420 = vadd.xlane.f32.xlu0 %v1419
      %v1421 = vpop.xlane.xlu0 %1420
      %v1422 = vadd.f32 %v1068, %v1070
      %v1423 = vadd.f32 %v1422, %v1261
      %v1424 = vadd.f32 %v1423, %v1263
      %1425 = vadd.xlane.f32.xlu0 %v1424
      %v1426 = vpop.xlane.xlu0 %1425
      %v1427 = vadd.f32 %v1074, %v1076
      %v1428 = vadd.f32 %v1427, %v1267
      %v1429 = vadd.f32 %v1428, %v1269
      %1430 = vadd.xlane.f32.xlu0 %v1429
      %v1431 = vpop.xlane.xlu0 %1430
      %v1432 = vadd.f32 %v1078, %v1080
      %v1433 = vadd.f32 %v1432, %v1271
      %v1434 = vadd.f32 %v1433, %v1273
      %1435 = vadd.xlane.f32.xlu0 %v1434
      %v1436 = vpop.xlane.xlu0 %1435
      %v1437 = vadd.f32 %v1084, %v1086
      %v1438 = vadd.f32 %v1437, %v1277
      %v1439 = vadd.f32 %v1438, %v1279
      %1440 = vadd.xlane.f32.xlu0 %v1439
      %v1441 = vpop.xlane.xlu0 %1440
      %v1442 = vadd.f32 %v1088, %v1090
      %v1443 = vadd.f32 %v1442, %v1281
      %v1444 = vadd.f32 %v1443, %v1283
      %1445 = vadd.xlane.f32.xlu0 %v1444
      %v1446 = vpop.xlane.xlu0 %1445
      %v1447 = vadd.f32 %v1094, %v1096
      %v1448 = vadd.f32 %v1447, %v1287
      %v1449 = vadd.f32 %v1448, %v1289
      %1450 = vadd.xlane.f32.xlu0 %v1449
      %v1451 = vpop.xlane.xlu0 %1450
      %v1452 = vadd.f32 %v1098, %v1100
      %v1453 = vadd.f32 %v1452, %v1291
      %v1454 = vadd.f32 %v1453, %v1293
      %1455 = vadd.xlane.f32.xlu0 %v1454
      %v1456 = vpop.xlane.xlu0 %1455
      %v1457 = vadd.f32 %v1104, %v1106
      %v1458 = vadd.f32 %v1457, %v1297
      %v1459 = vadd.f32 %v1458, %v1299
      %1460 = vadd.xlane.f32.xlu0 %v1459
      %v1461 = vpop.xlane.xlu0 %1460
      %v1462 = vadd.f32 %v1108, %v1110
      %v1463 = vadd.f32 %v1462, %v1301
      %v1464 = vadd.f32 %v1463, %v1303
      %1465 = vadd.xlane.f32.xlu0 %v1464
      %v1466 = vpop.xlane.xlu0 %1465
      %v1467 = vadd.f32 %v1114, %v1116
      %v1468 = vadd.f32 %v1467, %v1307
      %v1469 = vadd.f32 %v1468, %v1309
      %1470 = vadd.xlane.f32.xlu0 %v1469
      %v1471 = vpop.xlane.xlu0 %1470
      %v1472 = vadd.f32 %v1118, %v1120
      %v1473 = vadd.f32 %v1472, %v1311
      %v1474 = vadd.f32 %v1473, %v1313
      %1475 = vadd.xlane.f32.xlu0 %v1474
      %v1476 = vpop.xlane.xlu0 %1475
      %v1477 = vadd.f32 %v1124, %v1126
      %v1478 = vadd.f32 %v1477, %v1317
      %v1479 = vadd.f32 %v1478, %v1319
      %1480 = vadd.xlane.f32.xlu0 %v1479
      %v1481 = vpop.xlane.xlu0 %1480
      %v1482 = vadd.f32 %v1128, %v1130
      %v1483 = vadd.f32 %v1482, %v1321
      %v1484 = vadd.f32 %v1483, %v1323
      %1485 = vadd.xlane.f32.xlu0 %v1484
      %v1486 = vpop.xlane.xlu0 %1485
      %v1487 = vrcp.pop 512.0
      %v1488 = vmul.f32 %v1331, %v1487
      %v1489 = vmul.f32 %v1336, %v1487
      %v1490 = vmul.f32 %v1341, %v1487
      %v1491 = vmul.f32 %v1346, %v1487
      %v1492 = vmul.f32 %v1351, %v1487
      %v1493 = vmul.f32 %v1356, %v1487
      %v1494 = vmul.f32 %v1361, %v1487
      %v1495 = vmul.f32 %v1366, %v1487
      %v1496 = vmul.f32 %v1371, %v1487
      %v1497 = vmul.f32 %v1376, %v1487
      %v1498 = vmul.f32 %v1381, %v1487
      %v1499 = vmul.f32 %v1386, %v1487
      %v1500 = vmul.f32 %v1391, %v1487
      %v1501 = vmul.f32 %v1396, %v1487
      %v1502 = vmul.f32 %v1401, %v1487
      %v1503 = vmul.f32 %v1406, %v1487
      %v1504 = vmul.f32 %v1411, %v1487
      %v1505 = vmul.f32 %v1416, %v1487
      %v1506 = vmul.f32 %v1421, %v1487
      %v1507 = vmul.f32 %v1426, %v1487
      %v1508 = vmul.f32 %v1431, %v1487
      %v1509 = vmul.f32 %v1436, %v1487
      %v1510 = vmul.f32 %v1441, %v1487
      %v1511 = vmul.f32 %v1446, %v1487
      %v1512 = vmul.f32 %v1451, %v1487
      %v1513 = vmul.f32 %v1456, %v1487
      %v1514 = vmul.f32 %v1461, %v1487
      %v1515 = vmul.f32 %v1466, %v1487
      %v1516 = vmul.f32 %v1471, %v1487
      %v1517 = vmul.f32 %v1476, %v1487
      %v1518 = vmul.f32 %v1481, %v1487
      %v1519 = vmul.f32 %v1486, %v1487
      %v1520 = vsub.f32 %v974, %v1488
      %v1521 = vsub.f32 %v976, %v1488
      %v1522 = vsub.f32 %v1167, %v1488
      %v1523 = vsub.f32 %v1169, %v1488
      %v1524 = vsub.f32 %v978, %v1489
      %v1525 = vsub.f32 %v980, %v1489
      %v1526 = vsub.f32 %v1171, %v1489
      %v1527 = vsub.f32 %v1173, %v1489
      %v1528 = vsub.f32 %v984, %v1490
      %v1529 = vsub.f32 %v986, %v1490
      %v1530 = vsub.f32 %v1177, %v1490
      %v1531 = vsub.f32 %v1179, %v1490
      %v1532 = vsub.f32 %v988, %v1491
      %v1533 = vsub.f32 %v990, %v1491
      %v1534 = vsub.f32 %v1181, %v1491
      %v1535 = vsub.f32 %v1183, %v1491
      %v1536 = vsub.f32 %v994, %v1492
      %v1537 = vsub.f32 %v996, %v1492
      %v1538 = vsub.f32 %v1187, %v1492
      %v1539 = vsub.f32 %v1189, %v1492
      %v1540 = vsub.f32 %v998, %v1493
      %v1541 = vsub.f32 %v1000, %v1493
      %v1542 = vsub.f32 %v1191, %v1493
      %v1543 = vsub.f32 %v1193, %v1493
      %v1544 = vsub.f32 %v1004, %v1494
      %v1545 = vsub.f32 %v1006, %v1494
      %v1546 = vsub.f32 %v1197, %v1494
      %v1547 = vsub.f32 %v1199, %v1494
      %v1548 = vsub.f32 %v1008, %v1495
      %v1549 = vsub.f32 %v1010, %v1495
      %v1550 = vsub.f32 %v1201, %v1495
      %v1551 = vsub.f32 %v1203, %v1495
      %v1552 = vsub.f32 %v1014, %v1496
      %v1553 = vsub.f32 %v1016, %v1496
      %v1554 = vsub.f32 %v1207, %v1496
      %v1555 = vsub.f32 %v1209, %v1496
      %v1556 = vsub.f32 %v1018, %v1497
      %v1557 = vsub.f32 %v1020, %v1497
      %v1558 = vsub.f32 %v1211, %v1497
      %v1559 = vsub.f32 %v1213, %v1497
      %v1560 = vsub.f32 %v1024, %v1498
      %v1561 = vsub.f32 %v1026, %v1498
      %v1562 = vsub.f32 %v1217, %v1498
      %v1563 = vsub.f32 %v1219, %v1498
      %v1564 = vsub.f32 %v1028, %v1499
      %v1565 = vsub.f32 %v1030, %v1499
      %v1566 = vsub.f32 %v1221, %v1499
      %v1567 = vsub.f32 %v1223, %v1499
      %v1568 = vsub.f32 %v1034, %v1500
      %v1569 = vsub.f32 %v1036, %v1500
      %v1570 = vsub.f32 %v1227, %v1500
      %v1571 = vsub.f32 %v1229, %v1500
      %v1572 = vsub.f32 %v1038, %v1501
      %v1573 = vsub.f32 %v1040, %v1501
      %v1574 = vsub.f32 %v1231, %v1501
      %v1575 = vsub.f32 %v1233, %v1501
      %v1576 = vsub.f32 %v1044, %v1502
      %v1577 = vsub.f32 %v1046, %v1502
      %v1578 = vsub.f32 %v1237, %v1502
      %v1579 = vsub.f32 %v1239, %v1502
      %v1580 = vsub.f32 %v1048, %v1503
      %v1581 = vsub.f32 %v1050, %v1503
      %v1582 = vsub.f32 %v1241, %v1503
      %v1583 = vsub.f32 %v1243, %v1503
      %v1584 = vsub.f32 %v1054, %v1504
      %v1585 = vsub.f32 %v1056, %v1504
      %v1586 = vsub.f32 %v1247, %v1504
      %v1587 = vsub.f32 %v1249, %v1504
      %v1588 = vsub.f32 %v1058, %v1505
      %v1589 = vsub.f32 %v1060, %v1505
      %v1590 = vsub.f32 %v1251, %v1505
      %v1591 = vsub.f32 %v1253, %v1505
      %v1592 = vsub.f32 %v1064, %v1506
      %v1593 = vsub.f32 %v1066, %v1506
      %v1594 = vsub.f32 %v1257, %v1506
      %v1595 = vsub.f32 %v1259, %v1506
      %v1596 = vsub.f32 %v1068, %v1507
      %v1597 = vsub.f32 %v1070, %v1507
      %v1598 = vsub.f32 %v1261, %v1507
      %v1599 = vsub.f32 %v1263, %v1507
      %v1600 = vsub.f32 %v1074, %v1508
      %v1601 = vsub.f32 %v1076, %v1508
      %v1602 = vsub.f32 %v1267, %v1508
      %v1603 = vsub.f32 %v1269, %v1508
      %v1604 = vsub.f32 %v1078, %v1509
      %v1605 = vsub.f32 %v1080, %v1509
      %v1606 = vsub.f32 %v1271, %v1509
      %v1607 = vsub.f32 %v1273, %v1509
      %v1608 = vsub.f32 %v1084, %v1510
      %v1609 = vsub.f32 %v1086, %v1510
      %v1610 = vsub.f32 %v1277, %v1510
      %v1611 = vsub.f32 %v1279, %v1510
      %v1612 = vsub.f32 %v1088, %v1511
      %v1613 = vsub.f32 %v1090, %v1511
      %v1614 = vsub.f32 %v1281, %v1511
      %v1615 = vsub.f32 %v1283, %v1511
      %v1616 = vsub.f32 %v1094, %v1512
      %v1617 = vsub.f32 %v1096, %v1512
      %v1618 = vsub.f32 %v1287, %v1512
      %v1619 = vsub.f32 %v1289, %v1512
      %v1620 = vsub.f32 %v1098, %v1513
      %v1621 = vsub.f32 %v1100, %v1513
      %v1622 = vsub.f32 %v1291, %v1513
      %v1623 = vsub.f32 %v1293, %v1513
      %v1624 = vsub.f32 %v1104, %v1514
      %v1625 = vsub.f32 %v1106, %v1514
      %v1626 = vsub.f32 %v1297, %v1514
      %v1627 = vsub.f32 %v1299, %v1514
      %v1628 = vsub.f32 %v1108, %v1515
      %v1629 = vsub.f32 %v1110, %v1515
      %v1630 = vsub.f32 %v1301, %v1515
      %v1631 = vsub.f32 %v1303, %v1515
      %v1632 = vsub.f32 %v1114, %v1516
      %v1633 = vsub.f32 %v1116, %v1516
      %v1634 = vsub.f32 %v1307, %v1516
      %v1635 = vsub.f32 %v1309, %v1516
      %v1636 = vsub.f32 %v1118, %v1517
      %v1637 = vsub.f32 %v1120, %v1517
      %v1638 = vsub.f32 %v1311, %v1517
      %v1639 = vsub.f32 %v1313, %v1517
      %v1640 = vsub.f32 %v1124, %v1518
      %v1641 = vsub.f32 %v1126, %v1518
      %v1642 = vsub.f32 %v1317, %v1518
      %v1643 = vsub.f32 %v1319, %v1518
      %v1644 = vsub.f32 %v1128, %v1519
      %v1645 = vsub.f32 %v1130, %v1519
      %v1646 = vsub.f32 %v1321, %v1519
      %v1647 = vsub.f32 %v1323, %v1519
      %v1648 = vmul.f32 %v1520, %v1520
      %v1649 = vmul.f32 %v1521, %v1521
      %v1650 = vmul.f32 %v1522, %v1522
      %v1651 = vmul.f32 %v1523, %v1523
      %v1652 = vmul.f32 %v1524, %v1524
      %v1653 = vmul.f32 %v1525, %v1525
      %v1654 = vmul.f32 %v1526, %v1526
      %v1655 = vmul.f32 %v1527, %v1527
      %v1656 = vmul.f32 %v1528, %v1528
      %v1657 = vmul.f32 %v1529, %v1529
      %v1658 = vmul.f32 %v1530, %v1530
      %v1659 = vmul.f32 %v1531, %v1531
      %v1660 = vmul.f32 %v1532, %v1532
      %v1661 = vmul.f32 %v1533, %v1533
      %v1662 = vmul.f32 %v1534, %v1534
      %v1663 = vmul.f32 %v1535, %v1535
      %v1664 = vmul.f32 %v1536, %v1536
      %v1665 = vmul.f32 %v1537, %v1537
      %v1666 = vmul.f32 %v1538, %v1538
      %v1667 = vmul.f32 %v1539, %v1539
      %v1668 = vmul.f32 %v1540, %v1540
      %v1669 = vmul.f32 %v1541, %v1541
      %v1670 = vmul.f32 %v1542, %v1542
      %v1671 = vmul.f32 %v1543, %v1543
      %v1672 = vmul.f32 %v1544, %v1544
      %v1673 = vmul.f32 %v1545, %v1545
      %v1674 = vmul.f32 %v1546, %v1546
      %v1675 = vmul.f32 %v1547, %v1547
      %v1676 = vmul.f32 %v1548, %v1548
      %v1677 = vmul.f32 %v1549, %v1549
      %v1678 = vmul.f32 %v1550, %v1550
      %v1679 = vmul.f32 %v1551, %v1551
      %v1680 = vmul.f32 %v1552, %v1552
      %v1681 = vmul.f32 %v1553, %v1553
      %v1682 = vmul.f32 %v1554, %v1554
      %v1683 = vmul.f32 %v1555, %v1555
      %v1684 = vmul.f32 %v1556, %v1556
      %v1685 = vmul.f32 %v1557, %v1557
      %v1686 = vmul.f32 %v1558, %v1558
      %v1687 = vmul.f32 %v1559, %v1559
      %v1688 = vmul.f32 %v1560, %v1560
      %v1689 = vmul.f32 %v1561, %v1561
      %v1690 = vmul.f32 %v1562, %v1562
      %v1691 = vmul.f32 %v1563, %v1563
      %v1692 = vmul.f32 %v1564, %v1564
      %v1693 = vmul.f32 %v1565, %v1565
      %v1694 = vmul.f32 %v1566, %v1566
      %v1695 = vmul.f32 %v1567, %v1567
      %v1696 = vmul.f32 %v1568, %v1568
      %v1697 = vmul.f32 %v1569, %v1569
      %v1698 = vmul.f32 %v1570, %v1570
      %v1699 = vmul.f32 %v1571, %v1571
      %v1700 = vmul.f32 %v1572, %v1572
      %v1701 = vmul.f32 %v1573, %v1573
      %v1702 = vmul.f32 %v1574, %v1574
      %v1703 = vmul.f32 %v1575, %v1575
      %v1704 = vmul.f32 %v1576, %v1576
      %v1705 = vmul.f32 %v1577, %v1577
      %v1706 = vmul.f32 %v1578, %v1578
      %v1707 = vmul.f32 %v1579, %v1579
      %v1708 = vmul.f32 %v1580, %v1580
      %v1709 = vmul.f32 %v1581, %v1581
      %v1710 = vmul.f32 %v1582, %v1582
      %v1711 = vmul.f32 %v1583, %v1583
      %v1712 = vmul.f32 %v1584, %v1584
      %v1713 = vmul.f32 %v1585, %v1585
      %v1714 = vmul.f32 %v1586, %v1586
      %v1715 = vmul.f32 %v1587, %v1587
      %v1716 = vmul.f32 %v1588, %v1588
      %v1717 = vmul.f32 %v1589, %v1589
      %v1718 = vmul.f32 %v1590, %v1590
      %v1719 = vmul.f32 %v1591, %v1591
      %v1720 = vmul.f32 %v1592, %v1592
      %v1721 = vmul.f32 %v1593, %v1593
      %v1722 = vmul.f32 %v1594, %v1594
      %v1723 = vmul.f32 %v1595, %v1595
      %v1724 = vmul.f32 %v1596, %v1596
      %v1725 = vmul.f32 %v1597, %v1597
      %v1726 = vmul.f32 %v1598, %v1598
      %v1727 = vmul.f32 %v1599, %v1599
      %v1728 = vmul.f32 %v1600, %v1600
      %v1729 = vmul.f32 %v1601, %v1601
      %v1730 = vmul.f32 %v1602, %v1602
      %v1731 = vmul.f32 %v1603, %v1603
      %v1732 = vmul.f32 %v1604, %v1604
      %v1733 = vmul.f32 %v1605, %v1605
      %v1734 = vmul.f32 %v1606, %v1606
      %v1735 = vmul.f32 %v1607, %v1607
      %v1736 = vmul.f32 %v1608, %v1608
      %v1737 = vmul.f32 %v1609, %v1609
      %v1738 = vmul.f32 %v1610, %v1610
      %v1739 = vmul.f32 %v1611, %v1611
      %v1740 = vmul.f32 %v1612, %v1612
      %v1741 = vmul.f32 %v1613, %v1613
      %v1742 = vmul.f32 %v1614, %v1614
      %v1743 = vmul.f32 %v1615, %v1615
      %v1744 = vmul.f32 %v1616, %v1616
      %v1745 = vmul.f32 %v1617, %v1617
      %v1746 = vmul.f32 %v1618, %v1618
      %v1747 = vmul.f32 %v1619, %v1619
      %v1748 = vmul.f32 %v1620, %v1620
      %v1749 = vmul.f32 %v1621, %v1621
      %v1750 = vmul.f32 %v1622, %v1622
      %v1751 = vmul.f32 %v1623, %v1623
      %v1752 = vmul.f32 %v1624, %v1624
      %v1753 = vmul.f32 %v1625, %v1625
      %v1754 = vmul.f32 %v1626, %v1626
      %v1755 = vmul.f32 %v1627, %v1627
      %v1756 = vmul.f32 %v1628, %v1628
      %v1757 = vmul.f32 %v1629, %v1629
      %v1758 = vmul.f32 %v1630, %v1630
      %v1759 = vmul.f32 %v1631, %v1631
      %v1760 = vmul.f32 %v1632, %v1632
      %v1761 = vmul.f32 %v1633, %v1633
      %v1762 = vmul.f32 %v1634, %v1634
      %v1763 = vmul.f32 %v1635, %v1635
      %v1764 = vmul.f32 %v1636, %v1636
      %v1765 = vmul.f32 %v1637, %v1637
      %v1766 = vmul.f32 %v1638, %v1638
      %v1767 = vmul.f32 %v1639, %v1639
      %v1768 = vmul.f32 %v1640, %v1640
      %v1769 = vmul.f32 %v1641, %v1641
      %v1770 = vmul.f32 %v1642, %v1642
      %v1771 = vmul.f32 %v1643, %v1643
      %v1772 = vmul.f32 %v1644, %v1644
      %v1773 = vmul.f32 %v1645, %v1645
      %v1774 = vmul.f32 %v1646, %v1646
      %v1775 = vmul.f32 %v1647, %v1647
      %v1776 = vadd.f32 %v1648, %v1649
      %v1777 = vadd.f32 %v1776, %v1650
      %v1778 = vadd.f32 %v1777, %v1651
      %1779 = vadd.xlane.f32.xlu0 %v1778
      %v1780 = vpop.xlane.xlu0 %1779
      %v1781 = vadd.f32 %v1652, %v1653
      %v1782 = vadd.f32 %v1781, %v1654
      %v1783 = vadd.f32 %v1782, %v1655
      %1784 = vadd.xlane.f32.xlu0 %v1783
      %v1785 = vpop.xlane.xlu0 %1784
      %v1786 = vadd.f32 %v1656, %v1657
      %v1787 = vadd.f32 %v1786, %v1658
      %v1788 = vadd.f32 %v1787, %v1659
      %1789 = vadd.xlane.f32.xlu0 %v1788
      %v1790 = vpop.xlane.xlu0 %1789
      %v1791 = vadd.f32 %v1660, %v1661
      %v1792 = vadd.f32 %v1791, %v1662
      %v1793 = vadd.f32 %v1792, %v1663
      %1794 = vadd.xlane.f32.xlu0 %v1793
      %v1795 = vpop.xlane.xlu0 %1794
      %v1796 = vadd.f32 %v1664, %v1665
      %v1797 = vadd.f32 %v1796, %v1666
      %v1798 = vadd.f32 %v1797, %v1667
      %1799 = vadd.xlane.f32.xlu0 %v1798
      %v1800 = vpop.xlane.xlu0 %1799
      %v1801 = vadd.f32 %v1668, %v1669
      %v1802 = vadd.f32 %v1801, %v1670
      %v1803 = vadd.f32 %v1802, %v1671
      %1804 = vadd.xlane.f32.xlu0 %v1803
      %v1805 = vpop.xlane.xlu0 %1804
      %v1806 = vadd.f32 %v1672, %v1673
      %v1807 = vadd.f32 %v1806, %v1674
      %v1808 = vadd.f32 %v1807, %v1675
      %1809 = vadd.xlane.f32.xlu0 %v1808
      %v1810 = vpop.xlane.xlu0 %1809
      %v1811 = vadd.f32 %v1676, %v1677
      %v1812 = vadd.f32 %v1811, %v1678
      %v1813 = vadd.f32 %v1812, %v1679
      %1814 = vadd.xlane.f32.xlu0 %v1813
      %v1815 = vpop.xlane.xlu0 %1814
      %v1816 = vadd.f32 %v1680, %v1681
      %v1817 = vadd.f32 %v1816, %v1682
      %v1818 = vadd.f32 %v1817, %v1683
      %1819 = vadd.xlane.f32.xlu0 %v1818
      %v1820 = vpop.xlane.xlu0 %1819
      %v1821 = vadd.f32 %v1684, %v1685
      %v1822 = vadd.f32 %v1821, %v1686
      %v1823 = vadd.f32 %v1822, %v1687
      %1824 = vadd.xlane.f32.xlu0 %v1823
      %v1825 = vpop.xlane.xlu0 %1824
      %v1826 = vadd.f32 %v1688, %v1689
      %v1827 = vadd.f32 %v1826, %v1690
      %v1828 = vadd.f32 %v1827, %v1691
      %1829 = vadd.xlane.f32.xlu0 %v1828
      %v1830 = vpop.xlane.xlu0 %1829
      %v1831 = vadd.f32 %v1692, %v1693
      %v1832 = vadd.f32 %v1831, %v1694
      %v1833 = vadd.f32 %v1832, %v1695
      %1834 = vadd.xlane.f32.xlu0 %v1833
      %v1835 = vpop.xlane.xlu0 %1834
      %v1836 = vadd.f32 %v1696, %v1697
      %v1837 = vadd.f32 %v1836, %v1698
      %v1838 = vadd.f32 %v1837, %v1699
      %1839 = vadd.xlane.f32.xlu0 %v1838
      %v1840 = vpop.xlane.xlu0 %1839
      %v1841 = vadd.f32 %v1700, %v1701
      %v1842 = vadd.f32 %v1841, %v1702
      %v1843 = vadd.f32 %v1842, %v1703
      %1844 = vadd.xlane.f32.xlu0 %v1843
      %v1845 = vpop.xlane.xlu0 %1844
      %v1846 = vadd.f32 %v1704, %v1705
      %v1847 = vadd.f32 %v1846, %v1706
      %v1848 = vadd.f32 %v1847, %v1707
      %1849 = vadd.xlane.f32.xlu0 %v1848
      %v1850 = vpop.xlane.xlu0 %1849
      %v1851 = vadd.f32 %v1708, %v1709
      %v1852 = vadd.f32 %v1851, %v1710
      %v1853 = vadd.f32 %v1852, %v1711
      %1854 = vadd.xlane.f32.xlu0 %v1853
      %v1855 = vpop.xlane.xlu0 %1854
      %v1856 = vadd.f32 %v1712, %v1713
      %v1857 = vadd.f32 %v1856, %v1714
      %v1858 = vadd.f32 %v1857, %v1715
      %1859 = vadd.xlane.f32.xlu0 %v1858
      %v1860 = vpop.xlane.xlu0 %1859
      %v1861 = vadd.f32 %v1716, %v1717
      %v1862 = vadd.f32 %v1861, %v1718
      %v1863 = vadd.f32 %v1862, %v1719
      %1864 = vadd.xlane.f32.xlu0 %v1863
      %v1865 = vpop.xlane.xlu0 %1864
      %v1866 = vadd.f32 %v1720, %v1721
      %v1867 = vadd.f32 %v1866, %v1722
      %v1868 = vadd.f32 %v1867, %v1723
      %1869 = vadd.xlane.f32.xlu0 %v1868
      %v1870 = vpop.xlane.xlu0 %1869
      %v1871 = vadd.f32 %v1724, %v1725
      %v1872 = vadd.f32 %v1871, %v1726
      %v1873 = vadd.f32 %v1872, %v1727
      %1874 = vadd.xlane.f32.xlu0 %v1873
      %v1875 = vpop.xlane.xlu0 %1874
      %v1876 = vadd.f32 %v1728, %v1729
      %v1877 = vadd.f32 %v1876, %v1730
      %v1878 = vadd.f32 %v1877, %v1731
      %1879 = vadd.xlane.f32.xlu0 %v1878
      %v1880 = vpop.xlane.xlu0 %1879
      %v1881 = vadd.f32 %v1732, %v1733
      %v1882 = vadd.f32 %v1881, %v1734
      %v1883 = vadd.f32 %v1882, %v1735
      %1884 = vadd.xlane.f32.xlu0 %v1883
      %v1885 = vpop.xlane.xlu0 %1884
      %v1886 = vadd.f32 %v1736, %v1737
      %v1887 = vadd.f32 %v1886, %v1738
      %v1888 = vadd.f32 %v1887, %v1739
      %1889 = vadd.xlane.f32.xlu0 %v1888
      %v1890 = vpop.xlane.xlu0 %1889
      %v1891 = vadd.f32 %v1740, %v1741
      %v1892 = vadd.f32 %v1891, %v1742
      %v1893 = vadd.f32 %v1892, %v1743
      %1894 = vadd.xlane.f32.xlu0 %v1893
      %v1895 = vpop.xlane.xlu0 %1894
      %v1896 = vadd.f32 %v1744, %v1745
      %v1897 = vadd.f32 %v1896, %v1746
      %v1898 = vadd.f32 %v1897, %v1747
      %1899 = vadd.xlane.f32.xlu0 %v1898
      %v1900 = vpop.xlane.xlu0 %1899
      %v1901 = vadd.f32 %v1748, %v1749
      %v1902 = vadd.f32 %v1901, %v1750
      %v1903 = vadd.f32 %v1902, %v1751
      %1904 = vadd.xlane.f32.xlu0 %v1903
      %v1905 = vpop.xlane.xlu0 %1904
      %v1906 = vadd.f32 %v1752, %v1753
      %v1907 = vadd.f32 %v1906, %v1754
      %v1908 = vadd.f32 %v1907, %v1755
      %1909 = vadd.xlane.f32.xlu0 %v1908
      %v1910 = vpop.xlane.xlu0 %1909
      %v1911 = vadd.f32 %v1756, %v1757
      %v1912 = vadd.f32 %v1911, %v1758
      %v1913 = vadd.f32 %v1912, %v1759
      %1914 = vadd.xlane.f32.xlu0 %v1913
      %v1915 = vpop.xlane.xlu0 %1914
      %v1916 = vadd.f32 %v1760, %v1761
      %v1917 = vadd.f32 %v1916, %v1762
      %v1918 = vadd.f32 %v1917, %v1763
      %1919 = vadd.xlane.f32.xlu0 %v1918
      %v1920 = vpop.xlane.xlu0 %1919
      %v1921 = vadd.f32 %v1764, %v1765
      %v1922 = vadd.f32 %v1921, %v1766
      %v1923 = vadd.f32 %v1922, %v1767
      %1924 = vadd.xlane.f32.xlu0 %v1923
      %v1925 = vpop.xlane.xlu0 %1924
      %v1926 = vadd.f32 %v1768, %v1769
      %v1927 = vadd.f32 %v1926, %v1770
      %v1928 = vadd.f32 %v1927, %v1771
      %1929 = vadd.xlane.f32.xlu0 %v1928
      %v1930 = vpop.xlane.xlu0 %1929
      %v1931 = vadd.f32 %v1772, %v1773
      %v1932 = vadd.f32 %v1931, %v1774
      %v1933 = vadd.f32 %v1932, %v1775
      %1934 = vadd.xlane.f32.xlu0 %v1933
      %v1935 = vpop.xlane.xlu0 %1934
      %v1936 = vmul.f32 %v1780, %v1487
      %v1937 = vmul.f32 %v1785, %v1487
      %v1938 = vmul.f32 %v1790, %v1487
      %v1939 = vmul.f32 %v1795, %v1487
      %v1940 = vmul.f32 %v1800, %v1487
      %v1941 = vmul.f32 %v1805, %v1487
      %v1942 = vmul.f32 %v1810, %v1487
      %v1943 = vmul.f32 %v1815, %v1487
      %v1944 = vmul.f32 %v1820, %v1487
      %v1945 = vmul.f32 %v1825, %v1487
      %v1946 = vmul.f32 %v1830, %v1487
      %v1947 = vmul.f32 %v1835, %v1487
      %v1948 = vmul.f32 %v1840, %v1487
      %v1949 = vmul.f32 %v1845, %v1487
      %v1950 = vmul.f32 %v1850, %v1487
      %v1951 = vmul.f32 %v1855, %v1487
      %v1952 = vmul.f32 %v1860, %v1487
      %v1953 = vmul.f32 %v1865, %v1487
      %v1954 = vmul.f32 %v1870, %v1487
      %v1955 = vmul.f32 %v1875, %v1487
      %v1956 = vmul.f32 %v1880, %v1487
      %v1957 = vmul.f32 %v1885, %v1487
      %v1958 = vmul.f32 %v1890, %v1487
      %v1959 = vmul.f32 %v1895, %v1487
      %v1960 = vmul.f32 %v1900, %v1487
      %v1961 = vmul.f32 %v1905, %v1487
      %v1962 = vmul.f32 %v1910, %v1487
      %v1963 = vmul.f32 %v1915, %v1487
      %v1964 = vmul.f32 %v1920, %v1487
      %v1965 = vmul.f32 %v1925, %v1487
      %v1966 = vmul.f32 %v1930, %v1487
      %v1967 = vmul.f32 %v1935, %v1487
      %v1968 = vadd.f32 %v1936, 1e-05
      %v1969 = vadd.f32 %v1937, 1e-05
      %v1970 = vadd.f32 %v1938, 1e-05
      %v1971 = vadd.f32 %v1939, 1e-05
      %v1972 = vadd.f32 %v1940, 1e-05
      %v1973 = vadd.f32 %v1941, 1e-05
      %v1974 = vadd.f32 %v1942, 1e-05
      %v1975 = vadd.f32 %v1943, 1e-05
      %v1976 = vadd.f32 %v1944, 1e-05
      %v1977 = vadd.f32 %v1945, 1e-05
      %v1978 = vadd.f32 %v1946, 1e-05
      %v1979 = vadd.f32 %v1947, 1e-05
      %v1980 = vadd.f32 %v1948, 1e-05
      %v1981 = vadd.f32 %v1949, 1e-05
      %v1982 = vadd.f32 %v1950, 1e-05
      %v1983 = vadd.f32 %v1951, 1e-05
      %v1984 = vadd.f32 %v1952, 1e-05
      %v1985 = vadd.f32 %v1953, 1e-05
      %v1986 = vadd.f32 %v1954, 1e-05
      %v1987 = vadd.f32 %v1955, 1e-05
      %v1988 = vadd.f32 %v1956, 1e-05
      %v1989 = vadd.f32 %v1957, 1e-05
      %v1990 = vadd.f32 %v1958, 1e-05
      %v1991 = vadd.f32 %v1959, 1e-05
      %v1992 = vadd.f32 %v1960, 1e-05
      %v1993 = vadd.f32 %v1961, 1e-05
      %v1994 = vadd.f32 %v1962, 1e-05
      %v1995 = vadd.f32 %v1963, 1e-05
      %v1996 = vadd.f32 %v1964, 1e-05
      %v1997 = vadd.f32 %v1965, 1e-05
      %v1998 = vadd.f32 %v1966, 1e-05
      %v1999 = vadd.f32 %v1967, 1e-05
      %v2000 = vrsqrt.pop %v1968
      %v2001 = vrsqrt.pop %v1969
      %v2002 = vrsqrt.pop %v1970
      %v2003 = vrsqrt.pop %v1971
      %v2004 = vrsqrt.pop %v1972
      %v2005 = vrsqrt.pop %v1973
      %v2006 = vrsqrt.pop %v1974
      %v2007 = vrsqrt.pop %v1975
      %v2008 = vrsqrt.pop %v1976
      %v2009 = vrsqrt.pop %v1977
      %v2010 = vrsqrt.pop %v1978
      %v2011 = vrsqrt.pop %v1979
      %v2012 = vrsqrt.pop %v1980
      %v2013 = vrsqrt.pop %v1981
      %v2014 = vrsqrt.pop %v1982
      %v2015 = vrsqrt.pop %v1983
      %v2016 = vrsqrt.pop %v1984
      %v2017 = vrsqrt.pop %v1985
      %v2018 = vrsqrt.pop %v1986
      %v2019 = vrsqrt.pop %v1987
      %v2020 = vrsqrt.pop %v1988
      %v2021 = vrsqrt.pop %v1989
      %v2022 = vrsqrt.pop %v1990
      %v2023 = vrsqrt.pop %v1991
      %v2024 = vrsqrt.pop %v1992
      %v2025 = vrsqrt.pop %v1993
      %v2026 = vrsqrt.pop %v1994
      %v2027 = vrsqrt.pop %v1995
      %v2028 = vrsqrt.pop %v1996
      %v2029 = vrsqrt.pop %v1997
      %v2030 = vrsqrt.pop %v1998
      %v2031 = vrsqrt.pop %v1999
      %v2032 = vmul.f32 %v1520, %v2000
      %v2033 = vmul.f32 %v1521, %v2000
      %v2034 = vmul.f32 %v1522, %v2000
      %v2035 = vmul.f32 %v1523, %v2000
      %v2036 = vmul.f32 %v1524, %v2001
      %v2037 = vmul.f32 %v1525, %v2001
      %v2038 = vmul.f32 %v1526, %v2001
      %v2039 = vmul.f32 %v1527, %v2001
      %v2040 = vmul.f32 %v1528, %v2002
      %v2041 = vmul.f32 %v1529, %v2002
      %v2042 = vmul.f32 %v1530, %v2002
      %v2043 = vmul.f32 %v1531, %v2002
      %v2044 = vmul.f32 %v1532, %v2003
      %v2045 = vmul.f32 %v1533, %v2003
      %v2046 = vmul.f32 %v1534, %v2003
      %v2047 = vmul.f32 %v1535, %v2003
      %v2048 = vmul.f32 %v1536, %v2004
      %v2049 = vmul.f32 %v1537, %v2004
      %v2050 = vmul.f32 %v1538, %v2004
      %v2051 = vmul.f32 %v1539, %v2004
      %v2052 = vmul.f32 %v1540, %v2005
      %v2053 = vmul.f32 %v1541, %v2005
      %v2054 = vmul.f32 %v1542, %v2005
      %v2055 = vmul.f32 %v1543, %v2005
      %v2056 = vmul.f32 %v1544, %v2006
      %v2057 = vmul.f32 %v1545, %v2006
      %v2058 = vmul.f32 %v1546, %v2006
      %v2059 = vmul.f32 %v1547, %v2006
      %v2060 = vmul.f32 %v1548, %v2007
      %v2061 = vmul.f32 %v1549, %v2007
      %v2062 = vmul.f32 %v1550, %v2007
      %v2063 = vmul.f32 %v1551, %v2007
      %v2064 = vmul.f32 %v1552, %v2008
      %v2065 = vmul.f32 %v1553, %v2008
      %v2066 = vmul.f32 %v1554, %v2008
      %v2067 = vmul.f32 %v1555, %v2008
      %v2068 = vmul.f32 %v1556, %v2009
      %v2069 = vmul.f32 %v1557, %v2009
      %v2070 = vmul.f32 %v1558, %v2009
      %v2071 = vmul.f32 %v1559, %v2009
      %v2072 = vmul.f32 %v1560, %v2010
      %v2073 = vmul.f32 %v1561, %v2010
      %v2074 = vmul.f32 %v1562, %v2010
      %v2075 = vmul.f32 %v1563, %v2010
      %v2076 = vmul.f32 %v1564, %v2011
      %v2077 = vmul.f32 %v1565, %v2011
      %v2078 = vmul.f32 %v1566, %v2011
      %v2079 = vmul.f32 %v1567, %v2011
      %v2080 = vmul.f32 %v1568, %v2012
      %v2081 = vmul.f32 %v1569, %v2012
      %v2082 = vmul.f32 %v1570, %v2012
      %v2083 = vmul.f32 %v1571, %v2012
      %v2084 = vmul.f32 %v1572, %v2013
      %v2085 = vmul.f32 %v1573, %v2013
      %v2086 = vmul.f32 %v1574, %v2013
      %v2087 = vmul.f32 %v1575, %v2013
      %v2088 = vmul.f32 %v1576, %v2014
      %v2089 = vmul.f32 %v1577, %v2014
      %v2090 = vmul.f32 %v1578, %v2014
      %v2091 = vmul.f32 %v1579, %v2014
      %v2092 = vmul.f32 %v1580, %v2015
      %v2093 = vmul.f32 %v1581, %v2015
      %v2094 = vmul.f32 %v1582, %v2015
      %v2095 = vmul.f32 %v1583, %v2015
      %v2096 = vmul.f32 %v1584, %v2016
      %v2097 = vmul.f32 %v1585, %v2016
      %v2098 = vmul.f32 %v1586, %v2016
      %v2099 = vmul.f32 %v1587, %v2016
      %v2100 = vmul.f32 %v1588, %v2017
      %v2101 = vmul.f32 %v1589, %v2017
      %v2102 = vmul.f32 %v1590, %v2017
      %v2103 = vmul.f32 %v1591, %v2017
      %v2104 = vmul.f32 %v1592, %v2018
      %v2105 = vmul.f32 %v1593, %v2018
      %v2106 = vmul.f32 %v1594, %v2018
      %v2107 = vmul.f32 %v1595, %v2018
      %v2108 = vmul.f32 %v1596, %v2019
      %v2109 = vmul.f32 %v1597, %v2019
      %v2110 = vmul.f32 %v1598, %v2019
      %v2111 = vmul.f32 %v1599, %v2019
      %v2112 = vmul.f32 %v1600, %v2020
      %v2113 = vmul.f32 %v1601, %v2020
      %v2114 = vmul.f32 %v1602, %v2020
      %v2115 = vmul.f32 %v1603, %v2020
      %v2116 = vmul.f32 %v1604, %v2021
      %v2117 = vmul.f32 %v1605, %v2021
      %v2118 = vmul.f32 %v1606, %v2021
      %v2119 = vmul.f32 %v1607, %v2021
      %v2120 = vmul.f32 %v1608, %v2022
      %v2121 = vmul.f32 %v1609, %v2022
      %v2122 = vmul.f32 %v1610, %v2022
      %v2123 = vmul.f32 %v1611, %v2022
      %v2124 = vmul.f32 %v1612, %v2023
      %v2125 = vmul.f32 %v1613, %v2023
      %v2126 = vmul.f32 %v1614, %v2023
      %v2127 = vmul.f32 %v1615, %v2023
      %v2128 = vmul.f32 %v1616, %v2024
      %v2129 = vmul.f32 %v1617, %v2024
      %v2130 = vmul.f32 %v1618, %v2024
      %v2131 = vmul.f32 %v1619, %v2024
      %v2132 = vmul.f32 %v1620, %v2025
      %v2133 = vmul.f32 %v1621, %v2025
      %v2134 = vmul.f32 %v1622, %v2025
      %v2135 = vmul.f32 %v1623, %v2025
      %v2136 = vmul.f32 %v1624, %v2026
      %v2137 = vmul.f32 %v1625, %v2026
      %v2138 = vmul.f32 %v1626, %v2026
      %v2139 = vmul.f32 %v1627, %v2026
      %v2140 = vmul.f32 %v1628, %v2027
      %v2141 = vmul.f32 %v1629, %v2027
      %v2142 = vmul.f32 %v1630, %v2027
      %v2143 = vmul.f32 %v1631, %v2027
      %v2144 = vmul.f32 %v1632, %v2028
      %v2145 = vmul.f32 %v1633, %v2028
      %v2146 = vmul.f32 %v1634, %v2028
      %v2147 = vmul.f32 %v1635, %v2028
      %v2148 = vmul.f32 %v1636, %v2029
      %v2149 = vmul.f32 %v1637, %v2029
      %v2150 = vmul.f32 %v1638, %v2029
      %v2151 = vmul.f32 %v1639, %v2029
      %v2152 = vmul.f32 %v1640, %v2030
      %v2153 = vmul.f32 %v1641, %v2030
      %v2154 = vmul.f32 %v1642, %v2030
      %v2155 = vmul.f32 %v1643, %v2030
      %v2156 = vmul.f32 %v1644, %v2031
      %v2157 = vmul.f32 %v1645, %v2031
      %v2158 = vmul.f32 %v1646, %v2031
      %v2159 = vmul.f32 %v1647, %v2031
      %v2161 = vlaneseq
      %v2162 = vshrl.u32 %v2161, 7
      %v2163 = vsub.s32 0, %v2162
      %v2164 = vrot.slane %v1325, %v2163
      %v2165 = vlaneseq
      %v2166 = vshrl.u32 %v2165, 7
      %v2167 = vsub.s32 1, %v2166
      %v2168 = vrot.slane %v1325, %v2167
      %v2169 = vlaneseq
      %v2170 = vshrl.u32 %v2169, 7
      %v2171 = vsub.s32 2, %v2170
      %v2172 = vrot.slane %v1325, %v2171
      %v2173 = vlaneseq
      %v2174 = vshrl.u32 %v2173, 7
      %v2175 = vsub.s32 3, %v2174
      %v2176 = vrot.slane %v1325, %v2175
      %v2181 = vmul.f32 %v2032, %v2164
      %v2182 = vmul.f32 %v2033, %v2168
      %v2183 = vmul.f32 %v2034, %v2172
      %v2184 = vmul.f32 %v2035, %v2176
      %v2185 = vmul.f32 %v2036, %v2164
      %v2186 = vmul.f32 %v2037, %v2168
      %v2187 = vmul.f32 %v2038, %v2172
      %v2188 = vmul.f32 %v2039, %v2176
      %v2189 = vmul.f32 %v2040, %v2164
      %v2190 = vmul.f32 %v2041, %v2168
      %v2191 = vmul.f32 %v2042, %v2172
      %v2192 = vmul.f32 %v2043, %v2176
      %v2193 = vmul.f32 %v2044, %v2164
      %v2194 = vmul.f32 %v2045, %v2168
      %v2195 = vmul.f32 %v2046, %v2172
      %v2196 = vmul.f32 %v2047, %v2176
      %v2197 = vmul.f32 %v2048, %v2164
      %v2198 = vmul.f32 %v2049, %v2168
      %v2199 = vmul.f32 %v2050, %v2172
      %v2200 = vmul.f32 %v2051, %v2176
      %v2201 = vmul.f32 %v2052, %v2164
      %v2202 = vmul.f32 %v2053, %v2168
      %v2203 = vmul.f32 %v2054, %v2172
      %v2204 = vmul.f32 %v2055, %v2176
      %v2205 = vmul.f32 %v2056, %v2164
      %v2206 = vmul.f32 %v2057, %v2168
      %v2207 = vmul.f32 %v2058, %v2172
      %v2208 = vmul.f32 %v2059, %v2176
      %v2209 = vmul.f32 %v2060, %v2164
      %v2210 = vmul.f32 %v2061, %v2168
      %v2211 = vmul.f32 %v2062, %v2172
      %v2212 = vmul.f32 %v2063, %v2176
      %v2213 = vmul.f32 %v2064, %v2164
      %v2214 = vmul.f32 %v2065, %v2168
      %v2215 = vmul.f32 %v2066, %v2172
      %v2216 = vmul.f32 %v2067, %v2176
      %v2217 = vmul.f32 %v2068, %v2164
      %v2218 = vmul.f32 %v2069, %v2168
      %v2219 = vmul.f32 %v2070, %v2172
      %v2220 = vmul.f32 %v2071, %v2176
      %v2221 = vmul.f32 %v2072, %v2164
      %v2222 = vmul.f32 %v2073, %v2168
      %v2223 = vmul.f32 %v2074, %v2172
      %v2224 = vmul.f32 %v2075, %v2176
      %v2225 = vmul.f32 %v2076, %v2164
      %v2226 = vmul.f32 %v2077, %v2168
      %v2227 = vmul.f32 %v2078, %v2172
      %v2228 = vmul.f32 %v2079, %v2176
      %v2229 = vmul.f32 %v2080, %v2164
      %v2230 = vmul.f32 %v2081, %v2168
      %v2231 = vmul.f32 %v2082, %v2172
      %v2232 = vmul.f32 %v2083, %v2176
      %v2233 = vmul.f32 %v2084, %v2164
      %v2234 = vmul.f32 %v2085, %v2168
      %v2235 = vmul.f32 %v2086, %v2172
      %v2236 = vmul.f32 %v2087, %v2176
      %v2237 = vmul.f32 %v2088, %v2164
      %v2238 = vmul.f32 %v2089, %v2168
      %v2239 = vmul.f32 %v2090, %v2172
      %v2240 = vmul.f32 %v2091, %v2176
      %v2241 = vmul.f32 %v2092, %v2164
      %v2242 = vmul.f32 %v2093, %v2168
      %v2243 = vmul.f32 %v2094, %v2172
      %v2244 = vmul.f32 %v2095, %v2176
      %v2245 = vmul.f32 %v2096, %v2164
      %v2246 = vmul.f32 %v2097, %v2168
      %v2247 = vmul.f32 %v2098, %v2172
      %v2248 = vmul.f32 %v2099, %v2176
      %v2249 = vmul.f32 %v2100, %v2164
      %v2250 = vmul.f32 %v2101, %v2168
      %v2251 = vmul.f32 %v2102, %v2172
      %v2252 = vmul.f32 %v2103, %v2176
      %v2253 = vmul.f32 %v2104, %v2164
      %v2254 = vmul.f32 %v2105, %v2168
      %v2255 = vmul.f32 %v2106, %v2172
      %v2256 = vmul.f32 %v2107, %v2176
      %v2257 = vmul.f32 %v2108, %v2164
      %v2258 = vmul.f32 %v2109, %v2168
      %v2259 = vmul.f32 %v2110, %v2172
      %v2260 = vmul.f32 %v2111, %v2176
      %v2261 = vmul.f32 %v2112, %v2164
      %v2262 = vmul.f32 %v2113, %v2168
      %v2263 = vmul.f32 %v2114, %v2172
      %v2264 = vmul.f32 %v2115, %v2176
      %v2265 = vmul.f32 %v2116, %v2164
      %v2266 = vmul.f32 %v2117, %v2168
      %v2267 = vmul.f32 %v2118, %v2172
      %v2268 = vmul.f32 %v2119, %v2176
      %v2269 = vmul.f32 %v2120, %v2164
      %v2270 = vmul.f32 %v2121, %v2168
      %v2271 = vmul.f32 %v2122, %v2172
      %v2272 = vmul.f32 %v2123, %v2176
      %v2273 = vmul.f32 %v2124, %v2164
      %v2274 = vmul.f32 %v2125, %v2168
      %v2275 = vmul.f32 %v2126, %v2172
      %v2276 = vmul.f32 %v2127, %v2176
      %v2277 = vmul.f32 %v2128, %v2164
      %v2278 = vmul.f32 %v2129, %v2168
      %v2279 = vmul.f32 %v2130, %v2172
      %v2280 = vmul.f32 %v2131, %v2176
      %v2281 = vmul.f32 %v2132, %v2164
      %v2282 = vmul.f32 %v2133, %v2168
      %v2283 = vmul.f32 %v2134, %v2172
      %v2284 = vmul.f32 %v2135, %v2176
      %v2285 = vmul.f32 %v2136, %v2164
      %v2286 = vmul.f32 %v2137, %v2168
      %v2287 = vmul.f32 %v2138, %v2172
      %v2288 = vmul.f32 %v2139, %v2176
      %v2289 = vmul.f32 %v2140, %v2164
      %v2290 = vmul.f32 %v2141, %v2168
      %v2291 = vmul.f32 %v2142, %v2172
      %v2292 = vmul.f32 %v2143, %v2176
      %v2293 = vmul.f32 %v2144, %v2164
      %v2294 = vmul.f32 %v2145, %v2168
      %v2295 = vmul.f32 %v2146, %v2172
      %v2296 = vmul.f32 %v2147, %v2176
      %v2297 = vmul.f32 %v2148, %v2164
      %v2298 = vmul.f32 %v2149, %v2168
      %v2299 = vmul.f32 %v2150, %v2172
      %v2300 = vmul.f32 %v2151, %v2176
      %v2301 = vmul.f32 %v2152, %v2164
      %v2302 = vmul.f32 %v2153, %v2168
      %v2303 = vmul.f32 %v2154, %v2172
      %v2304 = vmul.f32 %v2155, %v2176
      %v2305 = vmul.f32 %v2156, %v2164
      %v2306 = vmul.f32 %v2157, %v2168
      %v2307 = vmul.f32 %v2158, %v2172
      %v2308 = vmul.f32 %v2159, %v2176
      %v2310 = vlaneseq
      %v2311 = vshrl.u32 %v2310, 7
      %v2312 = vsub.s32 0, %v2311
      %v2313 = vrot.slane %v1326, %v2312
      %v2314 = vlaneseq
      %v2315 = vshrl.u32 %v2314, 7
      %v2316 = vsub.s32 1, %v2315
      %v2317 = vrot.slane %v1326, %v2316
      %v2318 = vlaneseq
      %v2319 = vshrl.u32 %v2318, 7
      %v2320 = vsub.s32 2, %v2319
      %v2321 = vrot.slane %v1326, %v2320
      %v2322 = vlaneseq
      %v2323 = vshrl.u32 %v2322, 7
      %v2324 = vsub.s32 3, %v2323
      %v2325 = vrot.slane %v1326, %v2324
      %v2330 = vadd.f32 %v2181, %v2313
      %v2331 = vadd.f32 %v2182, %v2317
      %v2332 = vadd.f32 %v2183, %v2321
      %v2333 = vadd.f32 %v2184, %v2325
      %v2334 = vadd.f32 %v2185, %v2313
      %v2335 = vadd.f32 %v2186, %v2317
      %v2336 = vadd.f32 %v2187, %v2321
      %v2337 = vadd.f32 %v2188, %v2325
      %v2338 = vadd.f32 %v2189, %v2313
      %v2339 = vadd.f32 %v2190, %v2317
      %v2340 = vadd.f32 %v2191, %v2321
      %v2341 = vadd.f32 %v2192, %v2325
      %v2342 = vadd.f32 %v2193, %v2313
      %v2343 = vadd.f32 %v2194, %v2317
      %v2344 = vadd.f32 %v2195, %v2321
      %v2345 = vadd.f32 %v2196, %v2325
      %v2346 = vadd.f32 %v2197, %v2313
      %v2347 = vadd.f32 %v2198, %v2317
      %v2348 = vadd.f32 %v2199, %v2321
      %v2349 = vadd.f32 %v2200, %v2325
      %v2350 = vadd.f32 %v2201, %v2313
      %v2351 = vadd.f32 %v2202, %v2317
      %v2352 = vadd.f32 %v2203, %v2321
      %v2353 = vadd.f32 %v2204, %v2325
      %v2354 = vadd.f32 %v2205, %v2313
      %v2355 = vadd.f32 %v2206, %v2317
      %v2356 = vadd.f32 %v2207, %v2321
      %v2357 = vadd.f32 %v2208, %v2325
      %v2358 = vadd.f32 %v2209, %v2313
      %v2359 = vadd.f32 %v2210, %v2317
      %v2360 = vadd.f32 %v2211, %v2321
      %v2361 = vadd.f32 %v2212, %v2325
      %v2362 = vadd.f32 %v2213, %v2313
      %v2363 = vadd.f32 %v2214, %v2317
      %v2364 = vadd.f32 %v2215, %v2321
      %v2365 = vadd.f32 %v2216, %v2325
      %v2366 = vadd.f32 %v2217, %v2313
      %v2367 = vadd.f32 %v2218, %v2317
      %v2368 = vadd.f32 %v2219, %v2321
      %v2369 = vadd.f32 %v2220, %v2325
      %v2370 = vadd.f32 %v2221, %v2313
      %v2371 = vadd.f32 %v2222, %v2317
      %v2372 = vadd.f32 %v2223, %v2321
      %v2373 = vadd.f32 %v2224, %v2325
      %v2374 = vadd.f32 %v2225, %v2313
      %v2375 = vadd.f32 %v2226, %v2317
      %v2376 = vadd.f32 %v2227, %v2321
      %v2377 = vadd.f32 %v2228, %v2325
      %v2378 = vadd.f32 %v2229, %v2313
      %v2379 = vadd.f32 %v2230, %v2317
      %v2380 = vadd.f32 %v2231, %v2321
      %v2381 = vadd.f32 %v2232, %v2325
      %v2382 = vadd.f32 %v2233, %v2313
      %v2383 = vadd.f32 %v2234, %v2317
      %v2384 = vadd.f32 %v2235, %v2321
      %v2385 = vadd.f32 %v2236, %v2325
      %v2386 = vadd.f32 %v2237, %v2313
      %v2387 = vadd.f32 %v2238, %v2317
      %v2388 = vadd.f32 %v2239, %v2321
      %v2389 = vadd.f32 %v2240, %v2325
      %v2390 = vadd.f32 %v2241, %v2313
      %v2391 = vadd.f32 %v2242, %v2317
      %v2392 = vadd.f32 %v2243, %v2321
      %v2393 = vadd.f32 %v2244, %v2325
      %v2394 = vadd.f32 %v2245, %v2313
      %v2395 = vadd.f32 %v2246, %v2317
      %v2396 = vadd.f32 %v2247, %v2321
      %v2397 = vadd.f32 %v2248, %v2325
      %v2398 = vadd.f32 %v2249, %v2313
      %v2399 = vadd.f32 %v2250, %v2317
      %v2400 = vadd.f32 %v2251, %v2321
      %v2401 = vadd.f32 %v2252, %v2325
      %v2402 = vadd.f32 %v2253, %v2313
      %v2403 = vadd.f32 %v2254, %v2317
      %v2404 = vadd.f32 %v2255, %v2321
      %v2405 = vadd.f32 %v2256, %v2325
      %v2406 = vadd.f32 %v2257, %v2313
      %v2407 = vadd.f32 %v2258, %v2317
      %v2408 = vadd.f32 %v2259, %v2321
      %v2409 = vadd.f32 %v2260, %v2325
      %v2410 = vadd.f32 %v2261, %v2313
      %v2411 = vadd.f32 %v2262, %v2317
      %v2412 = vadd.f32 %v2263, %v2321
      %v2413 = vadd.f32 %v2264, %v2325
      %v2414 = vadd.f32 %v2265, %v2313
      %v2415 = vadd.f32 %v2266, %v2317
      %v2416 = vadd.f32 %v2267, %v2321
      %v2417 = vadd.f32 %v2268, %v2325
      %v2418 = vadd.f32 %v2269, %v2313
      %v2419 = vadd.f32 %v2270, %v2317
      %v2420 = vadd.f32 %v2271, %v2321
      %v2421 = vadd.f32 %v2272, %v2325
      %v2422 = vadd.f32 %v2273, %v2313
      %v2423 = vadd.f32 %v2274, %v2317
      %v2424 = vadd.f32 %v2275, %v2321
      %v2425 = vadd.f32 %v2276, %v2325
      %v2426 = vadd.f32 %v2277, %v2313
      %v2427 = vadd.f32 %v2278, %v2317
      %v2428 = vadd.f32 %v2279, %v2321
      %v2429 = vadd.f32 %v2280, %v2325
      %v2430 = vadd.f32 %v2281, %v2313
      %v2431 = vadd.f32 %v2282, %v2317
      %v2432 = vadd.f32 %v2283, %v2321
      %v2433 = vadd.f32 %v2284, %v2325
      %v2434 = vadd.f32 %v2285, %v2313
      %v2435 = vadd.f32 %v2286, %v2317
      %v2436 = vadd.f32 %v2287, %v2321
      %v2437 = vadd.f32 %v2288, %v2325
      %v2438 = vadd.f32 %v2289, %v2313
      %v2439 = vadd.f32 %v2290, %v2317
      %v2440 = vadd.f32 %v2291, %v2321
      %v2441 = vadd.f32 %v2292, %v2325
      %v2442 = vadd.f32 %v2293, %v2313
      %v2443 = vadd.f32 %v2294, %v2317
      %v2444 = vadd.f32 %v2295, %v2321
      %v2445 = vadd.f32 %v2296, %v2325
      %v2446 = vadd.f32 %v2297, %v2313
      %v2447 = vadd.f32 %v2298, %v2317
      %v2448 = vadd.f32 %v2299, %v2321
      %v2449 = vadd.f32 %v2300, %v2325
      %v2450 = vadd.f32 %v2301, %v2313
      %v2451 = vadd.f32 %v2302, %v2317
      %v2452 = vadd.f32 %v2303, %v2321
      %v2453 = vadd.f32 %v2304, %v2325
      %v2454 = vadd.f32 %v2305, %v2313
      %v2455 = vadd.f32 %v2306, %v2317
      %v2456 = vadd.f32 %v2307, %v2321
      %v2457 = vadd.f32 %v2308, %v2325
      %v2458 = vxor.u32 %v2330, 2147483648
      %v2459 = vxor.u32 %v2331, 2147483648
      %v2460 = vxor.u32 %v2332, 2147483648
      %v2461 = vxor.u32 %v2333, 2147483648
      %v2462 = vxor.u32 %v2334, 2147483648
      %v2463 = vxor.u32 %v2335, 2147483648
      %v2464 = vxor.u32 %v2336, 2147483648
      %v2465 = vxor.u32 %v2337, 2147483648
      %v2466 = vxor.u32 %v2338, 2147483648
      %v2467 = vxor.u32 %v2339, 2147483648
      %v2468 = vxor.u32 %v2340, 2147483648
      %v2469 = vxor.u32 %v2341, 2147483648
      %v2470 = vxor.u32 %v2342, 2147483648
      %v2471 = vxor.u32 %v2343, 2147483648
      %v2472 = vxor.u32 %v2344, 2147483648
      %v2473 = vxor.u32 %v2345, 2147483648
      %v2474 = vxor.u32 %v2346, 2147483648
      %v2475 = vxor.u32 %v2347, 2147483648
      %v2476 = vxor.u32 %v2348, 2147483648
      %v2477 = vxor.u32 %v2349, 2147483648
      %v2478 = vxor.u32 %v2350, 2147483648
      %v2479 = vxor.u32 %v2351, 2147483648
      %v2480 = vxor.u32 %v2352, 2147483648
      %v2481 = vxor.u32 %v2353, 2147483648
      %v2482 = vxor.u32 %v2354, 2147483648
      %v2483 = vxor.u32 %v2355, 2147483648
      %v2484 = vxor.u32 %v2356, 2147483648
      %v2485 = vxor.u32 %v2357, 2147483648
      %v2486 = vxor.u32 %v2358, 2147483648
      %v2487 = vxor.u32 %v2359, 2147483648
      %v2488 = vxor.u32 %v2360, 2147483648
      %v2489 = vxor.u32 %v2361, 2147483648
      %v2490 = vxor.u32 %v2362, 2147483648
      %v2491 = vxor.u32 %v2363, 2147483648
      %v2492 = vxor.u32 %v2364, 2147483648
      %v2493 = vxor.u32 %v2365, 2147483648
      %v2494 = vxor.u32 %v2366, 2147483648
      %v2495 = vxor.u32 %v2367, 2147483648
      %v2496 = vxor.u32 %v2368, 2147483648
      %v2497 = vxor.u32 %v2369, 2147483648
      %v2498 = vxor.u32 %v2370, 2147483648
      %v2499 = vxor.u32 %v2371, 2147483648
      %v2500 = vxor.u32 %v2372, 2147483648
      %v2501 = vxor.u32 %v2373, 2147483648
      %v2502 = vxor.u32 %v2374, 2147483648
      %v2503 = vxor.u32 %v2375, 2147483648
      %v2504 = vxor.u32 %v2376, 2147483648
      %v2505 = vxor.u32 %v2377, 2147483648
      %v2506 = vxor.u32 %v2378, 2147483648
      %v2507 = vxor.u32 %v2379, 2147483648
      %v2508 = vxor.u32 %v2380, 2147483648
      %v2509 = vxor.u32 %v2381, 2147483648
      %v2510 = vxor.u32 %v2382, 2147483648
      %v2511 = vxor.u32 %v2383, 2147483648
      %v2512 = vxor.u32 %v2384, 2147483648
      %v2513 = vxor.u32 %v2385, 2147483648
      %v2514 = vxor.u32 %v2386, 2147483648
      %v2515 = vxor.u32 %v2387, 2147483648
      %v2516 = vxor.u32 %v2388, 2147483648
      %v2517 = vxor.u32 %v2389, 2147483648
      %v2518 = vxor.u32 %v2390, 2147483648
      %v2519 = vxor.u32 %v2391, 2147483648
      %v2520 = vxor.u32 %v2392, 2147483648
      %v2521 = vxor.u32 %v2393, 2147483648
      %v2522 = vxor.u32 %v2394, 2147483648
      %v2523 = vxor.u32 %v2395, 2147483648
      %v2524 = vxor.u32 %v2396, 2147483648
      %v2525 = vxor.u32 %v2397, 2147483648
      %v2526 = vxor.u32 %v2398, 2147483648
      %v2527 = vxor.u32 %v2399, 2147483648
      %v2528 = vxor.u32 %v2400, 2147483648
      %v2529 = vxor.u32 %v2401, 2147483648
      %v2530 = vxor.u32 %v2402, 2147483648
      %v2531 = vxor.u32 %v2403, 2147483648
      %v2532 = vxor.u32 %v2404, 2147483648
      %v2533 = vxor.u32 %v2405, 2147483648
      %v2534 = vxor.u32 %v2406, 2147483648
      %v2535 = vxor.u32 %v2407, 2147483648
      %v2536 = vxor.u32 %v2408, 2147483648
      %v2537 = vxor.u32 %v2409, 2147483648
      %v2538 = vxor.u32 %v2410, 2147483648
      %v2539 = vxor.u32 %v2411, 2147483648
      %v2540 = vxor.u32 %v2412, 2147483648
      %v2541 = vxor.u32 %v2413, 2147483648
      %v2542 = vxor.u32 %v2414, 2147483648
      %v2543 = vxor.u32 %v2415, 2147483648
      %v2544 = vxor.u32 %v2416, 2147483648
      %v2545 = vxor.u32 %v2417, 2147483648
      %v2546 = vxor.u32 %v2418, 2147483648
      %v2547 = vxor.u32 %v2419, 2147483648
      %v2548 = vxor.u32 %v2420, 2147483648
      %v2549 = vxor.u32 %v2421, 2147483648
      %v2550 = vxor.u32 %v2422, 2147483648
      %v2551 = vxor.u32 %v2423, 2147483648
      %v2552 = vxor.u32 %v2424, 2147483648
      %v2553 = vxor.u32 %v2425, 2147483648
      %v2554 = vxor.u32 %v2426, 2147483648
      %v2555 = vxor.u32 %v2427, 2147483648
      %v2556 = vxor.u32 %v2428, 2147483648
      %v2557 = vxor.u32 %v2429, 2147483648
      %v2558 = vxor.u32 %v2430, 2147483648
      %v2559 = vxor.u32 %v2431, 2147483648
      %v2560 = vxor.u32 %v2432, 2147483648
      %v2561 = vxor.u32 %v2433, 2147483648
      %v2562 = vxor.u32 %v2434, 2147483648
      %v2563 = vxor.u32 %v2435, 2147483648
      %v2564 = vxor.u32 %v2436, 2147483648
      %v2565 = vxor.u32 %v2437, 2147483648
      %v2566 = vxor.u32 %v2438, 2147483648
      %v2567 = vxor.u32 %v2439, 2147483648
      %v2568 = vxor.u32 %v2440, 2147483648
      %v2569 = vxor.u32 %v2441, 2147483648
      %v2570 = vxor.u32 %v2442, 2147483648
      %v2571 = vxor.u32 %v2443, 2147483648
      %v2572 = vxor.u32 %v2444, 2147483648
      %v2573 = vxor.u32 %v2445, 2147483648
      %v2574 = vxor.u32 %v2446, 2147483648
      %v2575 = vxor.u32 %v2447, 2147483648
      %v2576 = vxor.u32 %v2448, 2147483648
      %v2577 = vxor.u32 %v2449, 2147483648
      %v2578 = vxor.u32 %v2450, 2147483648
      %v2579 = vxor.u32 %v2451, 2147483648
      %v2580 = vxor.u32 %v2452, 2147483648
      %v2581 = vxor.u32 %v2453, 2147483648
      %v2582 = vxor.u32 %v2454, 2147483648
      %v2583 = vxor.u32 %v2455, 2147483648
      %v2584 = vxor.u32 %v2456, 2147483648
      %v2585 = vxor.u32 %v2457, 2147483648
      %v2586 = vmul.f32 %v2458, 1.442695
      %v2587 = vpow.pop %v2586
      %v2588 = vmul.f32 %v2459, 1.442695
      %v2589 = vpow.pop %v2588
      %v2590 = vmul.f32 %v2460, 1.442695
      %v2591 = vpow.pop %v2590
      %v2592 = vmul.f32 %v2461, 1.442695
      %v2593 = vpow.pop %v2592
      %v2594 = vmul.f32 %v2462, 1.442695
      %v2595 = vpow.pop %v2594
      %v2596 = vmul.f32 %v2463, 1.442695
      %v2597 = vpow.pop %v2596
      %v2598 = vmul.f32 %v2464, 1.442695
      %v2599 = vpow.pop %v2598
      %v2600 = vmul.f32 %v2465, 1.442695
      %v2601 = vpow.pop %v2600
      %v2602 = vmul.f32 %v2466, 1.442695
      %v2603 = vpow.pop %v2602
      %v2604 = vmul.f32 %v2467, 1.442695
      %v2605 = vpow.pop %v2604
      %v2606 = vmul.f32 %v2468, 1.442695
      %v2607 = vpow.pop %v2606
      %v2608 = vmul.f32 %v2469, 1.442695
      %v2609 = vpow.pop %v2608
      %v2610 = vmul.f32 %v2470, 1.442695
      %v2611 = vpow.pop %v2610
      %v2612 = vmul.f32 %v2471, 1.442695
      %v2613 = vpow.pop %v2612
      %v2614 = vmul.f32 %v2472, 1.442695
      %v2615 = vpow.pop %v2614
      %v2616 = vmul.f32 %v2473, 1.442695
      %v2617 = vpow.pop %v2616
      %v2618 = vmul.f32 %v2474, 1.442695
      %v2619 = vpow.pop %v2618
      %v2620 = vmul.f32 %v2475, 1.442695
      %v2621 = vpow.pop %v2620
      %v2622 = vmul.f32 %v2476, 1.442695
      %v2623 = vpow.pop %v2622
      %v2624 = vmul.f32 %v2477, 1.442695
      %v2625 = vpow.pop %v2624
      %v2626 = vmul.f32 %v2478, 1.442695
      %v2627 = vpow.pop %v2626
      %v2628 = vmul.f32 %v2479, 1.442695
      %v2629 = vpow.pop %v2628
      %v2630 = vmul.f32 %v2480, 1.442695
      %v2631 = vpow.pop %v2630
      %v2632 = vmul.f32 %v2481, 1.442695
      %v2633 = vpow.pop %v2632
      %v2634 = vmul.f32 %v2482, 1.442695
      %v2635 = vpow.pop %v2634
      %v2636 = vmul.f32 %v2483, 1.442695
      %v2637 = vpow.pop %v2636
      %v2638 = vmul.f32 %v2484, 1.442695
      %v2639 = vpow.pop %v2638
      %v2640 = vmul.f32 %v2485, 1.442695
      %v2641 = vpow.pop %v2640
      %v2642 = vmul.f32 %v2486, 1.442695
      %v2643 = vpow.pop %v2642
      %v2644 = vmul.f32 %v2487, 1.442695
      %v2645 = vpow.pop %v2644
      %v2646 = vmul.f32 %v2488, 1.442695
      %v2647 = vpow.pop %v2646
      %v2648 = vmul.f32 %v2489, 1.442695
      %v2649 = vpow.pop %v2648
      %v2650 = vmul.f32 %v2490, 1.442695
      %v2651 = vpow.pop %v2650
      %v2652 = vmul.f32 %v2491, 1.442695
      %v2653 = vpow.pop %v2652
      %v2654 = vmul.f32 %v2492, 1.442695
      %v2655 = vpow.pop %v2654
      %v2656 = vmul.f32 %v2493, 1.442695
      %v2657 = vpow.pop %v2656
      %v2658 = vmul.f32 %v2494, 1.442695
      %v2659 = vpow.pop %v2658
      %v2660 = vmul.f32 %v2495, 1.442695
      %v2661 = vpow.pop %v2660
      %v2662 = vmul.f32 %v2496, 1.442695
      %v2663 = vpow.pop %v2662
      %v2664 = vmul.f32 %v2497, 1.442695
      %v2665 = vpow.pop %v2664
      %v2666 = vmul.f32 %v2498, 1.442695
      %v2667 = vpow.pop %v2666
      %v2668 = vmul.f32 %v2499, 1.442695
      %v2669 = vpow.pop %v2668
      %v2670 = vmul.f32 %v2500, 1.442695
      %v2671 = vpow.pop %v2670
      %v2672 = vmul.f32 %v2501, 1.442695
      %v2673 = vpow.pop %v2672
      %v2674 = vmul.f32 %v2502, 1.442695
      %v2675 = vpow.pop %v2674
      %v2676 = vmul.f32 %v2503, 1.442695
      %v2677 = vpow.pop %v2676
      %v2678 = vmul.f32 %v2504, 1.442695
      %v2679 = vpow.pop %v2678
      %v2680 = vmul.f32 %v2505, 1.442695
      %v2681 = vpow.pop %v2680
      %v2682 = vmul.f32 %v2506, 1.442695
      %v2683 = vpow.pop %v2682
      %v2684 = vmul.f32 %v2507, 1.442695
      %v2685 = vpow.pop %v2684
      %v2686 = vmul.f32 %v2508, 1.442695
      %v2687 = vpow.pop %v2686
      %v2688 = vmul.f32 %v2509, 1.442695
      %v2689 = vpow.pop %v2688
      %v2690 = vmul.f32 %v2510, 1.442695
      %v2691 = vpow.pop %v2690
      %v2692 = vmul.f32 %v2511, 1.442695
      %v2693 = vpow.pop %v2692
      %v2694 = vmul.f32 %v2512, 1.442695
      %v2695 = vpow.pop %v2694
      %v2696 = vmul.f32 %v2513, 1.442695
      %v2697 = vpow.pop %v2696
      %v2698 = vmul.f32 %v2514, 1.442695
      %v2699 = vpow.pop %v2698
      %v2700 = vmul.f32 %v2515, 1.442695
      %v2701 = vpow.pop %v2700
      %v2702 = vmul.f32 %v2516, 1.442695
      %v2703 = vpow.pop %v2702
      %v2704 = vmul.f32 %v2517, 1.442695
      %v2705 = vpow.pop %v2704
      %v2706 = vmul.f32 %v2518, 1.442695
      %v2707 = vpow.pop %v2706
      %v2708 = vmul.f32 %v2519, 1.442695
      %v2709 = vpow.pop %v2708
      %v2710 = vmul.f32 %v2520, 1.442695
      %v2711 = vpow.pop %v2710
      %v2712 = vmul.f32 %v2521, 1.442695
      %v2713 = vpow.pop %v2712
      %v2714 = vmul.f32 %v2522, 1.442695
      %v2715 = vpow.pop %v2714
      %v2716 = vmul.f32 %v2523, 1.442695
      %v2717 = vpow.pop %v2716
      %v2718 = vmul.f32 %v2524, 1.442695
      %v2719 = vpow.pop %v2718
      %v2720 = vmul.f32 %v2525, 1.442695
      %v2721 = vpow.pop %v2720
      %v2722 = vmul.f32 %v2526, 1.442695
      %v2723 = vpow.pop %v2722
      %v2724 = vmul.f32 %v2527, 1.442695
      %v2725 = vpow.pop %v2724
      %v2726 = vmul.f32 %v2528, 1.442695
      %v2727 = vpow.pop %v2726
      %v2728 = vmul.f32 %v2529, 1.442695
      %v2729 = vpow.pop %v2728
      %v2730 = vmul.f32 %v2530, 1.442695
      %v2731 = vpow.pop %v2730
      %v2732 = vmul.f32 %v2531, 1.442695
      %v2733 = vpow.pop %v2732
      %v2734 = vmul.f32 %v2532, 1.442695
      %v2735 = vpow.pop %v2734
      %v2736 = vmul.f32 %v2533, 1.442695
      %v2737 = vpow.pop %v2736
      %v2738 = vmul.f32 %v2534, 1.442695
      %v2739 = vpow.pop %v2738
      %v2740 = vmul.f32 %v2535, 1.442695
      %v2741 = vpow.pop %v2740
      %v2742 = vmul.f32 %v2536, 1.442695
      %v2743 = vpow.pop %v2742
      %v2744 = vmul.f32 %v2537, 1.442695
      %v2745 = vpow.pop %v2744
      %v2746 = vmul.f32 %v2538, 1.442695
      %v2747 = vpow.pop %v2746
      %v2748 = vmul.f32 %v2539, 1.442695
      %v2749 = vpow.pop %v2748
      %v2750 = vmul.f32 %v2540, 1.442695
      %v2751 = vpow.pop %v2750
      %v2752 = vmul.f32 %v2541, 1.442695
      %v2753 = vpow.pop %v2752
      %v2754 = vmul.f32 %v2542, 1.442695
      %v2755 = vpow.pop %v2754
      %v2756 = vmul.f32 %v2543, 1.442695
      %v2757 = vpow.pop %v2756
      %v2758 = vmul.f32 %v2544, 1.442695
      %v2759 = vpow.pop %v2758
      %v2760 = vmul.f32 %v2545, 1.442695
      %v2761 = vpow.pop %v2760
      %v2762 = vmul.f32 %v2546, 1.442695
      %v2763 = vpow.pop %v2762
      %v2764 = vmul.f32 %v2547, 1.442695
      %v2765 = vpow.pop %v2764
      %v2766 = vmul.f32 %v2548, 1.442695
      %v2767 = vpow.pop %v2766
      %v2768 = vmul.f32 %v2549, 1.442695
      %v2769 = vpow.pop %v2768
      %v2770 = vmul.f32 %v2550, 1.442695
      %v2771 = vpow.pop %v2770
      %v2772 = vmul.f32 %v2551, 1.442695
      %v2773 = vpow.pop %v2772
      %v2774 = vmul.f32 %v2552, 1.442695
      %v2775 = vpow.pop %v2774
      %v2776 = vmul.f32 %v2553, 1.442695
      %v2777 = vpow.pop %v2776
      %v2778 = vmul.f32 %v2554, 1.442695
      %v2779 = vpow.pop %v2778
      %v2780 = vmul.f32 %v2555, 1.442695
      %v2781 = vpow.pop %v2780
      %v2782 = vmul.f32 %v2556, 1.442695
      %v2783 = vpow.pop %v2782
      %v2784 = vmul.f32 %v2557, 1.442695
      %v2785 = vpow.pop %v2784
      %v2786 = vmul.f32 %v2558, 1.442695
      %v2787 = vpow.pop %v2786
      %v2788 = vmul.f32 %v2559, 1.442695
      %v2789 = vpow.pop %v2788
      %v2790 = vmul.f32 %v2560, 1.442695
      %v2791 = vpow.pop %v2790
      %v2792 = vmul.f32 %v2561, 1.442695
      %v2793 = vpow.pop %v2792
      %v2794 = vmul.f32 %v2562, 1.442695
      %v2795 = vpow.pop %v2794
      %v2796 = vmul.f32 %v2563, 1.442695
      %v2797 = vpow.pop %v2796
      %v2798 = vmul.f32 %v2564, 1.442695
      %v2799 = vpow.pop %v2798
      %v2800 = vmul.f32 %v2565, 1.442695
      %v2801 = vpow.pop %v2800
      %v2802 = vmul.f32 %v2566, 1.442695
      %v2803 = vpow.pop %v2802
      %v2804 = vmul.f32 %v2567, 1.442695
      %v2805 = vpow.pop %v2804
      %v2806 = vmul.f32 %v2568, 1.442695
      %v2807 = vpow.pop %v2806
      %v2808 = vmul.f32 %v2569, 1.442695
      %v2809 = vpow.pop %v2808
      %v2810 = vmul.f32 %v2570, 1.442695
      %v2811 = vpow.pop %v2810
      %v2812 = vmul.f32 %v2571, 1.442695
      %v2813 = vpow.pop %v2812
      %v2814 = vmul.f32 %v2572, 1.442695
      %v2815 = vpow.pop %v2814
      %v2816 = vmul.f32 %v2573, 1.442695
      %v2817 = vpow.pop %v2816
      %v2818 = vmul.f32 %v2574, 1.442695
      %v2819 = vpow.pop %v2818
      %v2820 = vmul.f32 %v2575, 1.442695
      %v2821 = vpow.pop %v2820
      %v2822 = vmul.f32 %v2576, 1.442695
      %v2823 = vpow.pop %v2822
      %v2824 = vmul.f32 %v2577, 1.442695
      %v2825 = vpow.pop %v2824
      %v2826 = vmul.f32 %v2578, 1.442695
      %v2827 = vpow.pop %v2826
      %v2828 = vmul.f32 %v2579, 1.442695
      %v2829 = vpow.pop %v2828
      %v2830 = vmul.f32 %v2580, 1.442695
      %v2831 = vpow.pop %v2830
      %v2832 = vmul.f32 %v2581, 1.442695
      %v2833 = vpow.pop %v2832
      %v2834 = vmul.f32 %v2582, 1.442695
      %v2835 = vpow.pop %v2834
      %v2836 = vmul.f32 %v2583, 1.442695
      %v2837 = vpow.pop %v2836
      %v2838 = vmul.f32 %v2584, 1.442695
      %v2839 = vpow.pop %v2838
      %v2840 = vmul.f32 %v2585, 1.442695
      %v2841 = vpow.pop %v2840
      %v2842 = vadd.f32 %v2587, 1.0
      %v2843 = vadd.f32 %v2589, 1.0
      %v2844 = vadd.f32 %v2591, 1.0
      %v2845 = vadd.f32 %v2593, 1.0
      %v2846 = vadd.f32 %v2595, 1.0
      %v2847 = vadd.f32 %v2597, 1.0
      %v2848 = vadd.f32 %v2599, 1.0
      %v2849 = vadd.f32 %v2601, 1.0
      %v2850 = vadd.f32 %v2603, 1.0
      %v2851 = vadd.f32 %v2605, 1.0
      %v2852 = vadd.f32 %v2607, 1.0
      %v2853 = vadd.f32 %v2609, 1.0
      %v2854 = vadd.f32 %v2611, 1.0
      %v2855 = vadd.f32 %v2613, 1.0
      %v2856 = vadd.f32 %v2615, 1.0
      %v2857 = vadd.f32 %v2617, 1.0
      %v2858 = vadd.f32 %v2619, 1.0
      %v2859 = vadd.f32 %v2621, 1.0
      %v2860 = vadd.f32 %v2623, 1.0
      %v2861 = vadd.f32 %v2625, 1.0
      %v2862 = vadd.f32 %v2627, 1.0
      %v2863 = vadd.f32 %v2629, 1.0
      %v2864 = vadd.f32 %v2631, 1.0
      %v2865 = vadd.f32 %v2633, 1.0
      %v2866 = vadd.f32 %v2635, 1.0
      %v2867 = vadd.f32 %v2637, 1.0
      %v2868 = vadd.f32 %v2639, 1.0
      %v2869 = vadd.f32 %v2641, 1.0
      %v2870 = vadd.f32 %v2643, 1.0
      %v2871 = vadd.f32 %v2645, 1.0
      %v2872 = vadd.f32 %v2647, 1.0
      %v2873 = vadd.f32 %v2649, 1.0
      %v2874 = vadd.f32 %v2651, 1.0
      %v2875 = vadd.f32 %v2653, 1.0
      %v2876 = vadd.f32 %v2655, 1.0
      %v2877 = vadd.f32 %v2657, 1.0
      %v2878 = vadd.f32 %v2659, 1.0
      %v2879 = vadd.f32 %v2661, 1.0
      %v2880 = vadd.f32 %v2663, 1.0
      %v2881 = vadd.f32 %v2665, 1.0
      %v2882 = vadd.f32 %v2667, 1.0
      %v2883 = vadd.f32 %v2669, 1.0
      %v2884 = vadd.f32 %v2671, 1.0
      %v2885 = vadd.f32 %v2673, 1.0
      %v2886 = vadd.f32 %v2675, 1.0
      %v2887 = vadd.f32 %v2677, 1.0
      %v2888 = vadd.f32 %v2679, 1.0
      %v2889 = vadd.f32 %v2681, 1.0
      %v2890 = vadd.f32 %v2683, 1.0
      %v2891 = vadd.f32 %v2685, 1.0
      %v2892 = vadd.f32 %v2687, 1.0
      %v2893 = vadd.f32 %v2689, 1.0
      %v2894 = vadd.f32 %v2691, 1.0
      %v2895 = vadd.f32 %v2693, 1.0
      %v2896 = vadd.f32 %v2695, 1.0
      %v2897 = vadd.f32 %v2697, 1.0
      %v2898 = vadd.f32 %v2699, 1.0
      %v2899 = vadd.f32 %v2701, 1.0
      %v2900 = vadd.f32 %v2703, 1.0
      %v2901 = vadd.f32 %v2705, 1.0
      %v2902 = vadd.f32 %v2707, 1.0
      %v2903 = vadd.f32 %v2709, 1.0
      %v2904 = vadd.f32 %v2711, 1.0
      %v2905 = vadd.f32 %v2713, 1.0
      %v2906 = vadd.f32 %v2715, 1.0
      %v2907 = vadd.f32 %v2717, 1.0
      %v2908 = vadd.f32 %v2719, 1.0
      %v2909 = vadd.f32 %v2721, 1.0
      %v2910 = vadd.f32 %v2723, 1.0
      %v2911 = vadd.f32 %v2725, 1.0
      %v2912 = vadd.f32 %v2727, 1.0
      %v2913 = vadd.f32 %v2729, 1.0
      %v2914 = vadd.f32 %v2731, 1.0
      %v2915 = vadd.f32 %v2733, 1.0
      %v2916 = vadd.f32 %v2735, 1.0
      %v2917 = vadd.f32 %v2737, 1.0
      %v2918 = vadd.f32 %v2739, 1.0
      %v2919 = vadd.f32 %v2741, 1.0
      %v2920 = vadd.f32 %v2743, 1.0
      %v2921 = vadd.f32 %v2745, 1.0
      %v2922 = vadd.f32 %v2747, 1.0
      %v2923 = vadd.f32 %v2749, 1.0
      %v2924 = vadd.f32 %v2751, 1.0
      %v2925 = vadd.f32 %v2753, 1.0
      %v2926 = vadd.f32 %v2755, 1.0
      %v2927 = vadd.f32 %v2757, 1.0
      %v2928 = vadd.f32 %v2759, 1.0
      %v2929 = vadd.f32 %v2761, 1.0
      %v2930 = vadd.f32 %v2763, 1.0
      %v2931 = vadd.f32 %v2765, 1.0
      %v2932 = vadd.f32 %v2767, 1.0
      %v2933 = vadd.f32 %v2769, 1.0
      %v2934 = vadd.f32 %v2771, 1.0
      %v2935 = vadd.f32 %v2773, 1.0
      %v2936 = vadd.f32 %v2775, 1.0
      %v2937 = vadd.f32 %v2777, 1.0
      %v2938 = vadd.f32 %v2779, 1.0
      %v2939 = vadd.f32 %v2781, 1.0
      %v2940 = vadd.f32 %v2783, 1.0
      %v2941 = vadd.f32 %v2785, 1.0
      %v2942 = vadd.f32 %v2787, 1.0
      %v2943 = vadd.f32 %v2789, 1.0
      %v2944 = vadd.f32 %v2791, 1.0
      %v2945 = vadd.f32 %v2793, 1.0
      %v2946 = vadd.f32 %v2795, 1.0
      %v2947 = vadd.f32 %v2797, 1.0
      %v2948 = vadd.f32 %v2799, 1.0
      %v2949 = vadd.f32 %v2801, 1.0
      %v2950 = vadd.f32 %v2803, 1.0
      %v2951 = vadd.f32 %v2805, 1.0
      %v2952 = vadd.f32 %v2807, 1.0
      %v2953 = vadd.f32 %v2809, 1.0
      %v2954 = vadd.f32 %v2811, 1.0
      %v2955 = vadd.f32 %v2813, 1.0
      %v2956 = vadd.f32 %v2815, 1.0
      %v2957 = vadd.f32 %v2817, 1.0
      %v2958 = vadd.f32 %v2819, 1.0
      %v2959 = vadd.f32 %v2821, 1.0
      %v2960 = vadd.f32 %v2823, 1.0
      %v2961 = vadd.f32 %v2825, 1.0
      %v2962 = vadd.f32 %v2827, 1.0
      %v2963 = vadd.f32 %v2829, 1.0
      %v2964 = vadd.f32 %v2831, 1.0
      %v2965 = vadd.f32 %v2833, 1.0
      %v2966 = vadd.f32 %v2835, 1.0
      %v2967 = vadd.f32 %v2837, 1.0
      %v2968 = vadd.f32 %v2839, 1.0
      %v2969 = vadd.f32 %v2841, 1.0
      %v2970 = vrcp.pop %v2842
      %v2971 = vmul.f32 1.0, %v2970
      %v2972 = vrcp.pop %v2843
      %v2973 = vmul.f32 1.0, %v2972
      %v2974 = vrcp.pop %v2844
      %v2975 = vmul.f32 1.0, %v2974
      %v2976 = vrcp.pop %v2845
      %v2977 = vmul.f32 1.0, %v2976
      %v2978 = vrcp.pop %v2846
      %v2979 = vmul.f32 1.0, %v2978
      %v2980 = vrcp.pop %v2847
      %v2981 = vmul.f32 1.0, %v2980
      %v2982 = vrcp.pop %v2848
      %v2983 = vmul.f32 1.0, %v2982
      %v2984 = vrcp.pop %v2849
      %v2985 = vmul.f32 1.0, %v2984
      %v2986 = vrcp.pop %v2850
      %v2987 = vmul.f32 1.0, %v2986
      %v2988 = vrcp.pop %v2851
      %v2989 = vmul.f32 1.0, %v2988
      %v2990 = vrcp.pop %v2852
      %v2991 = vmul.f32 1.0, %v2990
      %v2992 = vrcp.pop %v2853
      %v2993 = vmul.f32 1.0, %v2992
      %v2994 = vrcp.pop %v2854
      %v2995 = vmul.f32 1.0, %v2994
      %v2996 = vrcp.pop %v2855
      %v2997 = vmul.f32 1.0, %v2996
      %v2998 = vrcp.pop %v2856
      %v2999 = vmul.f32 1.0, %v2998
      %v3000 = vrcp.pop %v2857
      %v3001 = vmul.f32 1.0, %v3000
      %v3002 = vrcp.pop %v2858
      %v3003 = vmul.f32 1.0, %v3002
      %v3004 = vrcp.pop %v2859
      %v3005 = vmul.f32 1.0, %v3004
      %v3006 = vrcp.pop %v2860
      %v3007 = vmul.f32 1.0, %v3006
      %v3008 = vrcp.pop %v2861
      %v3009 = vmul.f32 1.0, %v3008
      %v3010 = vrcp.pop %v2862
      %v3011 = vmul.f32 1.0, %v3010
      %v3012 = vrcp.pop %v2863
      %v3013 = vmul.f32 1.0, %v3012
      %v3014 = vrcp.pop %v2864
      %v3015 = vmul.f32 1.0, %v3014
      %v3016 = vrcp.pop %v2865
      %v3017 = vmul.f32 1.0, %v3016
      %v3018 = vrcp.pop %v2866
      %v3019 = vmul.f32 1.0, %v3018
      %v3020 = vrcp.pop %v2867
      %v3021 = vmul.f32 1.0, %v3020
      %v3022 = vrcp.pop %v2868
      %v3023 = vmul.f32 1.0, %v3022
      %v3024 = vrcp.pop %v2869
      %v3025 = vmul.f32 1.0, %v3024
      %v3026 = vrcp.pop %v2870
      %v3027 = vmul.f32 1.0, %v3026
      %v3028 = vrcp.pop %v2871
      %v3029 = vmul.f32 1.0, %v3028
      %v3030 = vrcp.pop %v2872
      %v3031 = vmul.f32 1.0, %v3030
      %v3032 = vrcp.pop %v2873
      %v3033 = vmul.f32 1.0, %v3032
      %v3034 = vrcp.pop %v2874
      %v3035 = vmul.f32 1.0, %v3034
      %v3036 = vrcp.pop %v2875
      %v3037 = vmul.f32 1.0, %v3036
      %v3038 = vrcp.pop %v2876
      %v3039 = vmul.f32 1.0, %v3038
      %v3040 = vrcp.pop %v2877
      %v3041 = vmul.f32 1.0, %v3040
      %v3042 = vrcp.pop %v2878
      %v3043 = vmul.f32 1.0, %v3042
      %v3044 = vrcp.pop %v2879
      %v3045 = vmul.f32 1.0, %v3044
      %v3046 = vrcp.pop %v2880
      %v3047 = vmul.f32 1.0, %v3046
      %v3048 = vrcp.pop %v2881
      %v3049 = vmul.f32 1.0, %v3048
      %v3050 = vrcp.pop %v2882
      %v3051 = vmul.f32 1.0, %v3050
      %v3052 = vrcp.pop %v2883
      %v3053 = vmul.f32 1.0, %v3052
      %v3054 = vrcp.pop %v2884
      %v3055 = vmul.f32 1.0, %v3054
      %v3056 = vrcp.pop %v2885
      %v3057 = vmul.f32 1.0, %v3056
      %v3058 = vrcp.pop %v2886
      %v3059 = vmul.f32 1.0, %v3058
      %v3060 = vrcp.pop %v2887
      %v3061 = vmul.f32 1.0, %v3060
      %v3062 = vrcp.pop %v2888
      %v3063 = vmul.f32 1.0, %v3062
      %v3064 = vrcp.pop %v2889
      %v3065 = vmul.f32 1.0, %v3064
      %v3066 = vrcp.pop %v2890
      %v3067 = vmul.f32 1.0, %v3066
      %v3068 = vrcp.pop %v2891
      %v3069 = vmul.f32 1.0, %v3068
      %v3070 = vrcp.pop %v2892
      %v3071 = vmul.f32 1.0, %v3070
      %v3072 = vrcp.pop %v2893
      %v3073 = vmul.f32 1.0, %v3072
      %v3074 = vrcp.pop %v2894
      %v3075 = vmul.f32 1.0, %v3074
      %v3076 = vrcp.pop %v2895
      %v3077 = vmul.f32 1.0, %v3076
      %v3078 = vrcp.pop %v2896
      %v3079 = vmul.f32 1.0, %v3078
      %v3080 = vrcp.pop %v2897
      %v3081 = vmul.f32 1.0, %v3080
      %v3082 = vrcp.pop %v2898
      %v3083 = vmul.f32 1.0, %v3082
      %v3084 = vrcp.pop %v2899
      %v3085 = vmul.f32 1.0, %v3084
      %v3086 = vrcp.pop %v2900
      %v3087 = vmul.f32 1.0, %v3086
      %v3088 = vrcp.pop %v2901
      %v3089 = vmul.f32 1.0, %v3088
      %v3090 = vrcp.pop %v2902
      %v3091 = vmul.f32 1.0, %v3090
      %v3092 = vrcp.pop %v2903
      %v3093 = vmul.f32 1.0, %v3092
      %v3094 = vrcp.pop %v2904
      %v3095 = vmul.f32 1.0, %v3094
      %v3096 = vrcp.pop %v2905
      %v3097 = vmul.f32 1.0, %v3096
      %v3098 = vrcp.pop %v2906
      %v3099 = vmul.f32 1.0, %v3098
      %v3100 = vrcp.pop %v2907
      %v3101 = vmul.f32 1.0, %v3100
      %v3102 = vrcp.pop %v2908
      %v3103 = vmul.f32 1.0, %v3102
      %v3104 = vrcp.pop %v2909
      %v3105 = vmul.f32 1.0, %v3104
      %v3106 = vrcp.pop %v2910
      %v3107 = vmul.f32 1.0, %v3106
      %v3108 = vrcp.pop %v2911
      %v3109 = vmul.f32 1.0, %v3108
      %v3110 = vrcp.pop %v2912
      %v3111 = vmul.f32 1.0, %v3110
      %v3112 = vrcp.pop %v2913
      %v3113 = vmul.f32 1.0, %v3112
      %v3114 = vrcp.pop %v2914
      %v3115 = vmul.f32 1.0, %v3114
      %v3116 = vrcp.pop %v2915
      %v3117 = vmul.f32 1.0, %v3116
      %v3118 = vrcp.pop %v2916
      %v3119 = vmul.f32 1.0, %v3118
      %v3120 = vrcp.pop %v2917
      %v3121 = vmul.f32 1.0, %v3120
      %v3122 = vrcp.pop %v2918
      %v3123 = vmul.f32 1.0, %v3122
      %v3124 = vrcp.pop %v2919
      %v3125 = vmul.f32 1.0, %v3124
      %v3126 = vrcp.pop %v2920
      %v3127 = vmul.f32 1.0, %v3126
      %v3128 = vrcp.pop %v2921
      %v3129 = vmul.f32 1.0, %v3128
      %v3130 = vrcp.pop %v2922
      %v3131 = vmul.f32 1.0, %v3130
      %v3132 = vrcp.pop %v2923
      %v3133 = vmul.f32 1.0, %v3132
      %v3134 = vrcp.pop %v2924
      %v3135 = vmul.f32 1.0, %v3134
      %v3136 = vrcp.pop %v2925
      %v3137 = vmul.f32 1.0, %v3136
      %v3138 = vrcp.pop %v2926
      %v3139 = vmul.f32 1.0, %v3138
      %v3140 = vrcp.pop %v2927
      %v3141 = vmul.f32 1.0, %v3140
      %v3142 = vrcp.pop %v2928
      %v3143 = vmul.f32 1.0, %v3142
      %v3144 = vrcp.pop %v2929
      %v3145 = vmul.f32 1.0, %v3144
      %v3146 = vrcp.pop %v2930
      %v3147 = vmul.f32 1.0, %v3146
      %v3148 = vrcp.pop %v2931
      %v3149 = vmul.f32 1.0, %v3148
      %v3150 = vrcp.pop %v2932
      %v3151 = vmul.f32 1.0, %v3150
      %v3152 = vrcp.pop %v2933
      %v3153 = vmul.f32 1.0, %v3152
      %v3154 = vrcp.pop %v2934
      %v3155 = vmul.f32 1.0, %v3154
      %v3156 = vrcp.pop %v2935
      %v3157 = vmul.f32 1.0, %v3156
      %v3158 = vrcp.pop %v2936
      %v3159 = vmul.f32 1.0, %v3158
      %v3160 = vrcp.pop %v2937
      %v3161 = vmul.f32 1.0, %v3160
      %v3162 = vrcp.pop %v2938
      %v3163 = vmul.f32 1.0, %v3162
      %v3164 = vrcp.pop %v2939
      %v3165 = vmul.f32 1.0, %v3164
      %v3166 = vrcp.pop %v2940
      %v3167 = vmul.f32 1.0, %v3166
      %v3168 = vrcp.pop %v2941
      %v3169 = vmul.f32 1.0, %v3168
      %v3170 = vrcp.pop %v2942
      %v3171 = vmul.f32 1.0, %v3170
      %v3172 = vrcp.pop %v2943
      %v3173 = vmul.f32 1.0, %v3172
      %v3174 = vrcp.pop %v2944
      %v3175 = vmul.f32 1.0, %v3174
      %v3176 = vrcp.pop %v2945
      %v3177 = vmul.f32 1.0, %v3176
      %v3178 = vrcp.pop %v2946
      %v3179 = vmul.f32 1.0, %v3178
      %v3180 = vrcp.pop %v2947
      %v3181 = vmul.f32 1.0, %v3180
      %v3182 = vrcp.pop %v2948
      %v3183 = vmul.f32 1.0, %v3182
      %v3184 = vrcp.pop %v2949
      %v3185 = vmul.f32 1.0, %v3184
      %v3186 = vrcp.pop %v2950
      %v3187 = vmul.f32 1.0, %v3186
      %v3188 = vrcp.pop %v2951
      %v3189 = vmul.f32 1.0, %v3188
      %v3190 = vrcp.pop %v2952
      %v3191 = vmul.f32 1.0, %v3190
      %v3192 = vrcp.pop %v2953
      %v3193 = vmul.f32 1.0, %v3192
      %v3194 = vrcp.pop %v2954
      %v3195 = vmul.f32 1.0, %v3194
      %v3196 = vrcp.pop %v2955
      %v3197 = vmul.f32 1.0, %v3196
      %v3198 = vrcp.pop %v2956
      %v3199 = vmul.f32 1.0, %v3198
      %v3200 = vrcp.pop %v2957
      %v3201 = vmul.f32 1.0, %v3200
      %v3202 = vrcp.pop %v2958
      %v3203 = vmul.f32 1.0, %v3202
      %v3204 = vrcp.pop %v2959
      %v3205 = vmul.f32 1.0, %v3204
      %v3206 = vrcp.pop %v2960
      %v3207 = vmul.f32 1.0, %v3206
      %v3208 = vrcp.pop %v2961
      %v3209 = vmul.f32 1.0, %v3208
      %v3210 = vrcp.pop %v2962
      %v3211 = vmul.f32 1.0, %v3210
      %v3212 = vrcp.pop %v2963
      %v3213 = vmul.f32 1.0, %v3212
      %v3214 = vrcp.pop %v2964
      %v3215 = vmul.f32 1.0, %v3214
      %v3216 = vrcp.pop %v2965
      %v3217 = vmul.f32 1.0, %v3216
      %v3218 = vrcp.pop %v2966
      %v3219 = vmul.f32 1.0, %v3218
      %v3220 = vrcp.pop %v2967
      %v3221 = vmul.f32 1.0, %v3220
      %v3222 = vrcp.pop %v2968
      %v3223 = vmul.f32 1.0, %v3222
      %v3224 = vrcp.pop %v2969
      %v3225 = vmul.f32 1.0, %v3224
      %v3226 = vmul.f32 %v2330, %v2971
      %v3227 = vmul.f32 %v2331, %v2973
      %v3228 = vmul.f32 %v2332, %v2975
      %v3229 = vmul.f32 %v2333, %v2977
      %v3230 = vmul.f32 %v2334, %v2979
      %v3231 = vmul.f32 %v2335, %v2981
      %v3232 = vmul.f32 %v2336, %v2983
      %v3233 = vmul.f32 %v2337, %v2985
      %v3234 = vmul.f32 %v2338, %v2987
      %v3235 = vmul.f32 %v2339, %v2989
      %v3236 = vmul.f32 %v2340, %v2991
      %v3237 = vmul.f32 %v2341, %v2993
      %v3238 = vmul.f32 %v2342, %v2995
      %v3239 = vmul.f32 %v2343, %v2997
      %v3240 = vmul.f32 %v2344, %v2999
      %v3241 = vmul.f32 %v2345, %v3001
      %v3242 = vmul.f32 %v2346, %v3003
      %v3243 = vmul.f32 %v2347, %v3005
      %v3244 = vmul.f32 %v2348, %v3007
      %v3245 = vmul.f32 %v2349, %v3009
      %v3246 = vmul.f32 %v2350, %v3011
      %v3247 = vmul.f32 %v2351, %v3013
      %v3248 = vmul.f32 %v2352, %v3015
      %v3249 = vmul.f32 %v2353, %v3017
      %v3250 = vmul.f32 %v2354, %v3019
      %v3251 = vmul.f32 %v2355, %v3021
      %v3252 = vmul.f32 %v2356, %v3023
      %v3253 = vmul.f32 %v2357, %v3025
      %v3254 = vmul.f32 %v2358, %v3027
      %v3255 = vmul.f32 %v2359, %v3029
      %v3256 = vmul.f32 %v2360, %v3031
      %v3257 = vmul.f32 %v2361, %v3033
      %v3258 = vmul.f32 %v2362, %v3035
      %v3259 = vmul.f32 %v2363, %v3037
      %v3260 = vmul.f32 %v2364, %v3039
      %v3261 = vmul.f32 %v2365, %v3041
      %v3262 = vmul.f32 %v2366, %v3043
      %v3263 = vmul.f32 %v2367, %v3045
      %v3264 = vmul.f32 %v2368, %v3047
      %v3265 = vmul.f32 %v2369, %v3049
      %v3266 = vmul.f32 %v2370, %v3051
      %v3267 = vmul.f32 %v2371, %v3053
      %v3268 = vmul.f32 %v2372, %v3055
      %v3269 = vmul.f32 %v2373, %v3057
      %v3270 = vmul.f32 %v2374, %v3059
      %v3271 = vmul.f32 %v2375, %v3061
      %v3272 = vmul.f32 %v2376, %v3063
      %v3273 = vmul.f32 %v2377, %v3065
      %v3274 = vmul.f32 %v2378, %v3067
      %v3275 = vmul.f32 %v2379, %v3069
      %v3276 = vmul.f32 %v2380, %v3071
      %v3277 = vmul.f32 %v2381, %v3073
      %v3278 = vmul.f32 %v2382, %v3075
      %v3279 = vmul.f32 %v2383, %v3077
      %v3280 = vmul.f32 %v2384, %v3079
      %v3281 = vmul.f32 %v2385, %v3081
      %v3282 = vmul.f32 %v2386, %v3083
      %v3283 = vmul.f32 %v2387, %v3085
      %v3284 = vmul.f32 %v2388, %v3087
      %v3285 = vmul.f32 %v2389, %v3089
      %v3286 = vmul.f32 %v2390, %v3091
      %v3287 = vmul.f32 %v2391, %v3093
      %v3288 = vmul.f32 %v2392, %v3095
      %v3289 = vmul.f32 %v2393, %v3097
      %v3290 = vmul.f32 %v2394, %v3099
      %v3291 = vmul.f32 %v2395, %v3101
      %v3292 = vmul.f32 %v2396, %v3103
      %v3293 = vmul.f32 %v2397, %v3105
      %v3294 = vmul.f32 %v2398, %v3107
      %v3295 = vmul.f32 %v2399, %v3109
      %v3296 = vmul.f32 %v2400, %v3111
      %v3297 = vmul.f32 %v2401, %v3113
      %v3298 = vmul.f32 %v2402, %v3115
      %v3299 = vmul.f32 %v2403, %v3117
      %v3300 = vmul.f32 %v2404, %v3119
      %v3301 = vmul.f32 %v2405, %v3121
      %v3302 = vmul.f32 %v2406, %v3123
      %v3303 = vmul.f32 %v2407, %v3125
      %v3304 = vmul.f32 %v2408, %v3127
      %v3305 = vmul.f32 %v2409, %v3129
      %v3306 = vmul.f32 %v2410, %v3131
      %v3307 = vmul.f32 %v2411, %v3133
      %v3308 = vmul.f32 %v2412, %v3135
      %v3309 = vmul.f32 %v2413, %v3137
      %v3310 = vmul.f32 %v2414, %v3139
      %v3311 = vmul.f32 %v2415, %v3141
      %v3312 = vmul.f32 %v2416, %v3143
      %v3313 = vmul.f32 %v2417, %v3145
      %v3314 = vmul.f32 %v2418, %v3147
      %v3315 = vmul.f32 %v2419, %v3149
      %v3316 = vmul.f32 %v2420, %v3151
      %v3317 = vmul.f32 %v2421, %v3153
      %v3318 = vmul.f32 %v2422, %v3155
      %v3319 = vmul.f32 %v2423, %v3157
      %v3320 = vmul.f32 %v2424, %v3159
      %v3321 = vmul.f32 %v2425, %v3161
      %v3322 = vmul.f32 %v2426, %v3163
      %v3323 = vmul.f32 %v2427, %v3165
      %v3324 = vmul.f32 %v2428, %v3167
      %v3325 = vmul.f32 %v2429, %v3169
      %v3326 = vmul.f32 %v2430, %v3171
      %v3327 = vmul.f32 %v2431, %v3173
      %v3328 = vmul.f32 %v2432, %v3175
      %v3329 = vmul.f32 %v2433, %v3177
      %v3330 = vmul.f32 %v2434, %v3179
      %v3331 = vmul.f32 %v2435, %v3181
      %v3332 = vmul.f32 %v2436, %v3183
      %v3333 = vmul.f32 %v2437, %v3185
      %v3334 = vmul.f32 %v2438, %v3187
      %v3335 = vmul.f32 %v2439, %v3189
      %v3336 = vmul.f32 %v2440, %v3191
      %v3337 = vmul.f32 %v2441, %v3193
      %v3338 = vmul.f32 %v2442, %v3195
      %v3339 = vmul.f32 %v2443, %v3197
      %v3340 = vmul.f32 %v2444, %v3199
      %v3341 = vmul.f32 %v2445, %v3201
      %v3342 = vmul.f32 %v2446, %v3203
      %v3343 = vmul.f32 %v2447, %v3205
      %v3344 = vmul.f32 %v2448, %v3207
      %v3345 = vmul.f32 %v2449, %v3209
      %v3346 = vmul.f32 %v2450, %v3211
      %v3347 = vmul.f32 %v2451, %v3213
      %v3348 = vmul.f32 %v2452, %v3215
      %v3349 = vmul.f32 %v2453, %v3217
      %v3350 = vmul.f32 %v2454, %v3219
      %v3351 = vmul.f32 %v2455, %v3221
      %v3352 = vmul.f32 %v2456, %v3223
      %v3353 = vmul.f32 %v2457, %v3225
      %v3354 = vpack.c.bf16 %v3230, %v3226
      %v3355 = vpack.c.bf16 %v3231, %v3227
      %v3356 = vpack.c.bf16 %v3232, %v3228
      %v3357 = vpack.c.bf16 %v3233, %v3229
      %v3358 = vpack.c.bf16 %v3238, %v3234
      %v3359 = vpack.c.bf16 %v3239, %v3235
      %v3360 = vpack.c.bf16 %v3240, %v3236
      %v3361 = vpack.c.bf16 %v3241, %v3237
      %v3362 = vpack.c.bf16 %v3246, %v3242
      %v3363 = vpack.c.bf16 %v3247, %v3243
      %v3364 = vpack.c.bf16 %v3248, %v3244
      %v3365 = vpack.c.bf16 %v3249, %v3245
      %v3366 = vpack.c.bf16 %v3254, %v3250
      %v3367 = vpack.c.bf16 %v3255, %v3251
      %v3368 = vpack.c.bf16 %v3256, %v3252
      %v3369 = vpack.c.bf16 %v3257, %v3253
      %v3370 = vpack.c.bf16 %v3262, %v3258
      %v3371 = vpack.c.bf16 %v3263, %v3259
      %v3372 = vpack.c.bf16 %v3264, %v3260
      %v3373 = vpack.c.bf16 %v3265, %v3261
      %v3374 = vpack.c.bf16 %v3270, %v3266
      %v3375 = vpack.c.bf16 %v3271, %v3267
      %v3376 = vpack.c.bf16 %v3272, %v3268
      %v3377 = vpack.c.bf16 %v3273, %v3269
      %v3378 = vpack.c.bf16 %v3278, %v3274
      %v3379 = vpack.c.bf16 %v3279, %v3275
      %v3380 = vpack.c.bf16 %v3280, %v3276
      %v3381 = vpack.c.bf16 %v3281, %v3277
      %v3382 = vpack.c.bf16 %v3286, %v3282
      %v3383 = vpack.c.bf16 %v3287, %v3283
      %v3384 = vpack.c.bf16 %v3288, %v3284
      %v3385 = vpack.c.bf16 %v3289, %v3285
      %v3386 = vpack.c.bf16 %v3294, %v3290
      %v3387 = vpack.c.bf16 %v3295, %v3291
      %v3388 = vpack.c.bf16 %v3296, %v3292
      %v3389 = vpack.c.bf16 %v3297, %v3293
      %v3390 = vpack.c.bf16 %v3302, %v3298
      %v3391 = vpack.c.bf16 %v3303, %v3299
      %v3392 = vpack.c.bf16 %v3304, %v3300
      %v3393 = vpack.c.bf16 %v3305, %v3301
      %v3394 = vpack.c.bf16 %v3310, %v3306
      %v3395 = vpack.c.bf16 %v3311, %v3307
      %v3396 = vpack.c.bf16 %v3312, %v3308
      %v3397 = vpack.c.bf16 %v3313, %v3309
      %v3398 = vpack.c.bf16 %v3318, %v3314
      %v3399 = vpack.c.bf16 %v3319, %v3315
      %v3400 = vpack.c.bf16 %v3320, %v3316
      %v3401 = vpack.c.bf16 %v3321, %v3317
      %v3402 = vpack.c.bf16 %v3326, %v3322
      %v3403 = vpack.c.bf16 %v3327, %v3323
      %v3404 = vpack.c.bf16 %v3328, %v3324
      %v3405 = vpack.c.bf16 %v3329, %v3325
      %v3406 = vpack.c.bf16 %v3334, %v3330
      %v3407 = vpack.c.bf16 %v3335, %v3331
      %v3408 = vpack.c.bf16 %v3336, %v3332
      %v3409 = vpack.c.bf16 %v3337, %v3333
      %v3410 = vpack.c.bf16 %v3342, %v3338
      %v3411 = vpack.c.bf16 %v3343, %v3339
      %v3412 = vpack.c.bf16 %v3344, %v3340
      %v3413 = vpack.c.bf16 %v3345, %v3341
      %v3414 = vpack.c.bf16 %v3350, %v3346
      %v3415 = vpack.c.bf16 %v3351, %v3347
      %v3416 = vpack.c.bf16 %v3352, %v3348
      %v3417 = vpack.c.bf16 %v3353, %v3349
      %v3418 = vld [vmem:[%s5] sm:$0xff]
      %v3419 = vld [vmem:[%s5 + $0x8] sm:$0xff]
      %v3420 = vld [vmem:[%s5 + $0x10] sm:$0xff]
      %v3421 = vld [vmem:[%s5 + $0x18] sm:$0xff]
      %v3422 = vld [vmem:[%s5 + $0x20] sm:$0xff]
      %v3423 = vld [vmem:[%s5 + $0x28] sm:$0xff]
      %v3424 = vld [vmem:[%s5 + $0x30] sm:$0xff]
      %v3425 = vld [vmem:[%s5 + $0x38] sm:$0xff]
      %v3426 = vld [vmem:[%s5 + $0x40] sm:$0xff]
      %v3427 = vld [vmem:[%s5 + $0x48] sm:$0xff]
      %v3428 = vld [vmem:[%s5 + $0x50] sm:$0xff]
      %v3429 = vld [vmem:[%s5 + $0x58] sm:$0xff]
      %v3430 = vld [vmem:[%s5 + $0x60] sm:$0xff]
      %v3431 = vld [vmem:[%s5 + $0x68] sm:$0xff]
      %v3432 = vld [vmem:[%s5 + $0x70] sm:$0xff]
      %v3433 = vld [vmem:[%s5 + $0x78] sm:$0xff]
      %v3434 = vld [vmem:[%s5 + $0x80] sm:$0xff]
      %v3435 = vld [vmem:[%s5 + $0x88] sm:$0xff]
      %v3436 = vld [vmem:[%s5 + $0x90] sm:$0xff]
      %v3437 = vld [vmem:[%s5 + $0x98] sm:$0xff]
      %v3438 = vld [vmem:[%s5 + $0xa0] sm:$0xff]
      %v3439 = vld [vmem:[%s5 + $0xa8] sm:$0xff]
      %v3440 = vld [vmem:[%s5 + $0xb0] sm:$0xff]
      %v3441 = vld [vmem:[%s5 + $0xb8] sm:$0xff]
      %v3442 = vld [vmem:[%s5 + $0xc0] sm:$0xff]
      %v3443 = vld [vmem:[%s5 + $0xc8] sm:$0xff]
      %v3444 = vld [vmem:[%s5 + $0xd0] sm:$0xff]
      %v3445 = vld [vmem:[%s5 + $0xd8] sm:$0xff]
      %v3446 = vld [vmem:[%s5 + $0xe0] sm:$0xff]
      %v3447 = vld [vmem:[%s5 + $0xe8] sm:$0xff]
      %v3448 = vld [vmem:[%s5 + $0xf0] sm:$0xff]
      %v3449 = vld [vmem:[%s5 + $0xf8] sm:$0xff]
      %v3450 = vld [vmem:[%s5 + $0x100] sm:$0xff]
      %v3451 = vld [vmem:[%s5 + $0x108] sm:$0xff]
      %v3452 = vld [vmem:[%s5 + $0x110] sm:$0xff]
      %v3453 = vld [vmem:[%s5 + $0x118] sm:$0xff]
      %v3454 = vld [vmem:[%s5 + $0x120] sm:$0xff]
      %v3455 = vld [vmem:[%s5 + $0x128] sm:$0xff]
      %v3456 = vld [vmem:[%s5 + $0x130] sm:$0xff]
      %v3457 = vld [vmem:[%s5 + $0x138] sm:$0xff]
      %v3458 = vld [vmem:[%s5 + $0x140] sm:$0xff]
      %v3459 = vld [vmem:[%s5 + $0x148] sm:$0xff]
      %v3460 = vld [vmem:[%s5 + $0x150] sm:$0xff]
      %v3461 = vld [vmem:[%s5 + $0x158] sm:$0xff]
      %v3462 = vld [vmem:[%s5 + $0x160] sm:$0xff]
      %v3463 = vld [vmem:[%s5 + $0x168] sm:$0xff]
      %v3464 = vld [vmem:[%s5 + $0x170] sm:$0xff]
      %v3465 = vld [vmem:[%s5 + $0x178] sm:$0xff]
      %v3466 = vld [vmem:[%s5 + $0x180] sm:$0xff]
      %v3467 = vld [vmem:[%s5 + $0x188] sm:$0xff]
      %v3468 = vld [vmem:[%s5 + $0x190] sm:$0xff]
      %v3469 = vld [vmem:[%s5 + $0x198] sm:$0xff]
      %v3470 = vld [vmem:[%s5 + $0x1a0] sm:$0xff]
      %v3471 = vld [vmem:[%s5 + $0x1a8] sm:$0xff]
      %v3472 = vld [vmem:[%s5 + $0x1b0] sm:$0xff]
      %v3473 = vld [vmem:[%s5 + $0x1b8] sm:$0xff]
      %v3474 = vld [vmem:[%s5 + $0x1c0] sm:$0xff]
      %v3475 = vld [vmem:[%s5 + $0x1c8] sm:$0xff]
      %v3476 = vld [vmem:[%s5 + $0x1d0] sm:$0xff]
      %v3477 = vld [vmem:[%s5 + $0x1d8] sm:$0xff]
      %v3478 = vld [vmem:[%s5 + $0x1e0] sm:$0xff]
      %v3479 = vld [vmem:[%s5 + $0x1e8] sm:$0xff]
      %v3480 = vld [vmem:[%s5 + $0x1f0] sm:$0xff]
      %v3481 = vld [vmem:[%s5 + $0x1f8] sm:$0xff]
      %v3482 = vld [vmem:[%s6] sm:$0x3]
      %v3484 = vlaneseq
      %v3485 = vshrl.u32 %v3484, 7
      %v3486 = vsub.s32 0, %v3485
      %v3487 = vrot.slane %v3482, %v3486
      %v3488 = vlaneseq
      %v3489 = vshrl.u32 %v3488, 7
      %v3490 = vsub.s32 1, %v3489
      %v3491 = vrot.slane %v3482, %v3490
      %v3558 = vunpack.c.l.b16 %v3418
      %v3559 = vunpack.c.h.b16 %v3418
      %v3560 = vunpack.c.l.b16 %v3419
      %v3561 = vunpack.c.h.b16 %v3419
      %v3562 = vunpack.c.l.b16 %v3420
      %v3563 = vunpack.c.h.b16 %v3420
      %v3564 = vunpack.c.l.b16 %v3421
      %v3565 = vunpack.c.h.b16 %v3421
      %v3566 = vunpack.c.l.b16 %v3422
      %v3567 = vunpack.c.h.b16 %v3422
      %v3568 = vunpack.c.l.b16 %v3423
      %v3569 = vunpack.c.h.b16 %v3423
      %v3570 = vunpack.c.l.b16 %v3424
      %v3571 = vunpack.c.h.b16 %v3424
      %v3572 = vunpack.c.l.b16 %v3425
      %v3573 = vunpack.c.h.b16 %v3425
      %v3574 = vunpack.c.l.b16 %v3426
      %v3575 = vunpack.c.h.b16 %v3426
      %v3576 = vunpack.c.l.b16 %v3427
      %v3577 = vunpack.c.h.b16 %v3427
      %v3578 = vunpack.c.l.b16 %v3428
      %v3579 = vunpack.c.h.b16 %v3428
      %v3580 = vunpack.c.l.b16 %v3429
      %v3581 = vunpack.c.h.b16 %v3429
      %v3582 = vunpack.c.l.b16 %v3430
      %v3583 = vunpack.c.h.b16 %v3430
      %v3584 = vunpack.c.l.b16 %v3431
      %v3585 = vunpack.c.h.b16 %v3431
      %v3586 = vunpack.c.l.b16 %v3432
      %v3587 = vunpack.c.h.b16 %v3432
      %v3588 = vunpack.c.l.b16 %v3433
      %v3589 = vunpack.c.h.b16 %v3433
      %v3590 = vunpack.c.l.b16 %v3434
      %v3591 = vunpack.c.h.b16 %v3434
      %v3592 = vunpack.c.l.b16 %v3435
      %v3593 = vunpack.c.h.b16 %v3435
      %v3594 = vunpack.c.l.b16 %v3436
      %v3595 = vunpack.c.h.b16 %v3436
      %v3596 = vunpack.c.l.b16 %v3437
      %v3597 = vunpack.c.h.b16 %v3437
      %v3598 = vunpack.c.l.b16 %v3438
      %v3599 = vunpack.c.h.b16 %v3438
      %v3600 = vunpack.c.l.b16 %v3439
      %v3601 = vunpack.c.h.b16 %v3439
      %v3602 = vunpack.c.l.b16 %v3440
      %v3603 = vunpack.c.h.b16 %v3440
      %v3604 = vunpack.c.l.b16 %v3441
      %v3605 = vunpack.c.h.b16 %v3441
      %v3606 = vunpack.c.l.b16 %v3442
      %v3607 = vunpack.c.h.b16 %v3442
      %v3608 = vunpack.c.l.b16 %v3443
      %v3609 = vunpack.c.h.b16 %v3443
      %v3610 = vunpack.c.l.b16 %v3444
      %v3611 = vunpack.c.h.b16 %v3444
      %v3612 = vunpack.c.l.b16 %v3445
      %v3613 = vunpack.c.h.b16 %v3445
      %v3614 = vunpack.c.l.b16 %v3446
      %v3615 = vunpack.c.h.b16 %v3446
      %v3616 = vunpack.c.l.b16 %v3447
      %v3617 = vunpack.c.h.b16 %v3447
      %v3618 = vunpack.c.l.b16 %v3448
      %v3619 = vunpack.c.h.b16 %v3448
      %v3620 = vunpack.c.l.b16 %v3449
      %v3621 = vunpack.c.h.b16 %v3449
      %v3622 = vunpack.c.l.b16 %v3450
      %v3623 = vunpack.c.h.b16 %v3450
      %v3624 = vunpack.c.l.b16 %v3451
      %v3625 = vunpack.c.h.b16 %v3451
      %v3626 = vunpack.c.l.b16 %v3452
      %v3627 = vunpack.c.h.b16 %v3452
      %v3628 = vunpack.c.l.b16 %v3453
      %v3629 = vunpack.c.h.b16 %v3453
      %v3630 = vunpack.c.l.b16 %v3454
      %v3631 = vunpack.c.h.b16 %v3454
      %v3632 = vunpack.c.l.b16 %v3455
      %v3633 = vunpack.c.h.b16 %v3455
      %v3634 = vunpack.c.l.b16 %v3456
      %v3635 = vunpack.c.h.b16 %v3456
      %v3636 = vunpack.c.l.b16 %v3457
      %v3637 = vunpack.c.h.b16 %v3457
      %v3638 = vunpack.c.l.b16 %v3458
      %v3639 = vunpack.c.h.b16 %v3458
      %v3640 = vunpack.c.l.b16 %v3459
      %v3641 = vunpack.c.h.b16 %v3459
      %v3642 = vunpack.c.l.b16 %v3460
      %v3643 = vunpack.c.h.b16 %v3460
      %v3644 = vunpack.c.l.b16 %v3461
      %v3645 = vunpack.c.h.b16 %v3461
      %v3646 = vunpack.c.l.b16 %v3462
      %v3647 = vunpack.c.h.b16 %v3462
      %v3648 = vunpack.c.l.b16 %v3463
      %v3649 = vunpack.c.h.b16 %v3463
      %v3650 = vunpack.c.l.b16 %v3464
      %v3651 = vunpack.c.h.b16 %v3464
      %v3652 = vunpack.c.l.b16 %v3465
      %v3653 = vunpack.c.h.b16 %v3465
      %v3654 = vunpack.c.l.b16 %v3466
      %v3655 = vunpack.c.h.b16 %v3466
      %v3656 = vunpack.c.l.b16 %v3467
      %v3657 = vunpack.c.h.b16 %v3467
      %v3658 = vunpack.c.l.b16 %v3468
      %v3659 = vunpack.c.h.b16 %v3468
      %v3660 = vunpack.c.l.b16 %v3469
      %v3661 = vunpack.c.h.b16 %v3469
      %v3662 = vunpack.c.l.b16 %v3470
      %v3663 = vunpack.c.h.b16 %v3470
      %v3664 = vunpack.c.l.b16 %v3471
      %v3665 = vunpack.c.h.b16 %v3471
      %v3666 = vunpack.c.l.b16 %v3472
      %v3667 = vunpack.c.h.b16 %v3472
      %v3668 = vunpack.c.l.b16 %v3473
      %v3669 = vunpack.c.h.b16 %v3473
      %v3670 = vunpack.c.l.b16 %v3474
      %v3671 = vunpack.c.h.b16 %v3474
      %v3672 = vunpack.c.l.b16 %v3475
      %v3673 = vunpack.c.h.b16 %v3475
      %v3674 = vunpack.c.l.b16 %v3476
      %v3675 = vunpack.c.h.b16 %v3476
      %v3676 = vunpack.c.l.b16 %v3477
      %v3677 = vunpack.c.h.b16 %v3477
      %v3678 = vunpack.c.l.b16 %v3478
      %v3679 = vunpack.c.h.b16 %v3478
      %v3680 = vunpack.c.l.b16 %v3479
      %v3681 = vunpack.c.h.b16 %v3479
      %v3682 = vunpack.c.l.b16 %v3480
      %v3683 = vunpack.c.h.b16 %v3480
      %v3684 = vunpack.c.l.b16 %v3481
      %v3685 = vunpack.c.h.b16 %v3481
      %v3686 = vpack.c.b16 %v3560, %v3558
      %v3687 = vpack.c.b16 %v3561, %v3559
      %v3688 = vpack.c.b16 %v3564, %v3562
      %v3689 = vpack.c.b16 %v3565, %v3563
      %v3690 = vpack.c.b16 %v3568, %v3566
      %v3691 = vpack.c.b16 %v3569, %v3567
      %v3692 = vpack.c.b16 %v3572, %v3570
      %v3693 = vpack.c.b16 %v3573, %v3571
      %v3694 = vpack.c.b16 %v3576, %v3574
      %v3695 = vpack.c.b16 %v3577, %v3575
      %v3696 = vpack.c.b16 %v3580, %v3578
      %v3697 = vpack.c.b16 %v3581, %v3579
      %v3698 = vpack.c.b16 %v3584, %v3582
      %v3699 = vpack.c.b16 %v3585, %v3583
      %v3700 = vpack.c.b16 %v3588, %v3586
      %v3701 = vpack.c.b16 %v3589, %v3587
      %v3702 = vpack.c.b16 %v3592, %v3590
      %v3703 = vpack.c.b16 %v3593, %v3591
      %v3704 = vpack.c.b16 %v3596, %v3594
      %v3705 = vpack.c.b16 %v3597, %v3595
      %v3706 = vpack.c.b16 %v3600, %v3598
      %v3707 = vpack.c.b16 %v3601, %v3599
      %v3708 = vpack.c.b16 %v3604, %v3602
      %v3709 = vpack.c.b16 %v3605, %v3603
      %v3710 = vpack.c.b16 %v3608, %v3606
      %v3711 = vpack.c.b16 %v3609, %v3607
      %v3712 = vpack.c.b16 %v3612, %v3610
      %v3713 = vpack.c.b16 %v3613, %v3611
      %v3714 = vpack.c.b16 %v3616, %v3614
      %v3715 = vpack.c.b16 %v3617, %v3615
      %v3716 = vpack.c.b16 %v3620, %v3618
      %v3717 = vpack.c.b16 %v3621, %v3619
      %v3718 = vpack.c.b16 %v3624, %v3622
      %v3719 = vpack.c.b16 %v3625, %v3623
      %v3720 = vpack.c.b16 %v3628, %v3626
      %v3721 = vpack.c.b16 %v3629, %v3627
      %v3722 = vpack.c.b16 %v3632, %v3630
      %v3723 = vpack.c.b16 %v3633, %v3631
      %v3724 = vpack.c.b16 %v3636, %v3634
      %v3725 = vpack.c.b16 %v3637, %v3635
      %v3726 = vpack.c.b16 %v3640, %v3638
      %v3727 = vpack.c.b16 %v3641, %v3639
      %v3728 = vpack.c.b16 %v3644, %v3642
      %v3729 = vpack.c.b16 %v3645, %v3643
      %v3730 = vpack.c.b16 %v3648, %v3646
      %v3731 = vpack.c.b16 %v3649, %v3647
      %v3732 = vpack.c.b16 %v3652, %v3650
      %v3733 = vpack.c.b16 %v3653, %v3651
      %v3734 = vpack.c.b16 %v3656, %v3654
      %v3735 = vpack.c.b16 %v3657, %v3655
      %v3736 = vpack.c.b16 %v3660, %v3658
      %v3737 = vpack.c.b16 %v3661, %v3659
      %v3738 = vpack.c.b16 %v3664, %v3662
      %v3739 = vpack.c.b16 %v3665, %v3663
      %v3740 = vpack.c.b16 %v3668, %v3666
      %v3741 = vpack.c.b16 %v3669, %v3667
      %v3742 = vpack.c.b16 %v3672, %v3670
      %v3743 = vpack.c.b16 %v3673, %v3671
      %v3744 = vpack.c.b16 %v3676, %v3674
      %v3745 = vpack.c.b16 %v3677, %v3675
      %v3746 = vpack.c.b16 %v3680, %v3678
      %v3747 = vpack.c.b16 %v3681, %v3679
      %v3748 = vpack.c.b16 %v3684, %v3682
      %v3749 = vpack.c.b16 %v3685, %v3683
      %3814 = vmatprep.subr.bf16.mxu0 %v3687
      %3815 = vmatpush1.bf16.msra.mxu0 %v3686
      %3816 = vmatprep.subr.bf16.mxu0 %v3689
      %3817 = vmatpush1.bf16.msra.mxu0 %v3688
      %3818 = vmatprep.subr.bf16.mxu0 %v3691
      %3819 = vmatpush1.bf16.msra.mxu0 %v3690
      %3820 = vmatprep.subr.bf16.mxu0 %v3693
      %3821 = vmatpush1.bf16.msra.mxu0 %v3692
      %3822 = vmatprep.subr.bf16.mxu0 %v3695
      %3823 = vmatpush1.bf16.msra.mxu0 %v3694
      %3824 = vmatprep.subr.bf16.mxu0 %v3697
      %3825 = vmatpush1.bf16.msra.mxu0 %v3696
      %3826 = vmatprep.subr.bf16.mxu0 %v3699
      %3827 = vmatpush1.bf16.msra.mxu0 %v3698
      %3828 = vmatprep.subr.bf16.mxu0 %v3701
      %3829 = vmatpush1.bf16.msra.mxu0 %v3700
      %3830 = vmatprep.subr.bf16.mxu0 %v3703
      %3831 = vmatpush1.bf16.msra.mxu0 %v3702
      %3832 = vmatprep.subr.bf16.mxu0 %v3705
      %3833 = vmatpush1.bf16.msra.mxu0 %v3704
      %3834 = vmatprep.subr.bf16.mxu0 %v3707
      %3835 = vmatpush1.bf16.msra.mxu0 %v3706
      %3836 = vmatprep.subr.bf16.mxu0 %v3709
      %3837 = vmatpush1.bf16.msra.mxu0 %v3708
      %3838 = vmatprep.subr.bf16.mxu0 %v3711
      %3839 = vmatpush1.bf16.msra.mxu0 %v3710
      %3840 = vmatprep.subr.bf16.mxu0 %v3713
      %3841 = vmatpush1.bf16.msra.mxu0 %v3712
      %3842 = vmatprep.subr.bf16.mxu0 %v3715
      %3843 = vmatpush1.bf16.msra.mxu0 %v3714
      %3844 = vmatprep.subr.bf16.mxu0 %v3717
      %3845 = vmatpush1.bf16.msra.mxu0 %v3716
      %3846 = vmatprep.mubr.bf16.mxu0 %v3355
      %3847 = vmatmul.mubr.bf16.gmra.mrb[0].mxu0 %v3354
      %v3848 = vpop.f32.mrb[0].mxu0
      %v3849 = vadd.f32 %v3487, %v3848
      %v3850 = vpop.f32.mrb[0].mxu0
      %v3851 = vadd.f32 %v3491, %v3850
      %v3852 = vpop.f32.mrb[0].mxu0
      %v3853 = vadd.f32 %v3487, %v3852
      %v3854 = vpop.f32.mrb[0].mxu0
      %v3855 = vadd.f32 %v3491, %v3854
      %3856 = vmatprep.mubr.bf16.mxu0 %v3359
      %3857 = vmatmul.mubr.bf16.gmra.mrb[0].mxu0 %v3358
      %v3858 = vpop.f32.mrb[0].mxu0
      %v3859 = vadd.f32 %v3487, %v3858
      %v3860 = vpop.f32.mrb[0].mxu0
      %v3861 = vadd.f32 %v3491, %v3860
      %v3862 = vpop.f32.mrb[0].mxu0
      %v3863 = vadd.f32 %v3487, %v3862
      %v3864 = vpop.f32.mrb[0].mxu0
      %v3865 = vadd.f32 %v3491, %v3864
      %3866 = vmatprep.mubr.bf16.mxu0 %v3363
      %3867 = vmatmul.mubr.bf16.gmra.mrb[0].mxu0 %v3362
      %v3868 = vpop.f32.mrb[0].mxu0
      %v3869 = vadd.f32 %v3487, %v3868
      %v3870 = vpop.f32.mrb[0].mxu0
      %v3871 = vadd.f32 %v3491, %v3870
      %v3872 = vpop.f32.mrb[0].mxu0
      %v3873 = vadd.f32 %v3487, %v3872
      %v3874 = vpop.f32.mrb[0].mxu0
      %v3875 = vadd.f32 %v3491, %v3874
      %3876 = vmatprep.mubr.bf16.mxu0 %v3367
      %3877 = vmatmul.mubr.bf16.gmra.mrb[0].mxu0 %v3366
      %v3878 = vpop.f32.mrb[0].mxu0
      %v3879 = vadd.f32 %v3487, %v3878
      %v3880 = vpop.f32.mrb[0].mxu0
      %v3881 = vadd.f32 %v3491, %v3880
      %v3882 = vpop.f32.mrb[0].mxu0
      %v3883 = vadd.f32 %v3487, %v3882
      %v3884 = vpop.f32.mrb[0].mxu0
      %v3885 = vadd.f32 %v3491, %v3884
      %3886 = vmatprep.mubr.bf16.mxu0 %v3371
      %3887 = vmatmul.mubr.bf16.gmra.mrb[0].mxu0 %v3370
      %v3888 = vpop.f32.mrb[0].mxu0
      %v3889 = vadd.f32 %v3487, %v3888
      %v3890 = vpop.f32.mrb[0].mxu0
      %v3891 = vadd.f32 %v3491, %v3890
      %v3892 = vpop.f32.mrb[0].mxu0
      %v3893 = vadd.f32 %v3487, %v3892
      %v3894 = vpop.f32.mrb[0].mxu0
      %v3895 = vadd.f32 %v3491, %v3894
      %3896 = vmatprep.mubr.bf16.mxu0 %v3375
      %3897 = vmatmul.mubr.bf16.gmra.mrb[0].mxu0 %v3374
      %v3898 = vpop.f32.mrb[0].mxu0
      %v3899 = vadd.f32 %v3487, %v3898
      %v3900 = vpop.f32.mrb[0].mxu0
      %v3901 = vadd.f32 %v3491, %v3900
      %v3902 = vpop.f32.mrb[0].mxu0
      %v3903 = vadd.f32 %v3487, %v3902
      %v3904 = vpop.f32.mrb[0].mxu0
      %v3905 = vadd.f32 %v3491, %v3904
      %3906 = vmatprep.mubr.bf16.mxu0 %v3379
      %3907 = vmatmul.mubr.bf16.gmra.mrb[0].mxu0 %v3378
      %v3908 = vpop.f32.mrb[0].mxu0
      %v3909 = vadd.f32 %v3487, %v3908
      %v3910 = vpop.f32.mrb[0].mxu0
      %v3911 = vadd.f32 %v3491, %v3910
      %v3912 = vpop.f32.mrb[0].mxu0
      %v3913 = vadd.f32 %v3487, %v3912
      %v3914 = vpop.f32.mrb[0].mxu0
      %v3915 = vadd.f32 %v3491, %v3914
      %3916 = vmatprep.mubr.bf16.mxu0 %v3383
      %3917 = vmatmul.mubr.bf16.gmra.mrb[0].mxu0 %v3382
      %v3918 = vpop.f32.mrb[0].mxu0
      %v3919 = vadd.f32 %v3487, %v3918
      %v3920 = vpop.f32.mrb[0].mxu0
      %v3921 = vadd.f32 %v3491, %v3920
      %v3922 = vpop.f32.mrb[0].mxu0
      %v3923 = vadd.f32 %v3487, %v3922
      %v3924 = vpop.f32.mrb[0].mxu0
      %v3925 = vadd.f32 %v3491, %v3924
      %3926 = vmatprep.mubr.bf16.mxu0 %v3387
      %3927 = vmatmul.mubr.bf16.gmra.mrb[0].mxu0 %v3386
      %v3928 = vpop.f32.mrb[0].mxu0
      %v3929 = vadd.f32 %v3487, %v3928
      %v3930 = vpop.f32.mrb[0].mxu0
      %v3931 = vadd.f32 %v3491, %v3930
      %v3932 = vpop.f32.mrb[0].mxu0
      %v3933 = vadd.f32 %v3487, %v3932
      %v3934 = vpop.f32.mrb[0].mxu0
      %v3935 = vadd.f32 %v3491, %v3934
      %3936 = vmatprep.mubr.bf16.mxu0 %v3391
      %3937 = vmatmul.mubr.bf16.gmra.mrb[0].mxu0 %v3390
      %v3938 = vpop.f32.mrb[0].mxu0
      %v3939 = vadd.f32 %v3487, %v3938
      %v3940 = vpop.f32.mrb[0].mxu0
      %v3941 = vadd.f32 %v3491, %v3940
      %v3942 = vpop.f32.mrb[0].mxu0
      %v3943 = vadd.f32 %v3487, %v3942
      %v3944 = vpop.f32.mrb[0].mxu0
      %v3945 = vadd.f32 %v3491, %v3944
      %3946 = vmatprep.mubr.bf16.mxu0 %v3395
      %3947 = vmatmul.mubr.bf16.gmra.mrb[0].mxu0 %v3394
      %v3948 = vpop.f32.mrb[0].mxu0
      %v3949 = vadd.f32 %v3487, %v3948
      %v3950 = vpop.f32.mrb[0].mxu0
      %v3951 = vadd.f32 %v3491, %v3950
      %v3952 = vpop.f32.mrb[0].mxu0
      %v3953 = vadd.f32 %v3487, %v3952
      %v3954 = vpop.f32.mrb[0].mxu0
      %v3955 = vadd.f32 %v3491, %v3954
      %3956 = vmatprep.mubr.bf16.mxu0 %v3399
      %3957 = vmatmul.mubr.bf16.gmra.mrb[0].mxu0 %v3398
      %v3958 = vpop.f32.mrb[0].mxu0
      %v3959 = vadd.f32 %v3487, %v3958
      %v3960 = vpop.f32.mrb[0].mxu0
      %v3961 = vadd.f32 %v3491, %v3960
      %v3962 = vpop.f32.mrb[0].mxu0
      %v3963 = vadd.f32 %v3487, %v3962
      %v3964 = vpop.f32.mrb[0].mxu0
      %v3965 = vadd.f32 %v3491, %v3964
      %3966 = vmatprep.mubr.bf16.mxu0 %v3403
      %3967 = vmatmul.mubr.bf16.gmra.mrb[0].mxu0 %v3402
      %v3968 = vpop.f32.mrb[0].mxu0
      %v3969 = vadd.f32 %v3487, %v3968
      %v3970 = vpop.f32.mrb[0].mxu0
      %v3971 = vadd.f32 %v3491, %v3970
      %v3972 = vpop.f32.mrb[0].mxu0
      %v3973 = vadd.f32 %v3487, %v3972
      %v3974 = vpop.f32.mrb[0].mxu0
      %v3975 = vadd.f32 %v3491, %v3974
      %3976 = vmatprep.mubr.bf16.mxu0 %v3407
      %3977 = vmatmul.mubr.bf16.gmra.mrb[0].mxu0 %v3406
      %v3978 = vpop.f32.mrb[0].mxu0
      %v3979 = vadd.f32 %v3487, %v3978
      %v3980 = vpop.f32.mrb[0].mxu0
      %v3981 = vadd.f32 %v3491, %v3980
      %v3982 = vpop.f32.mrb[0].mxu0
      %v3983 = vadd.f32 %v3487, %v3982
      %v3984 = vpop.f32.mrb[0].mxu0
      %v3985 = vadd.f32 %v3491, %v3984
      %3986 = vmatprep.mubr.bf16.mxu0 %v3411
      %3987 = vmatmul.mubr.bf16.gmra.mrb[0].mxu0 %v3410
      %v3988 = vpop.f32.mrb[0].mxu0
      %v3989 = vadd.f32 %v3487, %v3988
      %v3990 = vpop.f32.mrb[0].mxu0
      %v3991 = vadd.f32 %v3491, %v3990
      %v3992 = vpop.f32.mrb[0].mxu0
      %v3993 = vadd.f32 %v3487, %v3992
      %v3994 = vpop.f32.mrb[0].mxu0
      %v3995 = vadd.f32 %v3491, %v3994
      %3996 = vmatprep.mubr.bf16.mxu0 %v3415
      %3997 = vmatmul.mubr.bf16.gmra.mrb[0].mxu0 %v3414
      %v3998 = vpop.f32.mrb[0].mxu0
      %v3999 = vadd.f32 %v3487, %v3998
      %v4000 = vpop.f32.mrb[0].mxu0
      %v4001 = vadd.f32 %v3491, %v4000
      %v4002 = vpop.f32.mrb[0].mxu0
      %v4003 = vadd.f32 %v3487, %v4002
      %v4004 = vpop.f32.mrb[0].mxu0
      %v4005 = vadd.f32 %v3491, %v4004
      %4006 = vdwg.mxu0
      %4007 = vmatprep.subr.bf16.mxu0 %v3719
      %4008 = vmatpush1.bf16.msra.mxu0 %v3718
      %4009 = vmatprep.subr.bf16.mxu0 %v3721
      %4010 = vmatpush1.bf16.msra.mxu0 %v3720
      %4011 = vmatprep.subr.bf16.mxu0 %v3723
      %4012 = vmatpush1.bf16.msra.mxu0 %v3722
      %4013 = vmatprep.subr.bf16.mxu0 %v3725
      %4014 = vmatpush1.bf16.msra.mxu0 %v3724
      %4015 = vmatprep.subr.bf16.mxu0 %v3727
      %4016 = vmatpush1.bf16.msra.mxu0 %v3726
      %4017 = vmatprep.subr.bf16.mxu0 %v3729
      %4018 = vmatpush1.bf16.msra.mxu0 %v3728
      %4019 = vmatprep.subr.bf16.mxu0 %v3731
      %4020 = vmatpush1.bf16.msra.mxu0 %v3730
      %4021 = vmatprep.subr.bf16.mxu0 %v3733
      %4022 = vmatpush1.bf16.msra.mxu0 %v3732
      %4023 = vmatprep.subr.bf16.mxu0 %v3735
      %4024 = vmatpush1.bf16.msra.mxu0 %v3734
      %4025 = vmatprep.subr.bf16.mxu0 %v3737
      %4026 = vmatpush1.bf16.msra.mxu0 %v3736
      %4027 = vmatprep.subr.bf16.mxu0 %v3739
      %4028 = vmatpush1.bf16.msra.mxu0 %v3738
      %4029 = vmatprep.subr.bf16.mxu0 %v3741
      %4030 = vmatpush1.bf16.msra.mxu0 %v3740
      %4031 = vmatprep.subr.bf16.mxu0 %v3743
      %4032 = vmatpush1.bf16.msra.mxu0 %v3742
      %4033 = vmatprep.subr.bf16.mxu0 %v3745
      %4034 = vmatpush1.bf16.msra.mxu0 %v3744
      %4035 = vmatprep.subr.bf16.mxu0 %v3747
      %4036 = vmatpush1.bf16.msra.mxu0 %v3746
      %4037 = vmatprep.subr.bf16.mxu0 %v3749
      %4038 = vmatpush1.bf16.msra.mxu0 %v3748
      %4039 = vmatprep.mubr.bf16.mxu0 %v3357
      %4040 = vmatmul.mubr.bf16.gmra.mrb[0].mxu0 %v3356
      %v4041 = vpop.f32.mrb[0].mxu0
      %v4042 = vadd.f32 %v3849, %v4041
      %v4043 = vpop.f32.mrb[0].mxu0
      %v4044 = vadd.f32 %v3851, %v4043
      %v4045 = vpop.f32.mrb[0].mxu0
      %v4046 = vadd.f32 %v3853, %v4045
      %v4047 = vpop.f32.mrb[0].mxu0
      %v4048 = vadd.f32 %v3855, %v4047
      %4049 = vmatprep.mubr.bf16.mxu0 %v3361
      %4050 = vmatmul.mubr.bf16.gmra.mrb[0].mxu0 %v3360
      %v4051 = vpop.f32.mrb[0].mxu0
      %v4052 = vadd.f32 %v3859, %v4051
      %v4053 = vpop.f32.mrb[0].mxu0
      %v4054 = vadd.f32 %v3861, %v4053
      %v4055 = vpop.f32.mrb[0].mxu0
      %v4056 = vadd.f32 %v3863, %v4055
      %v4057 = vpop.f32.mrb[0].mxu0
      %v4058 = vadd.f32 %v3865, %v4057
      %4059 = vmatprep.mubr.bf16.mxu0 %v3365
      %4060 = vmatmul.mubr.bf16.gmra.mrb[0].mxu0 %v3364
      %v4061 = vpop.f32.mrb[0].mxu0
      %v4062 = vadd.f32 %v3869, %v4061
      %v4063 = vpop.f32.mrb[0].mxu0
      %v4064 = vadd.f32 %v3871, %v4063
      %v4065 = vpop.f32.mrb[0].mxu0
      %v4066 = vadd.f32 %v3873, %v4065
      %v4067 = vpop.f32.mrb[0].mxu0
      %v4068 = vadd.f32 %v3875, %v4067
      %4069 = vmatprep.mubr.bf16.mxu0 %v3369
      %4070 = vmatmul.mubr.bf16.gmra.mrb[0].mxu0 %v3368
      %v4071 = vpop.f32.mrb[0].mxu0
      %v4072 = vadd.f32 %v3879, %v4071
      %v4073 = vpop.f32.mrb[0].mxu0
      %v4074 = vadd.f32 %v3881, %v4073
      %v4075 = vpop.f32.mrb[0].mxu0
      %v4076 = vadd.f32 %v3883, %v4075
      %v4077 = vpop.f32.mrb[0].mxu0
      %v4078 = vadd.f32 %v3885, %v4077
      %4079 = vmatprep.mubr.bf16.mxu0 %v3373
      %4080 = vmatmul.mubr.bf16.gmra.mrb[0].mxu0 %v3372
      %v4081 = vpop.f32.mrb[0].mxu0
      %v4082 = vadd.f32 %v3889, %v4081
      %v4083 = vpop.f32.mrb[0].mxu0
      %v4084 = vadd.f32 %v3891, %v4083
      %v4085 = vpop.f32.mrb[0].mxu0
      %v4086 = vadd.f32 %v3893, %v4085
      %v4087 = vpop.f32.mrb[0].mxu0
      %v4088 = vadd.f32 %v3895, %v4087
      %4089 = vmatprep.mubr.bf16.mxu0 %v3377
      %4090 = vmatmul.mubr.bf16.gmra.mrb[0].mxu0 %v3376
      %v4091 = vpop.f32.mrb[0].mxu0
      %v4092 = vadd.f32 %v3899, %v4091
      %v4093 = vpop.f32.mrb[0].mxu0
      %v4094 = vadd.f32 %v3901, %v4093
      %v4095 = vpop.f32.mrb[0].mxu0
      %v4096 = vadd.f32 %v3903, %v4095
      %v4097 = vpop.f32.mrb[0].mxu0
      %v4098 = vadd.f32 %v3905, %v4097
      %4099 = vmatprep.mubr.bf16.mxu0 %v3381
      %4100 = vmatmul.mubr.bf16.gmra.mrb[0].mxu0 %v3380
      %v4101 = vpop.f32.mrb[0].mxu0
      %v4102 = vadd.f32 %v3909, %v4101
      %v4103 = vpop.f32.mrb[0].mxu0
      %v4104 = vadd.f32 %v3911, %v4103
      %v4105 = vpop.f32.mrb[0].mxu0
      %v4106 = vadd.f32 %v3913, %v4105
      %v4107 = vpop.f32.mrb[0].mxu0
      %v4108 = vadd.f32 %v3915, %v4107
      %4109 = vmatprep.mubr.bf16.mxu0 %v3385
      %4110 = vmatmul.mubr.bf16.gmra.mrb[0].mxu0 %v3384
      %v4111 = vpop.f32.mrb[0].mxu0
      %v4112 = vadd.f32 %v3919, %v4111
      %v4113 = vpop.f32.mrb[0].mxu0
      %v4114 = vadd.f32 %v3921, %v4113
      %v4115 = vpop.f32.mrb[0].mxu0
      %v4116 = vadd.f32 %v3923, %v4115
      %v4117 = vpop.f32.mrb[0].mxu0
      %v4118 = vadd.f32 %v3925, %v4117
      %4119 = vmatprep.mubr.bf16.mxu0 %v3389
      %4120 = vmatmul.mubr.bf16.gmra.mrb[0].mxu0 %v3388
      %v4121 = vpop.f32.mrb[0].mxu0
      %v4122 = vadd.f32 %v3929, %v4121
      %v4123 = vpop.f32.mrb[0].mxu0
      %v4124 = vadd.f32 %v3931, %v4123
      %v4125 = vpop.f32.mrb[0].mxu0
      %v4126 = vadd.f32 %v3933, %v4125
      %v4127 = vpop.f32.mrb[0].mxu0
      %v4128 = vadd.f32 %v3935, %v4127
      %4129 = vmatprep.mubr.bf16.mxu0 %v3393
      %4130 = vmatmul.mubr.bf16.gmra.mrb[0].mxu0 %v3392
      %v4131 = vpop.f32.mrb[0].mxu0
      %v4132 = vadd.f32 %v3939, %v4131
      %v4133 = vpop.f32.mrb[0].mxu0
      %v4134 = vadd.f32 %v3941, %v4133
      %v4135 = vpop.f32.mrb[0].mxu0
      %v4136 = vadd.f32 %v3943, %v4135
      %v4137 = vpop.f32.mrb[0].mxu0
      %v4138 = vadd.f32 %v3945, %v4137
      %4139 = vmatprep.mubr.bf16.mxu0 %v3397
      %4140 = vmatmul.mubr.bf16.gmra.mrb[0].mxu0 %v3396
      %v4141 = vpop.f32.mrb[0].mxu0
      %v4142 = vadd.f32 %v3949, %v4141
      %v4143 = vpop.f32.mrb[0].mxu0
      %v4144 = vadd.f32 %v3951, %v4143
      %v4145 = vpop.f32.mrb[0].mxu0
      %v4146 = vadd.f32 %v3953, %v4145
      %v4147 = vpop.f32.mrb[0].mxu0
      %v4148 = vadd.f32 %v3955, %v4147
      %4149 = vmatprep.mubr.bf16.mxu0 %v3401
      %4150 = vmatmul.mubr.bf16.gmra.mrb[0].mxu0 %v3400
      %v4151 = vpop.f32.mrb[0].mxu0
      %v4152 = vadd.f32 %v3959, %v4151
      %v4153 = vpop.f32.mrb[0].mxu0
      %v4154 = vadd.f32 %v3961, %v4153
      %v4155 = vpop.f32.mrb[0].mxu0
      %v4156 = vadd.f32 %v3963, %v4155
      %v4157 = vpop.f32.mrb[0].mxu0
      %v4158 = vadd.f32 %v3965, %v4157
      %4159 = vmatprep.mubr.bf16.mxu0 %v3405
      %4160 = vmatmul.mubr.bf16.gmra.mrb[0].mxu0 %v3404
      %v4161 = vpop.f32.mrb[0].mxu0
      %v4162 = vadd.f32 %v3969, %v4161
      %v4163 = vpop.f32.mrb[0].mxu0
      %v4164 = vadd.f32 %v3971, %v4163
      %v4165 = vpop.f32.mrb[0].mxu0
      %v4166 = vadd.f32 %v3973, %v4165
      %v4167 = vpop.f32.mrb[0].mxu0
      %v4168 = vadd.f32 %v3975, %v4167
      %4169 = vmatprep.mubr.bf16.mxu0 %v3409
      %4170 = vmatmul.mubr.bf16.gmra.mrb[0].mxu0 %v3408
      %v4171 = vpop.f32.mrb[0].mxu0
      %v4172 = vadd.f32 %v3979, %v4171
      %v4173 = vpop.f32.mrb[0].mxu0
      %v4174 = vadd.f32 %v3981, %v4173
      %v4175 = vpop.f32.mrb[0].mxu0
      %v4176 = vadd.f32 %v3983, %v4175
      %v4177 = vpop.f32.mrb[0].mxu0
      %v4178 = vadd.f32 %v3985, %v4177
      %4179 = vmatprep.mubr.bf16.mxu0 %v3413
      %4180 = vmatmul.mubr.bf16.gmra.mrb[0].mxu0 %v3412
      %v4181 = vpop.f32.mrb[0].mxu0
      %v4182 = vadd.f32 %v3989, %v4181
      %v4183 = vpop.f32.mrb[0].mxu0
      %v4184 = vadd.f32 %v3991, %v4183
      %v4185 = vpop.f32.mrb[0].mxu0
      %v4186 = vadd.f32 %v3993, %v4185
      %v4187 = vpop.f32.mrb[0].mxu0
      %v4188 = vadd.f32 %v3995, %v4187
      %4189 = vmatprep.mubr.bf16.mxu0 %v3417
      %4190 = vmatmul.mubr.bf16.gmra.mrb[0].mxu0 %v3416
      %v4191 = vpop.f32.mrb[0].mxu0
      %v4192 = vadd.f32 %v3999, %v4191
      %v4193 = vpop.f32.mrb[0].mxu0
      %v4194 = vadd.f32 %v4001, %v4193
      %v4195 = vpop.f32.mrb[0].mxu0
      %v4196 = vadd.f32 %v4003, %v4195
      %v4197 = vpop.f32.mrb[0].mxu0
      %v4198 = vadd.f32 %v4005, %v4197
      %4199 = vdwg.mxu0
      %v4200 = vld [vmem:[%s7] sm:$0x3]
      %v4201 = vld [vmem:[%s8] sm:$0x3]
      %v4202 = vadd.f32 %v4042, %v4044
      %4203 = vadd.xlane.f32.xlu0 %v4202
      %v4204 = vpop.xlane.xlu0 %4203
      %v4205 = vadd.f32 %v4046, %v4048
      %4206 = vadd.xlane.f32.xlu0 %v4205
      %v4207 = vpop.xlane.xlu0 %4206
      %v4208 = vadd.f32 %v4052, %v4054
      %4209 = vadd.xlane.f32.xlu0 %v4208
      %v4210 = vpop.xlane.xlu0 %4209
      %v4211 = vadd.f32 %v4056, %v4058
      %4212 = vadd.xlane.f32.xlu0 %v4211
      %v4213 = vpop.xlane.xlu0 %4212
      %v4214 = vadd.f32 %v4062, %v4064
      %4215 = vadd.xlane.f32.xlu0 %v4214
      %v4216 = vpop.xlane.xlu0 %4215
      %v4217 = vadd.f32 %v4066, %v4068
      %4218 = vadd.xlane.f32.xlu0 %v4217
      %v4219 = vpop.xlane.xlu0 %4218
      %v4220 = vadd.f32 %v4072, %v4074
      %4221 = vadd.xlane.f32.xlu0 %v4220
      %v4222 = vpop.xlane.xlu0 %4221
      %v4223 = vadd.f32 %v4076, %v4078
      %4224 = vadd.xlane.f32.xlu0 %v4223
      %v4225 = vpop.xlane.xlu0 %4224
      %v4226 = vadd.f32 %v4082, %v4084
      %4227 = vadd.xlane.f32.xlu0 %v4226
      %v4228 = vpop.xlane.xlu0 %4227
      %v4229 = vadd.f32 %v4086, %v4088
      %4230 = vadd.xlane.f32.xlu0 %v4229
      %v4231 = vpop.xlane.xlu0 %4230
      %v4232 = vadd.f32 %v4092, %v4094
      %4233 = vadd.xlane.f32.xlu0 %v4232
      %v4234 = vpop.xlane.xlu0 %4233
      %v4235 = vadd.f32 %v4096, %v4098
      %4236 = vadd.xlane.f32.xlu0 %v4235
      %v4237 = vpop.xlane.xlu0 %4236
      %v4238 = vadd.f32 %v4102, %v4104
      %4239 = vadd.xlane.f32.xlu0 %v4238
      %v4240 = vpop.xlane.xlu0 %4239
      %v4241 = vadd.f32 %v4106, %v4108
      %4242 = vadd.xlane.f32.xlu0 %v4241
      %v4243 = vpop.xlane.xlu0 %4242
      %v4244 = vadd.f32 %v4112, %v4114
      %4245 = vadd.xlane.f32.xlu0 %v4244
      %v4246 = vpop.xlane.xlu0 %4245
      %v4247 = vadd.f32 %v4116, %v4118
      %4248 = vadd.xlane.f32.xlu0 %v4247
      %v4249 = vpop.xlane.xlu0 %4248
      %v4250 = vadd.f32 %v4122, %v4124
      %4251 = vadd.xlane.f32.xlu0 %v4250
      %v4252 = vpop.xlane.xlu0 %4251
      %v4253 = vadd.f32 %v4126, %v4128
      %4254 = vadd.xlane.f32.xlu0 %v4253
      %v4255 = vpop.xlane.xlu0 %4254
      %v4256 = vadd.f32 %v4132, %v4134
      %4257 = vadd.xlane.f32.xlu0 %v4256
      %v4258 = vpop.xlane.xlu0 %4257
      %v4259 = vadd.f32 %v4136, %v4138
      %4260 = vadd.xlane.f32.xlu0 %v4259
      %v4261 = vpop.xlane.xlu0 %4260
      %v4262 = vadd.f32 %v4142, %v4144
      %4263 = vadd.xlane.f32.xlu0 %v4262
      %v4264 = vpop.xlane.xlu0 %4263
      %v4265 = vadd.f32 %v4146, %v4148
      %4266 = vadd.xlane.f32.xlu0 %v4265
      %v4267 = vpop.xlane.xlu0 %4266
      %v4268 = vadd.f32 %v4152, %v4154
      %4269 = vadd.xlane.f32.xlu0 %v4268
      %v4270 = vpop.xlane.xlu0 %4269
      %v4271 = vadd.f32 %v4156, %v4158
      %4272 = vadd.xlane.f32.xlu0 %v4271
      %v4273 = vpop.xlane.xlu0 %4272
      %v4274 = vadd.f32 %v4162, %v4164
      %4275 = vadd.xlane.f32.xlu0 %v4274
      %v4276 = vpop.xlane.xlu0 %4275
      %v4277 = vadd.f32 %v4166, %v4168
      %4278 = vadd.xlane.f32.xlu0 %v4277
      %v4279 = vpop.xlane.xlu0 %4278
      %v4280 = vadd.f32 %v4172, %v4174
      %4281 = vadd.xlane.f32.xlu0 %v4280
      %v4282 = vpop.xlane.xlu0 %4281
      %v4283 = vadd.f32 %v4176, %v4178
      %4284 = vadd.xlane.f32.xlu0 %v4283
      %v4285 = vpop.xlane.xlu0 %4284
      %v4286 = vadd.f32 %v4182, %v4184
      %4287 = vadd.xlane.f32.xlu0 %v4286
      %v4288 = vpop.xlane.xlu0 %4287
      %v4289 = vadd.f32 %v4186, %v4188
      %4290 = vadd.xlane.f32.xlu0 %v4289
      %v4291 = vpop.xlane.xlu0 %4290
      %v4292 = vadd.f32 %v4192, %v4194
      %4293 = vadd.xlane.f32.xlu0 %v4292
      %v4294 = vpop.xlane.xlu0 %4293
      %v4295 = vadd.f32 %v4196, %v4198
      %4296 = vadd.xlane.f32.xlu0 %v4295
      %v4297 = vpop.xlane.xlu0 %4296
      %v4298 = vrcp.pop 256.0
      %v4299 = vmul.f32 %v4204, %v4298
      %v4300 = vmul.f32 %v4207, %v4298
      %v4301 = vmul.f32 %v4210, %v4298
      %v4302 = vmul.f32 %v4213, %v4298
      %v4303 = vmul.f32 %v4216, %v4298
      %v4304 = vmul.f32 %v4219, %v4298
      %v4305 = vmul.f32 %v4222, %v4298
      %v4306 = vmul.f32 %v4225, %v4298
      %v4307 = vmul.f32 %v4228, %v4298
      %v4308 = vmul.f32 %v4231, %v4298
      %v4309 = vmul.f32 %v4234, %v4298
      %v4310 = vmul.f32 %v4237, %v4298
      %v4311 = vmul.f32 %v4240, %v4298
      %v4312 = vmul.f32 %v4243, %v4298
      %v4313 = vmul.f32 %v4246, %v4298
      %v4314 = vmul.f32 %v4249, %v4298
      %v4315 = vmul.f32 %v4252, %v4298
      %v4316 = vmul.f32 %v4255, %v4298
      %v4317 = vmul.f32 %v4258, %v4298
      %v4318 = vmul.f32 %v4261, %v4298
      %v4319 = vmul.f32 %v4264, %v4298
      %v4320 = vmul.f32 %v4267, %v4298
      %v4321 = vmul.f32 %v4270, %v4298
      %v4322 = vmul.f32 %v4273, %v4298
      %v4323 = vmul.f32 %v4276, %v4298
      %v4324 = vmul.f32 %v4279, %v4298
      %v4325 = vmul.f32 %v4282, %v4298
      %v4326 = vmul.f32 %v4285, %v4298
      %v4327 = vmul.f32 %v4288, %v4298
      %v4328 = vmul.f32 %v4291, %v4298
      %v4329 = vmul.f32 %v4294, %v4298
      %v4330 = vmul.f32 %v4297, %v4298
      %v4331 = vsub.f32 %v4042, %v4299
      %v4332 = vsub.f32 %v4044, %v4299
      %v4333 = vsub.f32 %v4046, %v4300
      %v4334 = vsub.f32 %v4048, %v4300
      %v4335 = vsub.f32 %v4052, %v4301
      %v4336 = vsub.f32 %v4054, %v4301
      %v4337 = vsub.f32 %v4056, %v4302
      %v4338 = vsub.f32 %v4058, %v4302
      %v4339 = vsub.f32 %v4062, %v4303
      %v4340 = vsub.f32 %v4064, %v4303
      %v4341 = vsub.f32 %v4066, %v4304
      %v4342 = vsub.f32 %v4068, %v4304
      %v4343 = vsub.f32 %v4072, %v4305
      %v4344 = vsub.f32 %v4074, %v4305
      %v4345 = vsub.f32 %v4076, %v4306
      %v4346 = vsub.f32 %v4078, %v4306
      %v4347 = vsub.f32 %v4082, %v4307
      %v4348 = vsub.f32 %v4084, %v4307
      %v4349 = vsub.f32 %v4086, %v4308
      %v4350 = vsub.f32 %v4088, %v4308
      %v4351 = vsub.f32 %v4092, %v4309
      %v4352 = vsub.f32 %v4094, %v4309
      %v4353 = vsub.f32 %v4096, %v4310
      %v4354 = vsub.f32 %v4098, %v4310
      %v4355 = vsub.f32 %v4102, %v4311
      %v4356 = vsub.f32 %v4104, %v4311
      %v4357 = vsub.f32 %v4106, %v4312
      %v4358 = vsub.f32 %v4108, %v4312
      %v4359 = vsub.f32 %v4112, %v4313
      %v4360 = vsub.f32 %v4114, %v4313
      %v4361 = vsub.f32 %v4116, %v4314
      %v4362 = vsub.f32 %v4118, %v4314
      %v4363 = vsub.f32 %v4122, %v4315
      %v4364 = vsub.f32 %v4124, %v4315
      %v4365 = vsub.f32 %v4126, %v4316
      %v4366 = vsub.f32 %v4128, %v4316
      %v4367 = vsub.f32 %v4132, %v4317
      %v4368 = vsub.f32 %v4134, %v4317
      %v4369 = vsub.f32 %v4136, %v4318
      %v4370 = vsub.f32 %v4138, %v4318
      %v4371 = vsub.f32 %v4142, %v4319
      %v4372 = vsub.f32 %v4144, %v4319
      %v4373 = vsub.f32 %v4146, %v4320
      %v4374 = vsub.f32 %v4148, %v4320
      %v4375 = vsub.f32 %v4152, %v4321
      %v4376 = vsub.f32 %v4154, %v4321
      %v4377 = vsub.f32 %v4156, %v4322
      %v4378 = vsub.f32 %v4158, %v4322
      %v4379 = vsub.f32 %v4162, %v4323
      %v4380 = vsub.f32 %v4164, %v4323
      %v4381 = vsub.f32 %v4166, %v4324
      %v4382 = vsub.f32 %v4168, %v4324
      %v4383 = vsub.f32 %v4172, %v4325
      %v4384 = vsub.f32 %v4174, %v4325
      %v4385 = vsub.f32 %v4176, %v4326
      %v4386 = vsub.f32 %v4178, %v4326
      %v4387 = vsub.f32 %v4182, %v4327
      %v4388 = vsub.f32 %v4184, %v4327
      %v4389 = vsub.f32 %v4186, %v4328
      %v4390 = vsub.f32 %v4188, %v4328
      %v4391 = vsub.f32 %v4192, %v4329
      %v4392 = vsub.f32 %v4194, %v4329
      %v4393 = vsub.f32 %v4196, %v4330
      %v4394 = vsub.f32 %v4198, %v4330
      %v4395 = vmul.f32 %v4331, %v4331
      %v4396 = vmul.f32 %v4332, %v4332
      %v4397 = vmul.f32 %v4333, %v4333
      %v4398 = vmul.f32 %v4334, %v4334
      %v4399 = vmul.f32 %v4335, %v4335
      %v4400 = vmul.f32 %v4336, %v4336
      %v4401 = vmul.f32 %v4337, %v4337
      %v4402 = vmul.f32 %v4338, %v4338
      %v4403 = vmul.f32 %v4339, %v4339
      %v4404 = vmul.f32 %v4340, %v4340
      %v4405 = vmul.f32 %v4341, %v4341
      %v4406 = vmul.f32 %v4342, %v4342
      %v4407 = vmul.f32 %v4343, %v4343
      %v4408 = vmul.f32 %v4344, %v4344
      %v4409 = vmul.f32 %v4345, %v4345
      %v4410 = vmul.f32 %v4346, %v4346
      %v4411 = vmul.f32 %v4347, %v4347
      %v4412 = vmul.f32 %v4348, %v4348
      %v4413 = vmul.f32 %v4349, %v4349
      %v4414 = vmul.f32 %v4350, %v4350
      %v4415 = vmul.f32 %v4351, %v4351
      %v4416 = vmul.f32 %v4352, %v4352
      %v4417 = vmul.f32 %v4353, %v4353
      %v4418 = vmul.f32 %v4354, %v4354
      %v4419 = vmul.f32 %v4355, %v4355
      %v4420 = vmul.f32 %v4356, %v4356
      %v4421 = vmul.f32 %v4357, %v4357
      %v4422 = vmul.f32 %v4358, %v4358
      %v4423 = vmul.f32 %v4359, %v4359
      %v4424 = vmul.f32 %v4360, %v4360
      %v4425 = vmul.f32 %v4361, %v4361
      %v4426 = vmul.f32 %v4362, %v4362
      %v4427 = vmul.f32 %v4363, %v4363
      %v4428 = vmul.f32 %v4364, %v4364
      %v4429 = vmul.f32 %v4365, %v4365
      %v4430 = vmul.f32 %v4366, %v4366
      %v4431 = vmul.f32 %v4367, %v4367
      %v4432 = vmul.f32 %v4368, %v4368
      %v4433 = vmul.f32 %v4369, %v4369
      %v4434 = vmul.f32 %v4370, %v4370
      %v4435 = vmul.f32 %v4371, %v4371
      %v4436 = vmul.f32 %v4372, %v4372
      %v4437 = vmul.f32 %v4373, %v4373
      %v4438 = vmul.f32 %v4374, %v4374
      %v4439 = vmul.f32 %v4375, %v4375
      %v4440 = vmul.f32 %v4376, %v4376
      %v4441 = vmul.f32 %v4377, %v4377
      %v4442 = vmul.f32 %v4378, %v4378
      %v4443 = vmul.f32 %v4379, %v4379
      %v4444 = vmul.f32 %v4380, %v4380
      %v4445 = vmul.f32 %v4381, %v4381
      %v4446 = vmul.f32 %v4382, %v4382
      %v4447 = vmul.f32 %v4383, %v4383
      %v4448 = vmul.f32 %v4384, %v4384
      %v4449 = vmul.f32 %v4385, %v4385
      %v4450 = vmul.f32 %v4386, %v4386
      %v4451 = vmul.f32 %v4387, %v4387
      %v4452 = vmul.f32 %v4388, %v4388
      %v4453 = vmul.f32 %v4389, %v4389
      %v4454 = vmul.f32 %v4390, %v4390
      %v4455 = vmul.f32 %v4391, %v4391
      %v4456 = vmul.f32 %v4392, %v4392
      %v4457 = vmul.f32 %v4393, %v4393
      %v4458 = vmul.f32 %v4394, %v4394
      %v4459 = vadd.f32 %v4395, %v4396
      %4460 = vadd.xlane.f32.xlu0 %v4459
      %v4461 = vpop.xlane.xlu0 %4460
      %v4462 = vadd.f32 %v4397, %v4398
      %4463 = vadd.xlane.f32.xlu0 %v4462
      %v4464 = vpop.xlane.xlu0 %4463
      %v4465 = vadd.f32 %v4399, %v4400
      %4466 = vadd.xlane.f32.xlu0 %v4465
      %v4467 = vpop.xlane.xlu0 %4466
      %v4468 = vadd.f32 %v4401, %v4402
      %4469 = vadd.xlane.f32.xlu0 %v4468
      %v4470 = vpop.xlane.xlu0 %4469
      %v4471 = vadd.f32 %v4403, %v4404
      %4472 = vadd.xlane.f32.xlu0 %v4471
      %v4473 = vpop.xlane.xlu0 %4472
      %v4474 = vadd.f32 %v4405, %v4406
      %4475 = vadd.xlane.f32.xlu0 %v4474
      %v4476 = vpop.xlane.xlu0 %4475
      %v4477 = vadd.f32 %v4407, %v4408
      %4478 = vadd.xlane.f32.xlu0 %v4477
      %v4479 = vpop.xlane.xlu0 %4478
      %v4480 = vadd.f32 %v4409, %v4410
      %4481 = vadd.xlane.f32.xlu0 %v4480
      %v4482 = vpop.xlane.xlu0 %4481
      %v4483 = vadd.f32 %v4411, %v4412
      %4484 = vadd.xlane.f32.xlu0 %v4483
      %v4485 = vpop.xlane.xlu0 %4484
      %v4486 = vadd.f32 %v4413, %v4414
      %4487 = vadd.xlane.f32.xlu0 %v4486
      %v4488 = vpop.xlane.xlu0 %4487
      %v4489 = vadd.f32 %v4415, %v4416
      %4490 = vadd.xlane.f32.xlu0 %v4489
      %v4491 = vpop.xlane.xlu0 %4490
      %v4492 = vadd.f32 %v4417, %v4418
      %4493 = vadd.xlane.f32.xlu0 %v4492
      %v4494 = vpop.xlane.xlu0 %4493
      %v4495 = vadd.f32 %v4419, %v4420
      %4496 = vadd.xlane.f32.xlu0 %v4495
      %v4497 = vpop.xlane.xlu0 %4496
      %v4498 = vadd.f32 %v4421, %v4422
      %4499 = vadd.xlane.f32.xlu0 %v4498
      %v4500 = vpop.xlane.xlu0 %4499
      %v4501 = vadd.f32 %v4423, %v4424
      %4502 = vadd.xlane.f32.xlu0 %v4501
      %v4503 = vpop.xlane.xlu0 %4502
      %v4504 = vadd.f32 %v4425, %v4426
      %4505 = vadd.xlane.f32.xlu0 %v4504
      %v4506 = vpop.xlane.xlu0 %4505
      %v4507 = vadd.f32 %v4427, %v4428
      %4508 = vadd.xlane.f32.xlu0 %v4507
      %v4509 = vpop.xlane.xlu0 %4508
      %v4510 = vadd.f32 %v4429, %v4430
      %4511 = vadd.xlane.f32.xlu0 %v4510
      %v4512 = vpop.xlane.xlu0 %4511
      %v4513 = vadd.f32 %v4431, %v4432
      %4514 = vadd.xlane.f32.xlu0 %v4513
      %v4515 = vpop.xlane.xlu0 %4514
      %v4516 = vadd.f32 %v4433, %v4434
      %4517 = vadd.xlane.f32.xlu0 %v4516
      %v4518 = vpop.xlane.xlu0 %4517
      %v4519 = vadd.f32 %v4435, %v4436
      %4520 = vadd.xlane.f32.xlu0 %v4519
      %v4521 = vpop.xlane.xlu0 %4520
      %v4522 = vadd.f32 %v4437, %v4438
      %4523 = vadd.xlane.f32.xlu0 %v4522
      %v4524 = vpop.xlane.xlu0 %4523
      %v4525 = vadd.f32 %v4439, %v4440
      %4526 = vadd.xlane.f32.xlu0 %v4525
      %v4527 = vpop.xlane.xlu0 %4526
      %v4528 = vadd.f32 %v4441, %v4442
      %4529 = vadd.xlane.f32.xlu0 %v4528
      %v4530 = vpop.xlane.xlu0 %4529
      %v4531 = vadd.f32 %v4443, %v4444
      %4532 = vadd.xlane.f32.xlu0 %v4531
      %v4533 = vpop.xlane.xlu0 %4532
      %v4534 = vadd.f32 %v4445, %v4446
      %4535 = vadd.xlane.f32.xlu0 %v4534
      %v4536 = vpop.xlane.xlu0 %4535
      %v4537 = vadd.f32 %v4447, %v4448
      %4538 = vadd.xlane.f32.xlu0 %v4537
      %v4539 = vpop.xlane.xlu0 %4538
      %v4540 = vadd.f32 %v4449, %v4450
      %4541 = vadd.xlane.f32.xlu0 %v4540
      %v4542 = vpop.xlane.xlu0 %4541
      %v4543 = vadd.f32 %v4451, %v4452
      %4544 = vadd.xlane.f32.xlu0 %v4543
      %v4545 = vpop.xlane.xlu0 %4544
      %v4546 = vadd.f32 %v4453, %v4454
      %4547 = vadd.xlane.f32.xlu0 %v4546
      %v4548 = vpop.xlane.xlu0 %4547
      %v4549 = vadd.f32 %v4455, %v4456
      %4550 = vadd.xlane.f32.xlu0 %v4549
      %v4551 = vpop.xlane.xlu0 %4550
      %v4552 = vadd.f32 %v4457, %v4458
      %4553 = vadd.xlane.f32.xlu0 %v4552
      %v4554 = vpop.xlane.xlu0 %4553
      %v4555 = vmul.f32 %v4461, %v4298
      %v4556 = vmul.f32 %v4464, %v4298
      %v4557 = vmul.f32 %v4467, %v4298
      %v4558 = vmul.f32 %v4470, %v4298
      %v4559 = vmul.f32 %v4473, %v4298
      %v4560 = vmul.f32 %v4476, %v4298
      %v4561 = vmul.f32 %v4479, %v4298
      %v4562 = vmul.f32 %v4482, %v4298
      %v4563 = vmul.f32 %v4485, %v4298
      %v4564 = vmul.f32 %v4488, %v4298
      %v4565 = vmul.f32 %v4491, %v4298
      %v4566 = vmul.f32 %v4494, %v4298
      %v4567 = vmul.f32 %v4497, %v4298
      %v4568 = vmul.f32 %v4500, %v4298
      %v4569 = vmul.f32 %v4503, %v4298
      %v4570 = vmul.f32 %v4506, %v4298
      %v4571 = vmul.f32 %v4509, %v4298
      %v4572 = vmul.f32 %v4512, %v4298
      %v4573 = vmul.f32 %v4515, %v4298
      %v4574 = vmul.f32 %v4518, %v4298
      %v4575 = vmul.f32 %v4521, %v4298
      %v4576 = vmul.f32 %v4524, %v4298
      %v4577 = vmul.f32 %v4527, %v4298
      %v4578 = vmul.f32 %v4530, %v4298
      %v4579 = vmul.f32 %v4533, %v4298
      %v4580 = vmul.f32 %v4536, %v4298
      %v4581 = vmul.f32 %v4539, %v4298
      %v4582 = vmul.f32 %v4542, %v4298
      %v4583 = vmul.f32 %v4545, %v4298
      %v4584 = vmul.f32 %v4548, %v4298
      %v4585 = vmul.f32 %v4551, %v4298
      %v4586 = vmul.f32 %v4554, %v4298
      %v4587 = vadd.f32 %v4555, 1e-05
      %v4588 = vadd.f32 %v4556, 1e-05
      %v4589 = vadd.f32 %v4557, 1e-05
      %v4590 = vadd.f32 %v4558, 1e-05
      %v4591 = vadd.f32 %v4559, 1e-05
      %v4592 = vadd.f32 %v4560, 1e-05
      %v4593 = vadd.f32 %v4561, 1e-05
      %v4594 = vadd.f32 %v4562, 1e-05
      %v4595 = vadd.f32 %v4563, 1e-05
      %v4596 = vadd.f32 %v4564, 1e-05
      %v4597 = vadd.f32 %v4565, 1e-05
      %v4598 = vadd.f32 %v4566, 1e-05
      %v4599 = vadd.f32 %v4567, 1e-05
      %v4600 = vadd.f32 %v4568, 1e-05
      %v4601 = vadd.f32 %v4569, 1e-05
      %v4602 = vadd.f32 %v4570, 1e-05
      %v4603 = vadd.f32 %v4571, 1e-05
      %v4604 = vadd.f32 %v4572, 1e-05
      %v4605 = vadd.f32 %v4573, 1e-05
      %v4606 = vadd.f32 %v4574, 1e-05
      %v4607 = vadd.f32 %v4575, 1e-05
      %v4608 = vadd.f32 %v4576, 1e-05
      %v4609 = vadd.f32 %v4577, 1e-05
      %v4610 = vadd.f32 %v4578, 1e-05
      %v4611 = vadd.f32 %v4579, 1e-05
      %v4612 = vadd.f32 %v4580, 1e-05
      %v4613 = vadd.f32 %v4581, 1e-05
      %v4614 = vadd.f32 %v4582, 1e-05
      %v4615 = vadd.f32 %v4583, 1e-05
      %v4616 = vadd.f32 %v4584, 1e-05
      %v4617 = vadd.f32 %v4585, 1e-05
      %v4618 = vadd.f32 %v4586, 1e-05
      %v4619 = vrsqrt.pop %v4587
      %v4620 = vrsqrt.pop %v4588
      %v4621 = vrsqrt.pop %v4589
      %v4622 = vrsqrt.pop %v4590
      %v4623 = vrsqrt.pop %v4591
      %v4624 = vrsqrt.pop %v4592
      %v4625 = vrsqrt.pop %v4593
      %v4626 = vrsqrt.pop %v4594
      %v4627 = vrsqrt.pop %v4595
      %v4628 = vrsqrt.pop %v4596
      %v4629 = vrsqrt.pop %v4597
      %v4630 = vrsqrt.pop %v4598
      %v4631 = vrsqrt.pop %v4599
      %v4632 = vrsqrt.pop %v4600
      %v4633 = vrsqrt.pop %v4601
      %v4634 = vrsqrt.pop %v4602
      %v4635 = vrsqrt.pop %v4603
      %v4636 = vrsqrt.pop %v4604
      %v4637 = vrsqrt.pop %v4605
      %v4638 = vrsqrt.pop %v4606
      %v4639 = vrsqrt.pop %v4607
      %v4640 = vrsqrt.pop %v4608
      %v4641 = vrsqrt.pop %v4609
      %v4642 = vrsqrt.pop %v4610
      %v4643 = vrsqrt.pop %v4611
      %v4644 = vrsqrt.pop %v4612
      %v4645 = vrsqrt.pop %v4613
      %v4646 = vrsqrt.pop %v4614
      %v4647 = vrsqrt.pop %v4615
      %v4648 = vrsqrt.pop %v4616
      %v4649 = vrsqrt.pop %v4617
      %v4650 = vrsqrt.pop %v4618
      %v4651 = vmul.f32 %v4331, %v4619
      %v4652 = vmul.f32 %v4332, %v4619
      %v4653 = vmul.f32 %v4333, %v4620
      %v4654 = vmul.f32 %v4334, %v4620
      %v4655 = vmul.f32 %v4335, %v4621
      %v4656 = vmul.f32 %v4336, %v4621
      %v4657 = vmul.f32 %v4337, %v4622
      %v4658 = vmul.f32 %v4338, %v4622
      %v4659 = vmul.f32 %v4339, %v4623
      %v4660 = vmul.f32 %v4340, %v4623
      %v4661 = vmul.f32 %v4341, %v4624
      %v4662 = vmul.f32 %v4342, %v4624
      %v4663 = vmul.f32 %v4343, %v4625
      %v4664 = vmul.f32 %v4344, %v4625
      %v4665 = vmul.f32 %v4345, %v4626
      %v4666 = vmul.f32 %v4346, %v4626
      %v4667 = vmul.f32 %v4347, %v4627
      %v4668 = vmul.f32 %v4348, %v4627
      %v4669 = vmul.f32 %v4349, %v4628
      %v4670 = vmul.f32 %v4350, %v4628
      %v4671 = vmul.f32 %v4351, %v4629
      %v4672 = vmul.f32 %v4352, %v4629
      %v4673 = vmul.f32 %v4353, %v4630
      %v4674 = vmul.f32 %v4354, %v4630
      %v4675 = vmul.f32 %v4355, %v4631
      %v4676 = vmul.f32 %v4356, %v4631
      %v4677 = vmul.f32 %v4357, %v4632
      %v4678 = vmul.f32 %v4358, %v4632
      %v4679 = vmul.f32 %v4359, %v4633
      %v4680 = vmul.f32 %v4360, %v4633
      %v4681 = vmul.f32 %v4361, %v4634
      %v4682 = vmul.f32 %v4362, %v4634
      %v4683 = vmul.f32 %v4363, %v4635
      %v4684 = vmul.f32 %v4364, %v4635
      %v4685 = vmul.f32 %v4365, %v4636
      %v4686 = vmul.f32 %v4366, %v4636
      %v4687 = vmul.f32 %v4367, %v4637
      %v4688 = vmul.f32 %v4368, %v4637
      %v4689 = vmul.f32 %v4369, %v4638
      %v4690 = vmul.f32 %v4370, %v4638
      %v4691 = vmul.f32 %v4371, %v4639
      %v4692 = vmul.f32 %v4372, %v4639
      %v4693 = vmul.f32 %v4373, %v4640
      %v4694 = vmul.f32 %v4374, %v4640
      %v4695 = vmul.f32 %v4375, %v4641
      %v4696 = vmul.f32 %v4376, %v4641
      %v4697 = vmul.f32 %v4377, %v4642
      %v4698 = vmul.f32 %v4378, %v4642
      %v4699 = vmul.f32 %v4379, %v4643
      %v4700 = vmul.f32 %v4380, %v4643
      %v4701 = vmul.f32 %v4381, %v4644
      %v4702 = vmul.f32 %v4382, %v4644
      %v4703 = vmul.f32 %v4383, %v4645
      %v4704 = vmul.f32 %v4384, %v4645
      %v4705 = vmul.f32 %v4385, %v4646
      %v4706 = vmul.f32 %v4386, %v4646
      %v4707 = vmul.f32 %v4387, %v4647
      %v4708 = vmul.f32 %v4388, %v4647
      %v4709 = vmul.f32 %v4389, %v4648
      %v4710 = vmul.f32 %v4390, %v4648
      %v4711 = vmul.f32 %v4391, %v4649
      %v4712 = vmul.f32 %v4392, %v4649
      %v4713 = vmul.f32 %v4393, %v4650
      %v4714 = vmul.f32 %v4394, %v4650
      %v4716 = vlaneseq
      %v4717 = vshrl.u32 %v4716, 7
      %v4718 = vsub.s32 0, %v4717
      %v4719 = vrot.slane %v4200, %v4718
      %v4720 = vlaneseq
      %v4721 = vshrl.u32 %v4720, 7
      %v4722 = vsub.s32 1, %v4721
      %v4723 = vrot.slane %v4200, %v4722
      %v4726 = vmul.f32 %v4651, %v4719
      %v4727 = vmul.f32 %v4652, %v4723
      %v4728 = vmul.f32 %v4653, %v4719
      %v4729 = vmul.f32 %v4654, %v4723
      %v4730 = vmul.f32 %v4655, %v4719
      %v4731 = vmul.f32 %v4656, %v4723
      %v4732 = vmul.f32 %v4657, %v4719
      %v4733 = vmul.f32 %v4658, %v4723
      %v4734 = vmul.f32 %v4659, %v4719
      %v4735 = vmul.f32 %v4660, %v4723
      %v4736 = vmul.f32 %v4661, %v4719
      %v4737 = vmul.f32 %v4662, %v4723
      %v4738 = vmul.f32 %v4663, %v4719
      %v4739 = vmul.f32 %v4664, %v4723
      %v4740 = vmul.f32 %v4665, %v4719
      %v4741 = vmul.f32 %v4666, %v4723
      %v4742 = vmul.f32 %v4667, %v4719
      %v4743 = vmul.f32 %v4668, %v4723
      %v4744 = vmul.f32 %v4669, %v4719
      %v4745 = vmul.f32 %v4670, %v4723
      %v4746 = vmul.f32 %v4671, %v4719
      %v4747 = vmul.f32 %v4672, %v4723
      %v4748 = vmul.f32 %v4673, %v4719
      %v4749 = vmul.f32 %v4674, %v4723
      %v4750 = vmul.f32 %v4675, %v4719
      %v4751 = vmul.f32 %v4676, %v4723
      %v4752 = vmul.f32 %v4677, %v4719
      %v4753 = vmul.f32 %v4678, %v4723
      %v4754 = vmul.f32 %v4679, %v4719
      %v4755 = vmul.f32 %v4680, %v4723
      %v4756 = vmul.f32 %v4681, %v4719
      %v4757 = vmul.f32 %v4682, %v4723
      %v4758 = vmul.f32 %v4683, %v4719
      %v4759 = vmul.f32 %v4684, %v4723
      %v4760 = vmul.f32 %v4685, %v4719
      %v4761 = vmul.f32 %v4686, %v4723
      %v4762 = vmul.f32 %v4687, %v4719
      %v4763 = vmul.f32 %v4688, %v4723
      %v4764 = vmul.f32 %v4689, %v4719
      %v4765 = vmul.f32 %v4690, %v4723
      %v4766 = vmul.f32 %v4691, %v4719
      %v4767 = vmul.f32 %v4692, %v4723
      %v4768 = vmul.f32 %v4693, %v4719
      %v4769 = vmul.f32 %v4694, %v4723
      %v4770 = vmul.f32 %v4695, %v4719
      %v4771 = vmul.f32 %v4696, %v4723
      %v4772 = vmul.f32 %v4697, %v4719
      %v4773 = vmul.f32 %v4698, %v4723
      %v4774 = vmul.f32 %v4699, %v4719
      %v4775 = vmul.f32 %v4700, %v4723
      %v4776 = vmul.f32 %v4701, %v4719
      %v4777 = vmul.f32 %v4702, %v4723
      %v4778 = vmul.f32 %v4703, %v4719
      %v4779 = vmul.f32 %v4704, %v4723
      %v4780 = vmul.f32 %v4705, %v4719
      %v4781 = vmul.f32 %v4706, %v4723
      %v4782 = vmul.f32 %v4707, %v4719
      %v4783 = vmul.f32 %v4708, %v4723
      %v4784 = vmul.f32 %v4709, %v4719
      %v4785 = vmul.f32 %v4710, %v4723
      %v4786 = vmul.f32 %v4711, %v4719
      %v4787 = vmul.f32 %v4712, %v4723
      %v4788 = vmul.f32 %v4713, %v4719
      %v4789 = vmul.f32 %v4714, %v4723
      %v4791 = vlaneseq
      %v4792 = vshrl.u32 %v4791, 7
      %v4793 = vsub.s32 0, %v4792
      %v4794 = vrot.slane %v4201, %v4793
      %v4795 = vlaneseq
      %v4796 = vshrl.u32 %v4795, 7
      %v4797 = vsub.s32 1, %v4796
      %v4798 = vrot.slane %v4201, %v4797
      %v4801 = vadd.f32 %v4726, %v4794
      %v4802 = vadd.f32 %v4727, %v4798
      %v4803 = vadd.f32 %v4728, %v4794
      %v4804 = vadd.f32 %v4729, %v4798
      %v4805 = vadd.f32 %v4730, %v4794
      %v4806 = vadd.f32 %v4731, %v4798
      %v4807 = vadd.f32 %v4732, %v4794
      %v4808 = vadd.f32 %v4733, %v4798
      %v4809 = vadd.f32 %v4734, %v4794
      %v4810 = vadd.f32 %v4735, %v4798
      %v4811 = vadd.f32 %v4736, %v4794
      %v4812 = vadd.f32 %v4737, %v4798
      %v4813 = vadd.f32 %v4738, %v4794
      %v4814 = vadd.f32 %v4739, %v4798
      %v4815 = vadd.f32 %v4740, %v4794
      %v4816 = vadd.f32 %v4741, %v4798
      %v4817 = vadd.f32 %v4742, %v4794
      %v4818 = vadd.f32 %v4743, %v4798
      %v4819 = vadd.f32 %v4744, %v4794
      %v4820 = vadd.f32 %v4745, %v4798
      %v4821 = vadd.f32 %v4746, %v4794
      %v4822 = vadd.f32 %v4747, %v4798
      %v4823 = vadd.f32 %v4748, %v4794
      %v4824 = vadd.f32 %v4749, %v4798
      %v4825 = vadd.f32 %v4750, %v4794
      %v4826 = vadd.f32 %v4751, %v4798
      %v4827 = vadd.f32 %v4752, %v4794
      %v4828 = vadd.f32 %v4753, %v4798
      %v4829 = vadd.f32 %v4754, %v4794
      %v4830 = vadd.f32 %v4755, %v4798
      %v4831 = vadd.f32 %v4756, %v4794
      %v4832 = vadd.f32 %v4757, %v4798
      %v4833 = vadd.f32 %v4758, %v4794
      %v4834 = vadd.f32 %v4759, %v4798
      %v4835 = vadd.f32 %v4760, %v4794
      %v4836 = vadd.f32 %v4761, %v4798
      %v4837 = vadd.f32 %v4762, %v4794
      %v4838 = vadd.f32 %v4763, %v4798
      %v4839 = vadd.f32 %v4764, %v4794
      %v4840 = vadd.f32 %v4765, %v4798
      %v4841 = vadd.f32 %v4766, %v4794
      %v4842 = vadd.f32 %v4767, %v4798
      %v4843 = vadd.f32 %v4768, %v4794
      %v4844 = vadd.f32 %v4769, %v4798
      %v4845 = vadd.f32 %v4770, %v4794
      %v4846 = vadd.f32 %v4771, %v4798
      %v4847 = vadd.f32 %v4772, %v4794
      %v4848 = vadd.f32 %v4773, %v4798
      %v4849 = vadd.f32 %v4774, %v4794
      %v4850 = vadd.f32 %v4775, %v4798
      %v4851 = vadd.f32 %v4776, %v4794
      %v4852 = vadd.f32 %v4777, %v4798
      %v4853 = vadd.f32 %v4778, %v4794
      %v4854 = vadd.f32 %v4779, %v4798
      %v4855 = vadd.f32 %v4780, %v4794
      %v4856 = vadd.f32 %v4781, %v4798
      %v4857 = vadd.f32 %v4782, %v4794
      %v4858 = vadd.f32 %v4783, %v4798
      %v4859 = vadd.f32 %v4784, %v4794
      %v4860 = vadd.f32 %v4785, %v4798
      %v4861 = vadd.f32 %v4786, %v4794
      %v4862 = vadd.f32 %v4787, %v4798
      %v4863 = vadd.f32 %v4788, %v4794
      %v4864 = vadd.f32 %v4789, %v4798
      %4865 = vst [vmem:[%s339] sm:$0xff] %v4801
      %4866 = vst [vmem:[%s339 + $0x8] sm:$0xff] %v4802
      %4867 = vst [vmem:[%s339 + $0x10] sm:$0xff] %v4803
      %4868 = vst [vmem:[%s339 + $0x18] sm:$0xff] %v4804
      %4869 = vst [vmem:[%s339 + $0x20] sm:$0xff] %v4805
      %4870 = vst [vmem:[%s339 + $0x28] sm:$0xff] %v4806
      %4871 = vst [vmem:[%s339 + $0x30] sm:$0xff] %v4807
      %4872 = vst [vmem:[%s339 + $0x38] sm:$0xff] %v4808
      %4873 = vst [vmem:[%s339 + $0x40] sm:$0xff] %v4809
      %4874 = vst [vmem:[%s339 + $0x48] sm:$0xff] %v4810
      %4875 = vst [vmem:[%s339 + $0x50] sm:$0xff] %v4811
      %4876 = vst [vmem:[%s339 + $0x58] sm:$0xff] %v4812
      %4877 = vst [vmem:[%s339 + $0x60] sm:$0xff] %v4813
      %4878 = vst [vmem:[%s339 + $0x68] sm:$0xff] %v4814
      %4879 = vst [vmem:[%s339 + $0x70] sm:$0xff] %v4815
      %4880 = vst [vmem:[%s339 + $0x78] sm:$0xff] %v4816
      %4881 = vst [vmem:[%s339 + $0x80] sm:$0xff] %v4817
      %4882 = vst [vmem:[%s339 + $0x88] sm:$0xff] %v4818
      %4883 = vst [vmem:[%s339 + $0x90] sm:$0xff] %v4819
      %4884 = vst [vmem:[%s339 + $0x98] sm:$0xff] %v4820
      %4885 = vst [vmem:[%s339 + $0xa0] sm:$0xff] %v4821
      %4886 = vst [vmem:[%s339 + $0xa8] sm:$0xff] %v4822
      %4887 = vst [vmem:[%s339 + $0xb0] sm:$0xff] %v4823
      %4888 = vst [vmem:[%s339 + $0xb8] sm:$0xff] %v4824
      %4889 = vst [vmem:[%s339 + $0xc0] sm:$0xff] %v4825
      %4890 = vst [vmem:[%s339 + $0xc8] sm:$0xff] %v4826
      %4891 = vst [vmem:[%s339 + $0xd0] sm:$0xff] %v4827
      %4892 = vst [vmem:[%s339 + $0xd8] sm:$0xff] %v4828
      %4893 = vst [vmem:[%s339 + $0xe0] sm:$0xff] %v4829
      %4894 = vst [vmem:[%s339 + $0xe8] sm:$0xff] %v4830
      %4895 = vst [vmem:[%s339 + $0xf0] sm:$0xff] %v4831
      %4896 = vst [vmem:[%s339 + $0xf8] sm:$0xff] %v4832
      %4897 = vst [vmem:[%s339 + $0x100] sm:$0xff] %v4833
      %4898 = vst [vmem:[%s339 + $0x108] sm:$0xff] %v4834
      %4899 = vst [vmem:[%s339 + $0x110] sm:$0xff] %v4835
      %4900 = vst [vmem:[%s339 + $0x118] sm:$0xff] %v4836
      %4901 = vst [vmem:[%s339 + $0x120] sm:$0xff] %v4837
      %4902 = vst [vmem:[%s339 + $0x128] sm:$0xff] %v4838
      %4903 = vst [vmem:[%s339 + $0x130] sm:$0xff] %v4839
      %4904 = vst [vmem:[%s339 + $0x138] sm:$0xff] %v4840
      %4905 = vst [vmem:[%s339 + $0x140] sm:$0xff] %v4841
      %4906 = vst [vmem:[%s339 + $0x148] sm:$0xff] %v4842
      %4907 = vst [vmem:[%s339 + $0x150] sm:$0xff] %v4843
      %4908 = vst [vmem:[%s339 + $0x158] sm:$0xff] %v4844
      %4909 = vst [vmem:[%s339 + $0x160] sm:$0xff] %v4845
      %4910 = vst [vmem:[%s339 + $0x168] sm:$0xff] %v4846
      %4911 = vst [vmem:[%s339 + $0x170] sm:$0xff] %v4847
      %4912 = vst [vmem:[%s339 + $0x178] sm:$0xff] %v4848
      %4913 = vst [vmem:[%s339 + $0x180] sm:$0xff] %v4849
      %4914 = vst [vmem:[%s339 + $0x188] sm:$0xff] %v4850
      %4915 = vst [vmem:[%s339 + $0x190] sm:$0xff] %v4851
      %4916 = vst [vmem:[%s339 + $0x198] sm:$0xff] %v4852
      %4917 = vst [vmem:[%s339 + $0x1a0] sm:$0xff] %v4853
      %4918 = vst [vmem:[%s339 + $0x1a8] sm:$0xff] %v4854
      %4919 = vst [vmem:[%s339 + $0x1b0] sm:$0xff] %v4855
      %4920 = vst [vmem:[%s339 + $0x1b8] sm:$0xff] %v4856
      %4921 = vst [vmem:[%s339 + $0x1c0] sm:$0xff] %v4857
      %4922 = vst [vmem:[%s339 + $0x1c8] sm:$0xff] %v4858
      %4923 = vst [vmem:[%s339 + $0x1d0] sm:$0xff] %v4859
      %4924 = vst [vmem:[%s339 + $0x1d8] sm:$0xff] %v4860
      %4925 = vst [vmem:[%s339 + $0x1e0] sm:$0xff] %v4861
      %4926 = vst [vmem:[%s339 + $0x1e8] sm:$0xff] %v4862
      %4927 = vst [vmem:[%s339 + $0x1f0] sm:$0xff] %v4863
      %4928 = vst [vmem:[%s339 + $0x1f8] sm:$0xff] %v4864
      %s4929 = smul.u32 32, %s20
      %p4930 = scmp.lt.s32.totalorder %s4929, 63
      %s4931 = scalar_select %p4930, %s4929, 63
      %s4932 = smul.addr %s4931, 2
      %s4933 = smul.addr %s4932, 8
      %s4934 = scalar_lea.vmem %s9, %s4933
      // Predicated region
      $region57: #{smiles_embed.1} parent=55 // pred_check
        %p4935 = pneg %p232
      $region58: #{smiles_embed.1} parent=55 // pred_check_branch
        %4937 = sbr.rel (%p4935) target = $region60
      $region59: #{smiles_embed.1} parent=55 // pred_region
        %s4938 = smul.u32 32, %s20
      $region60: #{smiles_embed.1} parent=55 // pred_fallthru
        _
    $region56: #{smiles_embed.1} parent=5 // pred_fallthru
      _
    %p4939 = scmp.le.s32.totalorder 2, %s15
    // Predicated region
    $region61: #{smiles_embed.1} parent=5 // pred_check
      %p4940 = pneg %p4939
    $region62: #{smiles_embed.1} parent=5 // pred_check_branch
      %4942 = sbr.rel (%p4940) target = $region64
    $region63: #{smiles_embed.1} parent=5 // pred_region
      %s4943 = ssub.s32 %s15, 2
      // Predicated region
      $region65: #{smiles_embed.1} parent=63 // pred_check
        %p4944 = pneg %p238
      $region66: #{smiles_embed.1} parent=63 // pred_check_branch
        %4946 = sbr.rel (%p4944) target = $region68
      $region67: #{smiles_embed.1} parent=63 // pred_region
        %s4947 = smul.u32 32, %s21
        %p4948 = scmp.lt.s32.totalorder %s4947, 63
        %s4949 = scalar_select %p4948, %s4947, 63
        %s4950 = smul.addr %s4949, 2
        %s4951 = smul.addr %s4950, 8
        %s4952 = scalar_lea.vmem %s9, %s4951
      $region68: #{smiles_embed.1} parent=63 // pred_fallthru
        _
    $region64: #{smiles_embed.1} parent=5 // pred_fallthru
      _
  $region6: #{smiles_embed.1} parent=0 // loop_footer
    %s19 = sadd.s32 1, %s15
  $region7: #{smiles_embed.1} parent=0 // loop_footer_branch
    %14 = sbr.rel target = $region3
  $region8: #{smiles_embed.1} parent=0 // loop_exit
    _

</llo_original>
